<compile_context>
chip_gen: v6e
topology: v6e:2x2x1
jax: 0.10.0
libtpu: 0.0.40
codegen_flags: <defaults>
</compile_context>

<pallas_src>
import functools

import jax
import jax.numpy as jnp
import numpy as np
from jax import lax
from jax.experimental import pallas as pl
from jax.experimental.pallas import tpu as pltpu


# ---------------------------------------------------------------------------
# Kernel 1: hoisted input projection  gates = x @ [Wih_f | Wih_b] + [b_f|b_b]
# ---------------------------------------------------------------------------
def _proj_kernel(x_ref, w_ref, b_ref, o_ref):
    o_ref[...] = (
        jnp.dot(x_ref[...], w_ref[...], preferred_element_type=jnp.float32)
        + b_ref[...]
    ).astype(o_ref.dtype)


def _input_projection(x_tbd, w_cat, b_cat, *, tm=256):
    """x_tbd: (T, B, D) -> gates (T, B, 8H) with biases folded in."""
    T, B, D = x_tbd.shape
    N = w_cat.shape[1]                      # 8H
    M = T * B
    x2d = x_tbd.reshape(M, D)
    tm = M if M <= tm else tm               # (8,128)-legal; partial tail OK
    grid_m = pl.cdiv(M, tm)

    gates2d = pl.pallas_call(
        _proj_kernel,
        out_shape=jax.ShapeDtypeStruct((M, N), jnp.float32),
        grid=(grid_m,),
        in_specs=[
            pl.BlockSpec((tm, D), lambda i: (i, 0)),   # stream rows of x
            pl.BlockSpec((D, N), lambda i: (0, 0)),    # weights resident
            pl.BlockSpec((1, N), lambda i: (0, 0)),    # fused bias resident
        ],
        out_specs=pl.BlockSpec((tm, N), lambda i: (i, 0)),
        compiler_params=pltpu.CompilerParams(
            dimension_semantics=("parallel",),
            vmem_limit_bytes=64 * 1024 * 1024),
    )(x2d, w_cat, b_cat)
    return gates2d.reshape(T, B, N)


# ---------------------------------------------------------------------------
# Kernel 2: fused bidirectional recurrence, streamed over blocks of timesteps
# ---------------------------------------------------------------------------
def _recurrence_kernel(gxf_ref, gxb_ref, mf_ref, mb_ref,
                       whh_f_ref, whh_b_ref,
                       out_f_ref, out_b_ref,
                       hf, cf, hb, cb):
    # gxf_ref/gxb_ref: (TT, B, 4H)  precomputed x-projection (+bias) blocks
    #   gxf walks t upward (block j), gxb walks t downward (block nb-1-j).
    # mf_ref/mb_ref:   (TT, B, 1)   {0,1} validity masks for the same blocks
    # whh_*:           (H, 4H)      recurrent weights (VMEM resident)
    # out_*:           (TT, B, H)   per-direction hidden-state blocks
    # hf/cf/hb/cb:     (B, H)       states, persist across grid steps
    TT = gxf_ref.shape[0]
    H = whh_f_ref.shape[0]

    @pl.when(pl.program_id(0) == 0)
    def _():
        hf[...] = jnp.zeros_like(hf)
        cf[...] = jnp.zeros_like(cf)
        hb[...] = jnp.zeros_like(hb)
        cb[...] = jnp.zeros_like(cb)

    def cell(gates_x, h_prev, c_prev, whh_ref):
        # PyTorch gate order: i, f, g, o.  Only h @ whh is left in the loop.
        gates = gates_x + jnp.dot(h_prev, whh_ref[...],
                                  preferred_element_type=jnp.float32)
        i_g = jax.nn.sigmoid(gates[:, 0:H])
        f_g = jax.nn.sigmoid(gates[:, H:2 * H])
        g_g = jnp.tanh(gates[:, 2 * H:3 * H])
        o_g = jax.nn.sigmoid(gates[:, 3 * H:4 * H])
        c_new = f_g * c_prev + i_g * g_g
        h_new = o_g * jnp.tanh(c_new)
        return h_new, c_new

    def step(tt, carry):
        # ---- forward direction: local timestep tt of the forward block ----
        h_prev, c_prev = hf[...], cf[...]
        h_new, c_new = cell(gxf_ref[tt], h_prev, c_prev, whh_f_ref)
        m = mf_ref[tt]                                    # (B, 1) in {0, 1}
        hf[...] = m * h_new + (1.0 - m) * h_prev
        cf[...] = m * c_new + (1.0 - m) * c_prev
        out_f_ref[tt] = (m * h_new).astype(out_f_ref.dtype)

        # ---- reverse direction: local timestep TT-1-tt of mirrored block ---
        # Packed-sequence semantics: h/c stay at zero while t >= length[b],
        # so the reverse recurrence effectively starts at length[b] - 1.
        rt = TT - 1 - tt
        h_prevb, c_prevb = hb[...], cb[...]
        h_newb, c_newb = cell(gxb_ref[rt], h_prevb, c_prevb, whh_b_ref)
        mb = mb_ref[rt]
        hb[...] = mb * h_newb + (1.0 - mb) * h_prevb
        cb[...] = mb * c_newb + (1.0 - mb) * c_prevb
        out_b_ref[rt] = (mb * h_newb).astype(out_b_ref.dtype)
        return carry

    lax.fori_loop(0, TT, step, 0, unroll=True)


# ---------------------------------------------------------------------------
# Wrapper
# ---------------------------------------------------------------------------
def bilstm_forward(data_vector, data_length, params, *, t_block=None):
    """data_vector: (B, T, D) float32, data_length: (B,) int."""
    B, T, D = data_vector.shape
    H = params["whh_f"].shape[0]

    # Time-major for leading-axis dynamic time indexing inside the kernel.
    x_tbd = jnp.transpose(data_vector, (1, 0, 2))                 # (T, B, D)

    # One big GEMM for both directions' input projections, biases folded in.
    w_cat = jnp.concatenate([params["wih_f"], params["wih_b"]], axis=1)  # (D, 8H)
    b_cat = jnp.concatenate([params["b_f"], params["b_b"]], axis=1)      # (1, 8H)
    gates = _input_projection(x_tbd, w_cat, b_cat)                # (T, B, 8H)

    # Validity mask (pad_packed_sequence semantics), precomputed once so the
    # time loop never touches the integer lengths.
    lengths = data_length.astype(jnp.int32)
    mask = (jnp.arange(T, dtype=jnp.int32)[:, None] < lengths[None, :])
    mask = mask.astype(jnp.float32)[:, :, None]                   # (T, B, 1)

    if t_block is None or T % t_block != 0:
        t_block = T
    nb = T // t_block

    spec_fwd_g = pl.BlockSpec((t_block, B, 4 * H), lambda j: (j, 0, 0))
    spec_bwd_g = pl.BlockSpec((t_block, B, 4 * H), lambda j: (nb - 1 - j, 0, 1))
    spec_fwd_m = pl.BlockSpec((t_block, B, 1), lambda j: (j, 0, 0))
    spec_bwd_m = pl.BlockSpec((t_block, B, 1), lambda j: (nb - 1 - j, 0, 0))
    spec_w = pl.BlockSpec((H, 4 * H), lambda j: (0, 0))
    spec_of = pl.BlockSpec((t_block, B, H), lambda j: (j, 0, 0))
    spec_ob = pl.BlockSpec((t_block, B, H), lambda j: (nb - 1 - j, 0, 0))

    out_f, out_b = pl.pallas_call(
        _recurrence_kernel,
        out_shape=(jax.ShapeDtypeStruct((T, B, H), jnp.float32),
                   jax.ShapeDtypeStruct((T, B, H), jnp.float32)),
        grid=(nb,),
        in_specs=[spec_fwd_g, spec_bwd_g, spec_fwd_m, spec_bwd_m,
                  spec_w, spec_w],
        out_specs=(spec_of, spec_ob),
        scratch_shapes=[pltpu.VMEM((B, H), jnp.float32)] * 4,   # h_f,c_f,h_b,c_b
        compiler_params=pltpu.CompilerParams(
            dimension_semantics=("arbitrary",),                 # sequential recurrence
            vmem_limit_bytes=64 * 1024 * 1024),
    )(gates, gates, mask, mask, params["whh_f"], params["whh_b"])

    # TODO(synk): a single (T, B, 2H) Pallas output would kill this concat,
    # but with the two directions streaming T in opposite block orders the
    # halves need separate outputs; fold concat+transpose into the consumer.
    out = jnp.concatenate([out_f, out_b], axis=-1)                # (T, B, 2H)
    return jnp.transpose(out, (1, 0, 2))                          # (B, T, 2H)


# ---------------------------------------------------------------------------
# Pure-JAX reference (same math) for a correctness check.
# ---------------------------------------------------------------------------
def _ref_direction(x, lengths, wih, whh, b, reverse):
    B, T, D = x.shape
    H = whh.shape[0]
    h = jnp.zeros((B, H), jnp.float32)
    c = jnp.zeros((B, H), jnp.float32)
    outs = [None] * T
    time_order = range(T - 1, -1, -1) if reverse else range(T)
    for t in time_order:
        gates = x[:, t, :] @ wih + h @ whh + b
        i = jax.nn.sigmoid(gates[:, 0:H])
        f = jax.nn.sigmoid(gates[:, H:2 * H])
        g = jnp.tanh(gates[:, 2 * H:3 * H])
        o = jax.nn.sigmoid(gates[:, 3 * H:4 * H])
        c_new = f * c + i * g
        h_new = o * jnp.tanh(c_new)
        valid = (t < lengths).reshape(B, 1)
        h = jnp.where(valid, h_new, h)
        c = jnp.where(valid, c_new, c)
        outs[t] = jnp.where(valid, h_new, 0.0)
    return jnp.stack(outs, axis=1)  # (B, T, H)


def bilstm_reference(x, lengths, params):
    out_f = _ref_direction(x, lengths, params["wih_f"], params["whh_f"],
                           params["b_f"], reverse=False)
    out_b = _ref_direction(x, lengths, params["wih_b"], params["whh_b"],
                           params["b_b"], reverse=True)
    return jnp.concatenate([out_f, out_b], axis=-1)


def init_params(key, D, H):
    """Deterministic init mimicking PyTorch LSTM uniform(-1/sqrt(H), 1/sqrt(H))."""
    bound = 1.0 / np.sqrt(H)
    keys = jax.random.split(key, 12)

    def u(k, shape):
        return jax.random.uniform(k, shape, jnp.float32, -bound, bound)

    # PyTorch stores weight_ih as (4H, D); we keep the transposed (D, 4H) form.
    wih_f = u(keys[0], (D, 4 * H))
    whh_f = u(keys[1], (H, 4 * H))
    b_f = (u(keys[2], (1, 4 * H)) + u(keys[3], (1, 4 * H)))   # b_ih + b_hh
    wih_b = u(keys[4], (D, 4 * H))
    whh_b = u(keys[5], (H, 4 * H))
    b_b = (u(keys[6], (1, 4 * H)) + u(keys[7], (1, 4 * H)))
    return {"wih_f": wih_f, "whh_f": whh_f, "b_f": b_f,
            "wih_b": wih_b, "whh_b": whh_b, "b_b": b_b}


if __name__ == "__main__":
    # Small shapes consistent with BiLSTM(input_size=D, hidden_size=H).
    B, T, D, H = 2, 8, 128, 128

    key = jax.random.PRNGKey(0)
    k_x, k_p = jax.random.split(key)
    data_vector = jax.random.normal(k_x, (B, T, D), jnp.float32)
    data_length = jnp.array([8, 5], dtype=jnp.int32)   # variable-length sequences
    params = init_params(k_p, D, H)

    # t_block=4 -> 2 grid steps: exercises the streamed, state-carrying path.
    fwd = jax.jit(functools.partial(bilstm_forward, t_block=4))
    out = jax.block_until_ready(fwd(data_vector, data_length, params))
    assert out.shape == (B, T, 2 * H), out.shape

    ref = jax.block_until_ready(bilstm_reference(data_vector, data_length, params))
    np.testing.assert_allclose(np.asarray(out), np.asarray(ref),
                               rtol=1e-4, atol=1e-4)
    # padded positions (t >= length) must be exactly zero, as in pad_packed_sequence
    assert np.all(np.asarray(out)[1, 5:, :] == 0.0)

    print("KERNEL_OK")
</pallas_src>

<mosaic_0001>
module attributes {stable_mosaic.version = 11 : i64} {
  func.func @_proj_kernel(%arg0: i32, %arg1: memref<16x128xf32, #tpu.memory_space<vmem>>, %arg2: memref<128x1024xf32, #tpu.memory_space<vmem>>, %arg3: memref<1x1024xf32, #tpu.memory_space<vmem>>, %arg4: memref<16x1024xf32, #tpu.memory_space<vmem>>) attributes {dimension_semantics = [#tpu.dimension_semantics<parallel>], iteration_bounds = array<i64: 1>, scalar_prefetch = 0 : i64, scratch_operands = 0 : i64, tpu.core_type = #tpu.core_type<tc>, window_params = [{transform_indices = @transform_0, window_bounds = array<i64: 16, 128>}, {pipeline_mode = #tpu.pipeline_mode<synchronous>, transform_indices = @transform_1, window_bounds = array<i64: 128, 1024>}, {pipeline_mode = #tpu.pipeline_mode<synchronous>, transform_indices = @transform_2, window_bounds = array<i64: 1, 1024>}, {transform_indices = @transform_3, window_bounds = array<i64: 16, 1024>}]} {
    %c0 = arith.constant 0 : index
    %c0_0 = arith.constant 0 : index
    %0 = vector.load %arg1[%c0, %c0_0] : memref<16x128xf32, #tpu.memory_space<vmem>>, vector<16x128xf32>
    %c0_1 = arith.constant 0 : index
    %c0_2 = arith.constant 0 : index
    %1 = vector.load %arg2[%c0_1, %c0_2] : memref<128x1024xf32, #tpu.memory_space<vmem>>, vector<128x1024xf32>
    %cst = arith.constant dense<0.000000e+00> : vector<16x1024xf32>
    %2 = tpu.matmul %0, %1, %cst {dimension_numbers = #tpu.dot_dimension_numbers<[1], [0], [0], [1], [0, 0, 1, 1], [], []>} : vector<16x128xf32>, vector<128x1024xf32>, vector<16x1024xf32> -> vector<16x1024xf32>
    %c0_3 = arith.constant 0 : index
    %c0_4 = arith.constant 0 : index
    %3 = vector.load %arg3[%c0_3, %c0_4] : memref<1x1024xf32, #tpu.memory_space<vmem>>, vector<1x1024xf32>
    %4 = vector.broadcast %3 : vector<1x1024xf32> to vector<16x1024xf32>
    %5 = arith.addf %2, %4 : vector<16x1024xf32>
    %c0_5 = arith.constant 0 : index
    %c0_6 = arith.constant 0 : index
    %6 = vector.load %arg4[%c0_5, %c0_6] : memref<16x1024xf32, #tpu.memory_space<vmem>>, vector<16x1024xf32>
    tpu.vector_store %arg4[%c0_5, %c0_6], %5 {strides = array<i32>} : memref<16x1024xf32, #tpu.memory_space<vmem>>, vector<16x1024xf32>,
    return
  }
  func.func @transform_0(%arg0: i32) -> (i32, i32) {
    %c0_i32 = arith.constant 0 : i32
    %c0_i32_0 = arith.constant 0 : i32
    return %arg0, %c0_i32 : i32, i32
  }
  func.func @transform_1(%arg0: i32) -> (i32, i32) {
    %c0_i32 = arith.constant 0 : i32
    %c0_i32_0 = arith.constant 0 : i32
    %c0_i32_1 = arith.constant 0 : i32
    return %c0_i32, %c0_i32_0 : i32, i32
  }
  func.func @transform_2(%arg0: i32) -> (i32, i32) {
    %c0_i32 = arith.constant 0 : i32
    %c0_i32_0 = arith.constant 0 : i32
    %c0_i32_1 = arith.constant 0 : i32
    return %c0_i32, %c0_i32_0 : i32, i32
  }
  func.func @transform_3(%arg0: i32) -> (i32, i32) {
    %c0_i32 = arith.constant 0 : i32
    %c0_i32_0 = arith.constant 0 : i32
    return %arg0, %c0_i32 : i32, i32
  }
}

module attributes {stable_mosaic.version = 11 : i64} {
  func.func @_recurrence_kernel(%arg0: i32, %arg1: memref<4x2x512xf32, #tpu.memory_space<vmem>>, %arg2: memref<4x2x512xf32, #tpu.memory_space<vmem>>, %arg3: memref<4x2x1xf32, #tpu.memory_space<vmem>>, %arg4: memref<4x2x1xf32, #tpu.memory_space<vmem>>, %arg5: memref<128x512xf32, #tpu.memory_space<vmem>>, %arg6: memref<128x512xf32, #tpu.memory_space<vmem>>, %arg7: memref<4x2x128xf32, #tpu.memory_space<vmem>>, %arg8: memref<4x2x128xf32, #tpu.memory_space<vmem>>, %arg9: memref<2x128xf32, #tpu.memory_space<vmem>>, %arg10: memref<2x128xf32, #tpu.memory_space<vmem>>, %arg11: memref<2x128xf32, #tpu.memory_space<vmem>>, %arg12: memref<2x128xf32, #tpu.memory_space<vmem>>) attributes {dimension_semantics = [#tpu.dimension_semantics<arbitrary>], iteration_bounds = array<i64: 2>, scalar_prefetch = 0 : i64, scratch_operands = 4 : i64, tpu.core_type = #tpu.core_type<tc>, window_params = [{transform_indices = @transform_0, window_bounds = array<i64: 4, 2, 512>}, {transform_indices = @transform_1, window_bounds = array<i64: 4, 2, 512>}, {transform_indices = @transform_2, window_bounds = array<i64: 4, 2, 1>}, {transform_indices = @transform_3, window_bounds = array<i64: 4, 2, 1>}, {pipeline_mode = #tpu.pipeline_mode<synchronous>, transform_indices = @transform_4, window_bounds = array<i64: 128, 512>}, {pipeline_mode = #tpu.pipeline_mode<synchronous>, transform_indices = @transform_5, window_bounds = array<i64: 128, 512>}, {transform_indices = @transform_6, window_bounds = array<i64: 4, 2, 128>}, {transform_indices = @transform_7, window_bounds = array<i64: 4, 2, 128>}]} {
    %c0_i32 = arith.constant 0 : i32
    %0 = arith.cmpi eq, %arg0, %c0_i32 : i32
    %1 = arith.extui %0 : i1 to i32
    %c0_i32_0 = arith.constant 0 : i32
    %2 = arith.cmpi ne, %1, %c0_i32_0 : i32
    scf.if %2 {
      %cst_180 = arith.constant 0.000000e+00 : f32
      %471 = vector.broadcast %cst_180 : f32 to vector<2x128xf32>
      %c0_181 = arith.constant 0 : index
      %c0_182 = arith.constant 0 : index
      %472 = vector.load %arg9[%c0_181, %c0_182] : memref<2x128xf32, #tpu.memory_space<vmem>>, vector<2x128xf32>
      tpu.vector_store %arg9[%c0_181, %c0_182], %471 {strides = array<i32>} : memref<2x128xf32, #tpu.memory_space<vmem>>, vector<2x128xf32>,
      %cst_183 = arith.constant 0.000000e+00 : f32
      %473 = vector.broadcast %cst_183 : f32 to vector<2x128xf32>
      %c0_184 = arith.constant 0 : index
      %c0_185 = arith.constant 0 : index
      %474 = vector.load %arg10[%c0_184, %c0_185] : memref<2x128xf32, #tpu.memory_space<vmem>>, vector<2x128xf32>
      tpu.vector_store %arg10[%c0_184, %c0_185], %473 {strides = array<i32>} : memref<2x128xf32, #tpu.memory_space<vmem>>, vector<2x128xf32>,
      %cst_186 = arith.constant 0.000000e+00 : f32
      %475 = vector.broadcast %cst_186 : f32 to vector<2x128xf32>
      %c0_187 = arith.constant 0 : index
      %c0_188 = arith.constant 0 : index
      %476 = vector.load %arg11[%c0_187, %c0_188] : memref<2x128xf32, #tpu.memory_space<vmem>>, vector<2x128xf32>
      tpu.vector_store %arg11[%c0_187, %c0_188], %475 {strides = array<i32>} : memref<2x128xf32, #tpu.memory_space<vmem>>, vector<2x128xf32>,
      %cst_189 = arith.constant 0.000000e+00 : f32
      %477 = vector.broadcast %cst_189 : f32 to vector<2x128xf32>
      %c0_190 = arith.constant 0 : index
      %c0_191 = arith.constant 0 : index
      %478 = vector.load %arg12[%c0_190, %c0_191] : memref<2x128xf32, #tpu.memory_space<vmem>>, vector<2x128xf32>
      tpu.vector_store %arg12[%c0_190, %c0_191], %477 {strides = array<i32>} : memref<2x128xf32, #tpu.memory_space<vmem>>, vector<2x128xf32>,
    } else {
    }
    %c0_i32_1 = arith.constant 0 : i32
    %c0 = arith.constant 0 : index
    %c0_2 = arith.constant 0 : index
    %3 = vector.load %arg9[%c0, %c0_2] : memref<2x128xf32, #tpu.memory_space<vmem>>, vector<2x128xf32>
    %c0_3 = arith.constant 0 : index
    %c0_4 = arith.constant 0 : index
    %4 = vector.load %arg10[%c0_3, %c0_4] : memref<2x128xf32, #tpu.memory_space<vmem>>, vector<2x128xf32>
    %5 = arith.index_cast %c0_i32_1 : i32 to index
    %c0_5 = arith.constant 0 : index
    %c0_6 = arith.constant 0 : index
    %6 = vector.load %arg1[%5, %c0_5, %c0_6] : memref<4x2x512xf32, #tpu.memory_space<vmem>>, vector<1x2x512xf32>
    %7 = vector.shape_cast %6 : vector<1x2x512xf32> to vector<2x512xf32>
    %c0_7 = arith.constant 0 : index
    %c0_8 = arith.constant 0 : index
    %8 = vector.load %arg5[%c0_7, %c0_8] : memref<128x512xf32, #tpu.memory_space<vmem>>, vector<128x512xf32>
    %cst = arith.constant dense<0.000000e+00> : vector<2x512xf32>
    %9 = tpu.matmul %3, %8, %cst {dimension_numbers = #tpu.dot_dimension_numbers<[1], [0], [0], [1], [0, 0, 1, 1], [], []>} : vector<2x128xf32>, vector<128x512xf32>, vector<2x512xf32> -> vector<2x512xf32>
    %10 = arith.addf %7, %9 : vector<2x512xf32>
    %11 = vector.extract_strided_slice %10 {offsets = [0, 0], sizes = [2, 128], strides = [1, 1]} : vector<2x512xf32> to vector<2x128xf32>
    %12 = arith.negf %11 : vector<2x128xf32>
    %13 = math.exp %12 : vector<2x128xf32>
    %cst_9 = arith.constant 1.000000e+00 : f32
    %14 = vector.broadcast %cst_9 : f32 to vector<2x128xf32>
    %15 = arith.addf %14, %13 : vector<2x128xf32>
    %16 = arith.divf %14, %15 : vector<2x128xf32>
    %17 = vector.extract_strided_slice %10 {offsets = [0, 128], sizes = [2, 128], strides = [1, 1]} : vector<2x512xf32> to vector<2x128xf32>
    %18 = arith.negf %17 : vector<2x128xf32>
    %19 = math.exp %18 : vector<2x128xf32>
    %cst_10 = arith.constant 1.000000e+00 : f32
    %20 = vector.broadcast %cst_10 : f32 to vector<2x128xf32>
    %21 = arith.addf %20, %19 : vector<2x128xf32>
    %22 = arith.divf %20, %21 : vector<2x128xf32>
    %23 = vector.extract_strided_slice %10 {offsets = [0, 256], sizes = [2, 128], strides = [1, 1]} : vector<2x512xf32> to vector<2x128xf32>
    %24 = math.tanh %23 : vector<2x128xf32>
    %25 = vector.extract_strided_slice %10 {offsets = [0, 384], sizes = [2, 128], strides = [1, 1]} : vector<2x512xf32> to vector<2x128xf32>
    %26 = arith.negf %25 : vector<2x128xf32>
    %27 = math.exp %26 : vector<2x128xf32>
    %cst_11 = arith.constant 1.000000e+00 : f32
    %28 = vector.broadcast %cst_11 : f32 to vector<2x128xf32>
    %29 = arith.addf %28, %27 : vector<2x128xf32>
    %30 = arith.divf %28, %29 : vector<2x128xf32>
    %31 = arith.mulf %22, %4 : vector<2x128xf32>
    %32 = arith.mulf %16, %24 : vector<2x128xf32>
    %33 = arith.addf %31, %32 : vector<2x128xf32>
    %34 = math.tanh %33 : vector<2x128xf32>
    %35 = arith.mulf %30, %34 : vector<2x128xf32>
    %36 = arith.index_cast %c0_i32_1 : i32 to index
    %c0_12 = arith.constant 0 : index
    %c0_13 = arith.constant 0 : index
    %37 = vector.load %arg3[%36, %c0_12, %c0_13] : memref<4x2x1xf32, #tpu.memory_space<vmem>>, vector<1x2x1xf32>
    %38 = vector.shape_cast %37 : vector<1x2x1xf32> to vector<2x1xf32>
    %39 = vector.broadcast %38 : vector<2x1xf32> to vector<2x128xf32>
    %40 = arith.mulf %39, %35 : vector<2x128xf32>
    %cst_14 = arith.constant 1.000000e+00 : f32
    %41 = vector.broadcast %cst_14 : f32 to vector<2x1xf32>
    %42 = arith.subf %41, %38 : vector<2x1xf32>
    %43 = vector.broadcast %42 : vector<2x1xf32> to vector<2x128xf32>
    %44 = arith.mulf %43, %3 : vector<2x128xf32>
    %45 = arith.addf %40, %44 : vector<2x128xf32>
    %c0_15 = arith.constant 0 : index
    %c0_16 = arith.constant 0 : index
    %46 = vector.load %arg9[%c0_15, %c0_16] : memref<2x128xf32, #tpu.memory_space<vmem>>, vector<2x128xf32>
    tpu.vector_store %arg9[%c0_15, %c0_16], %45 {strides = array<i32>} : memref<2x128xf32, #tpu.memory_space<vmem>>, vector<2x128xf32>,
    %47 = vector.broadcast %38 : vector<2x1xf32> to vector<2x128xf32>
    %48 = arith.mulf %47, %33 : vector<2x128xf32>
    %cst_17 = arith.constant 1.000000e+00 : f32
    %49 = vector.broadcast %cst_17 : f32 to vector<2x1xf32>
    %50 = arith.subf %49, %38 : vector<2x1xf32>
    %51 = vector.broadcast %50 : vector<2x1xf32> to vector<2x128xf32>
    %52 = arith.mulf %51, %4 : vector<2x128xf32>
    %53 = arith.addf %48, %52 : vector<2x128xf32>
    %c0_18 = arith.constant 0 : index
    %c0_19 = arith.constant 0 : index
    %54 = vector.load %arg10[%c0_18, %c0_19] : memref<2x128xf32, #tpu.memory_space<vmem>>, vector<2x128xf32>
    tpu.vector_store %arg10[%c0_18, %c0_19], %53 {strides = array<i32>} : memref<2x128xf32, #tpu.memory_space<vmem>>, vector<2x128xf32>,
    %55 = vector.broadcast %38 : vector<2x1xf32> to vector<2x128xf32>
    %56 = arith.mulf %55, %35 : vector<2x128xf32>
    %57 = arith.index_cast %c0_i32_1 : i32 to index
    %c0_20 = arith.constant 0 : index
    %c0_21 = arith.constant 0 : index
    %58 = vector.load %arg7[%57, %c0_20, %c0_21] : memref<4x2x128xf32, #tpu.memory_space<vmem>>, vector<1x2x128xf32>
    %59 = vector.shape_cast %58 : vector<1x2x128xf32> to vector<2x128xf32>
    %60 = vector.shape_cast %56 : vector<2x128xf32> to vector<1x2x128xf32>
    tpu.vector_store %arg7[%57, %c0_20, %c0_21], %60 {strides = array<i32>} : memref<4x2x128xf32, #tpu.memory_space<vmem>>, vector<1x2x128xf32>,
    %c3_i32 = arith.constant 3 : i32
    %61 = arith.subi %c3_i32, %c0_i32_1 : i32
    %c0_22 = arith.constant 0 : index
    %c0_23 = arith.constant 0 : index
    %62 = vector.load %arg11[%c0_22, %c0_23] : memref<2x128xf32, #tpu.memory_space<vmem>>, vector<2x128xf32>
    %c0_24 = arith.constant 0 : index
    %c0_25 = arith.constant 0 : index
    %63 = vector.load %arg12[%c0_24, %c0_25] : memref<2x128xf32, #tpu.memory_space<vmem>>, vector<2x128xf32>
    %64 = arith.index_cast %61 : i32 to index
    %c0_26 = arith.constant 0 : index
    %c0_27 = arith.constant 0 : index
    %65 = vector.load %arg2[%64, %c0_26, %c0_27] : memref<4x2x512xf32, #tpu.memory_space<vmem>>, vector<1x2x512xf32>
    %66 = vector.shape_cast %65 : vector<1x2x512xf32> to vector<2x512xf32>
    %c0_28 = arith.constant 0 : index
    %c0_29 = arith.constant 0 : index
    %67 = vector.load %arg6[%c0_28, %c0_29] : memref<128x512xf32, #tpu.memory_space<vmem>>, vector<128x512xf32>
    %cst_30 = arith.constant dense<0.000000e+00> : vector<2x512xf32>
    %68 = tpu.matmul %62, %67, %cst_30 {dimension_numbers = #tpu.dot_dimension_numbers<[1], [0], [0], [1], [0, 0, 1, 1], [], []>} : vector<2x128xf32>, vector<128x512xf32>, vector<2x512xf32> -> vector<2x512xf32>
    %69 = arith.addf %66, %68 : vector<2x512xf32>
    %70 = vector.extract_strided_slice %69 {offsets = [0, 0], sizes = [2, 128], strides = [1, 1]} : vector<2x512xf32> to vector<2x128xf32>
    %71 = arith.negf %70 : vector<2x128xf32>
    %72 = math.exp %71 : vector<2x128xf32>
    %cst_31 = arith.constant 1.000000e+00 : f32
    %73 = vector.broadcast %cst_31 : f32 to vector<2x128xf32>
    %74 = arith.addf %73, %72 : vector<2x128xf32>
    %75 = arith.divf %73, %74 : vector<2x128xf32>
    %76 = vector.extract_strided_slice %69 {offsets = [0, 128], sizes = [2, 128], strides = [1, 1]} : vector<2x512xf32> to vector<2x128xf32>
    %77 = arith.negf %76 : vector<2x128xf32>
    %78 = math.exp %77 : vector<2x128xf32>
    %cst_32 = arith.constant 1.000000e+00 : f32
    %79 = vector.broadcast %cst_32 : f32 to vector<2x128xf32>
    %80 = arith.addf %79, %78 : vector<2x128xf32>
    %81 = arith.divf %79, %80 : vector<2x128xf32>
    %82 = vector.extract_strided_slice %69 {offsets = [0, 256], sizes = [2, 128], strides = [1, 1]} : vector<2x512xf32> to vector<2x128xf32>
    %83 = math.tanh %82 : vector<2x128xf32>
    %84 = vector.extract_strided_slice %69 {offsets = [0, 384], sizes = [2, 128], strides = [1, 1]} : vector<2x512xf32> to vector<2x128xf32>
    %85 = arith.negf %84 : vector<2x128xf32>
    %86 = math.exp %85 : vector<2x128xf32>
    %cst_33 = arith.constant 1.000000e+00 : f32
    %87 = vector.broadcast %cst_33 : f32 to vector<2x128xf32>
    %88 = arith.addf %87, %86 : vector<2x128xf32>
    %89 = arith.divf %87, %88 : vector<2x128xf32>
    %90 = arith.mulf %81, %63 : vector<2x128xf32>
    %91 = arith.mulf %75, %83 : vector<2x128xf32>
    %92 = arith.addf %90, %91 : vector<2x128xf32>
    %93 = math.tanh %92 : vector<2x128xf32>
    %94 = arith.mulf %89, %93 : vector<2x128xf32>
    %95 = arith.index_cast %61 : i32 to index
    %c0_34 = arith.constant 0 : index
    %c0_35 = arith.constant 0 : index
    %96 = vector.load %arg4[%95, %c0_34, %c0_35] : memref<4x2x1xf32, #tpu.memory_space<vmem>>, vector<1x2x1xf32>
    %97 = vector.shape_cast %96 : vector<1x2x1xf32> to vector<2x1xf32>
    %98 = vector.broadcast %97 : vector<2x1xf32> to vector<2x128xf32>
    %99 = arith.mulf %98, %94 : vector<2x128xf32>
    %cst_36 = arith.constant 1.000000e+00 : f32
    %100 = vector.broadcast %cst_36 : f32 to vector<2x1xf32>
    %101 = arith.subf %100, %97 : vector<2x1xf32>
    %102 = vector.broadcast %101 : vector<2x1xf32> to vector<2x128xf32>
    %103 = arith.mulf %102, %62 : vector<2x128xf32>
    %104 = arith.addf %99, %103 : vector<2x128xf32>
    %c0_37 = arith.constant 0 : index
    %c0_38 = arith.constant 0 : index
    %105 = vector.load %arg11[%c0_37, %c0_38] : memref<2x128xf32, #tpu.memory_space<vmem>>, vector<2x128xf32>
    tpu.vector_store %arg11[%c0_37, %c0_38], %104 {strides = array<i32>} : memref<2x128xf32, #tpu.memory_space<vmem>>, vector<2x128xf32>,
    %106 = vector.broadcast %97 : vector<2x1xf32> to vector<2x128xf32>
    %107 = arith.mulf %106, %92 : vector<2x128xf32>
    %cst_39 = arith.constant 1.000000e+00 : f32
    %108 = vector.broadcast %cst_39 : f32 to vector<2x1xf32>
    %109 = arith.subf %108, %97 : vector<2x1xf32>
    %110 = vector.broadcast %109 : vector<2x1xf32> to vector<2x128xf32>
    %111 = arith.mulf %110, %63 : vector<2x128xf32>
    %112 = arith.addf %107, %111 : vector<2x128xf32>
    %c0_40 = arith.constant 0 : index
    %c0_41 = arith.constant 0 : index
    %113 = vector.load %arg12[%c0_40, %c0_41] : memref<2x128xf32, #tpu.memory_space<vmem>>, vector<2x128xf32>
    tpu.vector_store %arg12[%c0_40, %c0_41], %112 {strides = array<i32>} : memref<2x128xf32, #tpu.memory_space<vmem>>, vector<2x128xf32>,
    %114 = vector.broadcast %97 : vector<2x1xf32> to vector<2x128xf32>
    %115 = arith.mulf %114, %94 : vector<2x128xf32>
    %116 = arith.index_cast %61 : i32 to index
    %c0_42 = arith.constant 0 : index
    %c0_43 = arith.constant 0 : index
    %117 = vector.load %arg8[%116, %c0_42, %c0_43] : memref<4x2x128xf32, #tpu.memory_space<vmem>>, vector<1x2x128xf32>
    %118 = vector.shape_cast %117 : vector<1x2x128xf32> to vector<2x128xf32>
    %119 = vector.shape_cast %115 : vector<2x128xf32> to vector<1x2x128xf32>
    tpu.vector_store %arg8[%116, %c0_42, %c0_43], %119 {strides = array<i32>} : memref<4x2x128xf32, #tpu.memory_space<vmem>>, vector<1x2x128xf32>,
    %c1_i32 = arith.constant 1 : i32
    %c0_44 = arith.constant 0 : index
    %c0_45 = arith.constant 0 : index
    %120 = vector.load %arg9[%c0_44, %c0_45] : memref<2x128xf32, #tpu.memory_space<vmem>>, vector<2x128xf32>
    %c0_46 = arith.constant 0 : index
    %c0_47 = arith.constant 0 : index
    %121 = vector.load %arg10[%c0_46, %c0_47] : memref<2x128xf32, #tpu.memory_space<vmem>>, vector<2x128xf32>
    %122 = arith.index_cast %c1_i32 : i32 to index
    %c0_48 = arith.constant 0 : index
    %c0_49 = arith.constant 0 : index
    %123 = vector.load %arg1[%122, %c0_48, %c0_49] : memref<4x2x512xf32, #tpu.memory_space<vmem>>, vector<1x2x512xf32>
    %124 = vector.shape_cast %123 : vector<1x2x512xf32> to vector<2x512xf32>
    %c0_50 = arith.constant 0 : index
    %c0_51 = arith.constant 0 : index
    %125 = vector.load %arg5[%c0_50, %c0_51] : memref<128x512xf32, #tpu.memory_space<vmem>>, vector<128x512xf32>
    %cst_52 = arith.constant dense<0.000000e+00> : vector<2x512xf32>
    %126 = tpu.matmul %120, %125, %cst_52 {dimension_numbers = #tpu.dot_dimension_numbers<[1], [0], [0], [1], [0, 0, 1, 1], [], []>} : vector<2x128xf32>, vector<128x512xf32>, vector<2x512xf32> -> vector<2x512xf32>
    %127 = arith.addf %124, %126 : vector<2x512xf32>
    %128 = vector.extract_strided_slice %127 {offsets = [0, 0], sizes = [2, 128], strides = [1, 1]} : vector<2x512xf32> to vector<2x128xf32>
    %129 = arith.negf %128 : vector<2x128xf32>
    %130 = math.exp %129 : vector<2x128xf32>
    %cst_53 = arith.constant 1.000000e+00 : f32
    %131 = vector.broadcast %cst_53 : f32 to vector<2x128xf32>
    %132 = arith.addf %131, %130 : vector<2x128xf32>
    %133 = arith.divf %131, %132 : vector<2x128xf32>
    %134 = vector.extract_strided_slice %127 {offsets = [0, 128], sizes = [2, 128], strides = [1, 1]} : vector<2x512xf32> to vector<2x128xf32>
    %135 = arith.negf %134 : vector<2x128xf32>
    %136 = math.exp %135 : vector<2x128xf32>
    %cst_54 = arith.constant 1.000000e+00 : f32
    %137 = vector.broadcast %cst_54 : f32 to vector<2x128xf32>
    %138 = arith.addf %137, %136 : vector<2x128xf32>
    %139 = arith.divf %137, %138 : vector<2x128xf32>
    %140 = vector.extract_strided_slice %127 {offsets = [0, 256], sizes = [2, 128], strides = [1, 1]} : vector<2x512xf32> to vector<2x128xf32>
    %141 = math.tanh %140 : vector<2x128xf32>
    %142 = vector.extract_strided_slice %127 {offsets = [0, 384], sizes = [2, 128], strides = [1, 1]} : vector<2x512xf32> to vector<2x128xf32>
    %143 = arith.negf %142 : vector<2x128xf32>
    %144 = math.exp %143 : vector<2x128xf32>
    %cst_55 = arith.constant 1.000000e+00 : f32
    %145 = vector.broadcast %cst_55 : f32 to vector<2x128xf32>
    %146 = arith.addf %145, %144 : vector<2x128xf32>
    %147 = arith.divf %145, %146 : vector<2x128xf32>
    %148 = arith.mulf %139, %121 : vector<2x128xf32>
    %149 = arith.mulf %133, %141 : vector<2x128xf32>
    %150 = arith.addf %148, %149 : vector<2x128xf32>
    %151 = math.tanh %150 : vector<2x128xf32>
    %152 = arith.mulf %147, %151 : vector<2x128xf32>
    %153 = arith.index_cast %c1_i32 : i32 to index
    %c0_56 = arith.constant 0 : index
    %c0_57 = arith.constant 0 : index
    %154 = vector.load %arg3[%153, %c0_56, %c0_57] : memref<4x2x1xf32, #tpu.memory_space<vmem>>, vector<1x2x1xf32>
    %155 = vector.shape_cast %154 : vector<1x2x1xf32> to vector<2x1xf32>
    %156 = vector.broadcast %155 : vector<2x1xf32> to vector<2x128xf32>
    %157 = arith.mulf %156, %152 : vector<2x128xf32>
    %cst_58 = arith.constant 1.000000e+00 : f32
    %158 = vector.broadcast %cst_58 : f32 to vector<2x1xf32>
    %159 = arith.subf %158, %155 : vector<2x1xf32>
    %160 = vector.broadcast %159 : vector<2x1xf32> to vector<2x128xf32>
    %161 = arith.mulf %160, %120 : vector<2x128xf32>
    %162 = arith.addf %157, %161 : vector<2x128xf32>
    %c0_59 = arith.constant 0 : index
    %c0_60 = arith.constant 0 : index
    %163 = vector.load %arg9[%c0_59, %c0_60] : memref<2x128xf32, #tpu.memory_space<vmem>>, vector<2x128xf32>
    tpu.vector_store %arg9[%c0_59, %c0_60], %162 {strides = array<i32>} : memref<2x128xf32, #tpu.memory_space<vmem>>, vector<2x128xf32>,
    %164 = vector.broadcast %155 : vector<2x1xf32> to vector<2x128xf32>
    %165 = arith.mulf %164, %150 : vector<2x128xf32>
    %cst_61 = arith.constant 1.000000e+00 : f32
    %166 = vector.broadcast %cst_61 : f32 to vector<2x1xf32>
    %167 = arith.subf %166, %155 : vector<2x1xf32>
    %168 = vector.broadcast %167 : vector<2x1xf32> to vector<2x128xf32>
    %169 = arith.mulf %168, %121 : vector<2x128xf32>
    %170 = arith.addf %165, %169 : vector<2x128xf32>
    %c0_62 = arith.constant 0 : index
    %c0_63 = arith.constant 0 : index
    %171 = vector.load %arg10[%c0_62, %c0_63] : memref<2x128xf32, #tpu.memory_space<vmem>>, vector<2x128xf32>
    tpu.vector_store %arg10[%c0_62, %c0_63], %170 {strides = array<i32>} : memref<2x128xf32, #tpu.memory_space<vmem>>, vector<2x128xf32>,
    %172 = vector.broadcast %155 : vector<2x1xf32> to vector<2x128xf32>
    %173 = arith.mulf %172, %152 : vector<2x128xf32>
    %174 = arith.index_cast %c1_i32 : i32 to index
    %c0_64 = arith.constant 0 : index
    %c0_65 = arith.constant 0 : index
    %175 = vector.load %arg7[%174, %c0_64, %c0_65] : memref<4x2x128xf32, #tpu.memory_space<vmem>>, vector<1x2x128xf32>
    %176 = vector.shape_cast %175 : vector<1x2x128xf32> to vector<2x128xf32>
    %177 = vector.shape_cast %173 : vector<2x128xf32> to vector<1x2x128xf32>
    tpu.vector_store %arg7[%174, %c0_64, %c0_65], %177 {strides = array<i32>} : memref<4x2x128xf32, #tpu.memory_space<vmem>>, vector<1x2x128xf32>,
    %c3_i32_66 = arith.constant 3 : i32
    %178 = arith.subi %c3_i32_66, %c1_i32 : i32
    %c0_67 = arith.constant 0 : index
    %c0_68 = arith.constant 0 : index
    %179 = vector.load %arg11[%c0_67, %c0_68] : memref<2x128xf32, #tpu.memory_space<vmem>>, vector<2x128xf32>
    %c0_69 = arith.constant 0 : index
    %c0_70 = arith.constant 0 : index
    %180 = vector.load %arg12[%c0_69, %c0_70] : memref<2x128xf32, #tpu.memory_space<vmem>>, vector<2x128xf32>
    %181 = arith.index_cast %178 : i32 to index
    %c0_71 = arith.constant 0 : index
    %c0_72 = arith.constant 0 : index
    %182 = vector.load %arg2[%181, %c0_71, %c0_72] : memref<4x2x512xf32, #tpu.memory_space<vmem>>, vector<1x2x512xf32>
    %183 = vector.shape_cast %182 : vector<1x2x512xf32> to vector<2x512xf32>
    %c0_73 = arith.constant 0 : index
    %c0_74 = arith.constant 0 : index
    %184 = vector.load %arg6[%c0_73, %c0_74] : memref<128x512xf32, #tpu.memory_space<vmem>>, vector<128x512xf32>
    %cst_75 = arith.constant dense<0.000000e+00> : vector<2x512xf32>
    %185 = tpu.matmul %179, %184, %cst_75 {dimension_numbers = #tpu.dot_dimension_numbers<[1], [0], [0], [1], [0, 0, 1, 1], [], []>} : vector<2x128xf32>, vector<128x512xf32>, vector<2x512xf32> -> vector<2x512xf32>
    %186 = arith.addf %183, %185 : vector<2x512xf32>
    %187 = vector.extract_strided_slice %186 {offsets = [0, 0], sizes = [2, 128], strides = [1, 1]} : vector<2x512xf32> to vector<2x128xf32>
    %188 = arith.negf %187 : vector<2x128xf32>
    %189 = math.exp %188 : vector<2x128xf32>
    %cst_76 = arith.constant 1.000000e+00 : f32
    %190 = vector.broadcast %cst_76 : f32 to vector<2x128xf32>
    %191 = arith.addf %190, %189 : vector<2x128xf32>
    %192 = arith.divf %190, %191 : vector<2x128xf32>
    %193 = vector.extract_strided_slice %186 {offsets = [0, 128], sizes = [2, 128], strides = [1, 1]} : vector<2x512xf32> to vector<2x128xf32>
    %194 = arith.negf %193 : vector<2x128xf32>
    %195 = math.exp %194 : vector<2x128xf32>
    %cst_77 = arith.constant 1.000000e+00 : f32
    %196 = vector.broadcast %cst_77 : f32 to vector<2x128xf32>
    %197 = arith.addf %196, %195 : vector<2x128xf32>
    %198 = arith.divf %196, %197 : vector<2x128xf32>
    %199 = vector.extract_strided_slice %186 {offsets = [0, 256], sizes = [2, 128], strides = [1, 1]} : vector<2x512xf32> to vector<2x128xf32>
    %200 = math.tanh %199 : vector<2x128xf32>
    %201 = vector.extract_strided_slice %186 {offsets = [0, 384], sizes = [2, 128], strides = [1, 1]} : vector<2x512xf32> to vector<2x128xf32>
    %202 = arith.negf %201 : vector<2x128xf32>
    %203 = math.exp %202 : vector<2x128xf32>
    %cst_78 = arith.constant 1.000000e+00 : f32
    %204 = vector.broadcast %cst_78 : f32 to vector<2x128xf32>
    %205 = arith.addf %204, %203 : vector<2x128xf32>
    %206 = arith.divf %204, %205 : vector<2x128xf32>
    %207 = arith.mulf %198, %180 : vector<2x128xf32>
    %208 = arith.mulf %192, %200 : vector<2x128xf32>
    %209 = arith.addf %207, %208 : vector<2x128xf32>
    %210 = math.tanh %209 : vector<2x128xf32>
    %211 = arith.mulf %206, %210 : vector<2x128xf32>
    %212 = arith.index_cast %178 : i32 to index
    %c0_79 = arith.constant 0 : index
    %c0_80 = arith.constant 0 : index
    %213 = vector.load %arg4[%212, %c0_79, %c0_80] : memref<4x2x1xf32, #tpu.memory_space<vmem>>, vector<1x2x1xf32>
    %214 = vector.shape_cast %213 : vector<1x2x1xf32> to vector<2x1xf32>
    %215 = vector.broadcast %214 : vector<2x1xf32> to vector<2x128xf32>
    %216 = arith.mulf %215, %211 : vector<2x128xf32>
    %cst_81 = arith.constant 1.000000e+00 : f32
    %217 = vector.broadcast %cst_81 : f32 to vector<2x1xf32>
    %218 = arith.subf %217, %214 : vector<2x1xf32>
    %219 = vector.broadcast %218 : vector<2x1xf32> to vector<2x128xf32>
    %220 = arith.mulf %219, %179 : vector<2x128xf32>
    %221 = arith.addf %216, %220 : vector<2x128xf32>
    %c0_82 = arith.constant 0 : index
    %c0_83 = arith.constant 0 : index
    %222 = vector.load %arg11[%c0_82, %c0_83] : memref<2x128xf32, #tpu.memory_space<vmem>>, vector<2x128xf32>
    tpu.vector_store %arg11[%c0_82, %c0_83], %221 {strides = array<i32>} : memref<2x128xf32, #tpu.memory_space<vmem>>, vector<2x128xf32>,
    %223 = vector.broadcast %214 : vector<2x1xf32> to vector<2x128xf32>
    %224 = arith.mulf %223, %209 : vector<2x128xf32>
    %cst_84 = arith.constant 1.000000e+00 : f32
    %225 = vector.broadcast %cst_84 : f32 to vector<2x1xf32>
    %226 = arith.subf %225, %214 : vector<2x1xf32>
    %227 = vector.broadcast %226 : vector<2x1xf32> to vector<2x128xf32>
    %228 = arith.mulf %227, %180 : vector<2x128xf32>
    %229 = arith.addf %224, %228 : vector<2x128xf32>
    %c0_85 = arith.constant 0 : index
    %c0_86 = arith.constant 0 : index
    %230 = vector.load %arg12[%c0_85, %c0_86] : memref<2x128xf32, #tpu.memory_space<vmem>>, vector<2x128xf32>
    tpu.vector_store %arg12[%c0_85, %c0_86], %229 {strides = array<i32>} : memref<2x128xf32, #tpu.memory_space<vmem>>, vector<2x128xf32>,
    %231 = vector.broadcast %214 : vector<2x1xf32> to vector<2x128xf32>
    %232 = arith.mulf %231, %211 : vector<2x128xf32>
    %233 = arith.index_cast %178 : i32 to index
    %c0_87 = arith.constant 0 : index
    %c0_88 = arith.constant 0 : index
    %234 = vector.load %arg8[%233, %c0_87, %c0_88] : memref<4x2x128xf32, #tpu.memory_space<vmem>>, vector<1x2x128xf32>
    %235 = vector.shape_cast %234 : vector<1x2x128xf32> to vector<2x128xf32>
    %236 = vector.shape_cast %232 : vector<2x128xf32> to vector<1x2x128xf32>
    tpu.vector_store %arg8[%233, %c0_87, %c0_88], %236 {strides = array<i32>} : memref<4x2x128xf32, #tpu.memory_space<vmem>>, vector<1x2x128xf32>,
    %c2_i32 = arith.constant 2 : i32
    %c0_89 = arith.constant 0 : index
    %c0_90 = arith.constant 0 : index
    %237 = vector.load %arg9[%c0_89, %c0_90] : memref<2x128xf32, #tpu.memory_space<vmem>>, vector<2x128xf32>
    %c0_91 = arith.constant 0 : index
    %c0_92 = arith.constant 0 : index
    %238 = vector.load %arg10[%c0_91, %c0_92] : memref<2x128xf32, #tpu.memory_space<vmem>>, vector<2x128xf32>
    %239 = arith.index_cast %c2_i32 : i32 to index
    %c0_93 = arith.constant 0 : index
    %c0_94 = arith.constant 0 : index
    %240 = vector.load %arg1[%239, %c0_93, %c0_94] : memref<4x2x512xf32, #tpu.memory_space<vmem>>, vector<1x2x512xf32>
    %241 = vector.shape_cast %240 : vector<1x2x512xf32> to vector<2x512xf32>
    %c0_95 = arith.constant 0 : index
    %c0_96 = arith.constant 0 : index
    %242 = vector.load %arg5[%c0_95, %c0_96] : memref<128x512xf32, #tpu.memory_space<vmem>>, vector<128x512xf32>
    %cst_97 = arith.constant dense<0.000000e+00> : vector<2x512xf32>
    %243 = tpu.matmul %237, %242, %cst_97 {dimension_numbers = #tpu.dot_dimension_numbers<[1], [0], [0], [1], [0, 0, 1, 1], [], []>} : vector<2x128xf32>, vector<128x512xf32>, vector<2x512xf32> -> vector<2x512xf32>
    %244 = arith.addf %241, %243 : vector<2x512xf32>
    %245 = vector.extract_strided_slice %244 {offsets = [0, 0], sizes = [2, 128], strides = [1, 1]} : vector<2x512xf32> to vector<2x128xf32>
    %246 = arith.negf %245 : vector<2x128xf32>
    %247 = math.exp %246 : vector<2x128xf32>
    %cst_98 = arith.constant 1.000000e+00 : f32
    %248 = vector.broadcast %cst_98 : f32 to vector<2x128xf32>
    %249 = arith.addf %248, %247 : vector<2x128xf32>
    %250 = arith.divf %248, %249 : vector<2x128xf32>
    %251 = vector.extract_strided_slice %244 {offsets = [0, 128], sizes = [2, 128], strides = [1, 1]} : vector<2x512xf32> to vector<2x128xf32>
    %252 = arith.negf %251 : vector<2x128xf32>
    %253 = math.exp %252 : vector<2x128xf32>
    %cst_99 = arith.constant 1.000000e+00 : f32
    %254 = vector.broadcast %cst_99 : f32 to vector<2x128xf32>
    %255 = arith.addf %254, %253 : vector<2x128xf32>
    %256 = arith.divf %254, %255 : vector<2x128xf32>
    %257 = vector.extract_strided_slice %244 {offsets = [0, 256], sizes = [2, 128], strides = [1, 1]} : vector<2x512xf32> to vector<2x128xf32>
    %258 = math.tanh %257 : vector<2x128xf32>
    %259 = vector.extract_strided_slice %244 {offsets = [0, 384], sizes = [2, 128], strides = [1, 1]} : vector<2x512xf32> to vector<2x128xf32>
    %260 = arith.negf %259 : vector<2x128xf32>
    %261 = math.exp %260 : vector<2x128xf32>
    %cst_100 = arith.constant 1.000000e+00 : f32
    %262 = vector.broadcast %cst_100 : f32 to vector<2x128xf32>
    %263 = arith.addf %262, %261 : vector<2x128xf32>
    %264 = arith.divf %262, %263 : vector<2x128xf32>
    %265 = arith.mulf %256, %238 : vector<2x128xf32>
    %266 = arith.mulf %250, %258 : vector<2x128xf32>
    %267 = arith.addf %265, %266 : vector<2x128xf32>
    %268 = math.tanh %267 : vector<2x128xf32>
    %269 = arith.mulf %264, %268 : vector<2x128xf32>
    %270 = arith.index_cast %c2_i32 : i32 to index
    %c0_101 = arith.constant 0 : index
    %c0_102 = arith.constant 0 : index
    %271 = vector.load %arg3[%270, %c0_101, %c0_102] : memref<4x2x1xf32, #tpu.memory_space<vmem>>, vector<1x2x1xf32>
    %272 = vector.shape_cast %271 : vector<1x2x1xf32> to vector<2x1xf32>
    %273 = vector.broadcast %272 : vector<2x1xf32> to vector<2x128xf32>
    %274 = arith.mulf %273, %269 : vector<2x128xf32>
    %cst_103 = arith.constant 1.000000e+00 : f32
    %275 = vector.broadcast %cst_103 : f32 to vector<2x1xf32>
    %276 = arith.subf %275, %272 : vector<2x1xf32>
    %277 = vector.broadcast %276 : vector<2x1xf32> to vector<2x128xf32>
    %278 = arith.mulf %277, %237 : vector<2x128xf32>
    %279 = arith.addf %274, %278 : vector<2x128xf32>
    %c0_104 = arith.constant 0 : index
    %c0_105 = arith.constant 0 : index
    %280 = vector.load %arg9[%c0_104, %c0_105] : memref<2x128xf32, #tpu.memory_space<vmem>>, vector<2x128xf32>
    tpu.vector_store %arg9[%c0_104, %c0_105], %279 {strides = array<i32>} : memref<2x128xf32, #tpu.memory_space<vmem>>, vector<2x128xf32>,
    %281 = vector.broadcast %272 : vector<2x1xf32> to vector<2x128xf32>
    %282 = arith.mulf %281, %267 : vector<2x128xf32>
    %cst_106 = arith.constant 1.000000e+00 : f32
    %283 = vector.broadcast %cst_106 : f32 to vector<2x1xf32>
    %284 = arith.subf %283, %272 : vector<2x1xf32>
    %285 = vector.broadcast %284 : vector<2x1xf32> to vector<2x128xf32>
    %286 = arith.mulf %285, %238 : vector<2x128xf32>
    %287 = arith.addf %282, %286 : vector<2x128xf32>
    %c0_107 = arith.constant 0 : index
    %c0_108 = arith.constant 0 : index
    %288 = vector.load %arg10[%c0_107, %c0_108] : memref<2x128xf32, #tpu.memory_space<vmem>>, vector<2x128xf32>
    tpu.vector_store %arg10[%c0_107, %c0_108], %287 {strides = array<i32>} : memref<2x128xf32, #tpu.memory_space<vmem>>, vector<2x128xf32>,
    %289 = vector.broadcast %272 : vector<2x1xf32> to vector<2x128xf32>
    %290 = arith.mulf %289, %269 : vector<2x128xf32>
    %291 = arith.index_cast %c2_i32 : i32 to index
    %c0_109 = arith.constant 0 : index
    %c0_110 = arith.constant 0 : index
    %292 = vector.load %arg7[%291, %c0_109, %c0_110] : memref<4x2x128xf32, #tpu.memory_space<vmem>>, vector<1x2x128xf32>
    %293 = vector.shape_cast %292 : vector<1x2x128xf32> to vector<2x128xf32>
    %294 = vector.shape_cast %290 : vector<2x128xf32> to vector<1x2x128xf32>
    tpu.vector_store %arg7[%291, %c0_109, %c0_110], %294 {strides = array<i32>} : memref<4x2x128xf32, #tpu.memory_space<vmem>>, vector<1x2x128xf32>,
    %c3_i32_111 = arith.constant 3 : i32
    %295 = arith.subi %c3_i32_111, %c2_i32 : i32
    %c0_112 = arith.constant 0 : index
    %c0_113 = arith.constant 0 : index
    %296 = vector.load %arg11[%c0_112, %c0_113] : memref<2x128xf32, #tpu.memory_space<vmem>>, vector<2x128xf32>
    %c0_114 = arith.constant 0 : index
    %c0_115 = arith.constant 0 : index
    %297 = vector.load %arg12[%c0_114, %c0_115] : memref<2x128xf32, #tpu.memory_space<vmem>>, vector<2x128xf32>
    %298 = arith.index_cast %295 : i32 to index
    %c0_116 = arith.constant 0 : index
    %c0_117 = arith.constant 0 : index
    %299 = vector.load %arg2[%298, %c0_116, %c0_117] : memref<4x2x512xf32, #tpu.memory_space<vmem>>, vector<1x2x512xf32>
    %300 = vector.shape_cast %299 : vector<1x2x512xf32> to vector<2x512xf32>
    %c0_118 = arith.constant 0 : index
    %c0_119 = arith.constant 0 : index
    %301 = vector.load %arg6[%c0_118, %c0_119] : memref<128x512xf32, #tpu.memory_space<vmem>>, vector<128x512xf32>
    %cst_120 = arith.constant dense<0.000000e+00> : vector<2x512xf32>
    %302 = tpu.matmul %296, %301, %cst_120 {dimension_numbers = #tpu.dot_dimension_numbers<[1], [0], [0], [1], [0, 0, 1, 1], [], []>} : vector<2x128xf32>, vector<128x512xf32>, vector<2x512xf32> -> vector<2x512xf32>
    %303 = arith.addf %300, %302 : vector<2x512xf32>
    %304 = vector.extract_strided_slice %303 {offsets = [0, 0], sizes = [2, 128], strides = [1, 1]} : vector<2x512xf32> to vector<2x128xf32>
    %305 = arith.negf %304 : vector<2x128xf32>
    %306 = math.exp %305 : vector<2x128xf32>
    %cst_121 = arith.constant 1.000000e+00 : f32
    %307 = vector.broadcast %cst_121 : f32 to vector<2x128xf32>
    %308 = arith.addf %307, %306 : vector<2x128xf32>
    %309 = arith.divf %307, %308 : vector<2x128xf32>
    %310 = vector.extract_strided_slice %303 {offsets = [0, 128], sizes = [2, 128], strides = [1, 1]} : vector<2x512xf32> to vector<2x128xf32>
    %311 = arith.negf %310 : vector<2x128xf32>
    %312 = math.exp %311 : vector<2x128xf32>
    %cst_122 = arith.constant 1.000000e+00 : f32
    %313 = vector.broadcast %cst_122 : f32 to vector<2x128xf32>
    %314 = arith.addf %313, %312 : vector<2x128xf32>
    %315 = arith.divf %313, %314 : vector<2x128xf32>
    %316 = vector.extract_strided_slice %303 {offsets = [0, 256], sizes = [2, 128], strides = [1, 1]} : vector<2x512xf32> to vector<2x128xf32>
    %317 = math.tanh %316 : vector<2x128xf32>
    %318 = vector.extract_strided_slice %303 {offsets = [0, 384], sizes = [2, 128], strides = [1, 1]} : vector<2x512xf32> to vector<2x128xf32>
    %319 = arith.negf %318 : vector<2x128xf32>
    %320 = math.exp %319 : vector<2x128xf32>
    %cst_123 = arith.constant 1.000000e+00 : f32
    %321 = vector.broadcast %cst_123 : f32 to vector<2x128xf32>
    %322 = arith.addf %321, %320 : vector<2x128xf32>
    %323 = arith.divf %321, %322 : vector<2x128xf32>
    %324 = arith.mulf %315, %297 : vector<2x128xf32>
    %325 = arith.mulf %309, %317 : vector<2x128xf32>
    %326 = arith.addf %324, %325 : vector<2x128xf32>
    %327 = math.tanh %326 : vector<2x128xf32>
    %328 = arith.mulf %323, %327 : vector<2x128xf32>
    %329 = arith.index_cast %295 : i32 to index
    %c0_124 = arith.constant 0 : index
    %c0_125 = arith.constant 0 : index
    %330 = vector.load %arg4[%329, %c0_124, %c0_125] : memref<4x2x1xf32, #tpu.memory_space<vmem>>, vector<1x2x1xf32>
    %331 = vector.shape_cast %330 : vector<1x2x1xf32> to vector<2x1xf32>
    %332 = vector.broadcast %331 : vector<2x1xf32> to vector<2x128xf32>
    %333 = arith.mulf %332, %328 : vector<2x128xf32>
    %cst_126 = arith.constant 1.000000e+00 : f32
    %334 = vector.broadcast %cst_126 : f32 to vector<2x1xf32>
    %335 = arith.subf %334, %331 : vector<2x1xf32>
    %336 = vector.broadcast %335 : vector<2x1xf32> to vector<2x128xf32>
    %337 = arith.mulf %336, %296 : vector<2x128xf32>
    %338 = arith.addf %333, %337 : vector<2x128xf32>
    %c0_127 = arith.constant 0 : index
    %c0_128 = arith.constant 0 : index
    %339 = vector.load %arg11[%c0_127, %c0_128] : memref<2x128xf32, #tpu.memory_space<vmem>>, vector<2x128xf32>
    tpu.vector_store %arg11[%c0_127, %c0_128], %338 {strides = array<i32>} : memref<2x128xf32, #tpu.memory_space<vmem>>, vector<2x128xf32>,
    %340 = vector.broadcast %331 : vector<2x1xf32> to vector<2x128xf32>
    %341 = arith.mulf %340, %326 : vector<2x128xf32>
    %cst_129 = arith.constant 1.000000e+00 : f32
    %342 = vector.broadcast %cst_129 : f32 to vector<2x1xf32>
    %343 = arith.subf %342, %331 : vector<2x1xf32>
    %344 = vector.broadcast %343 : vector<2x1xf32> to vector<2x128xf32>
    %345 = arith.mulf %344, %297 : vector<2x128xf32>
    %346 = arith.addf %341, %345 : vector<2x128xf32>
    %c0_130 = arith.constant 0 : index
    %c0_131 = arith.constant 0 : index
    %347 = vector.load %arg12[%c0_130, %c0_131] : memref<2x128xf32, #tpu.memory_space<vmem>>, vector<2x128xf32>
    tpu.vector_store %arg12[%c0_130, %c0_131], %346 {strides = array<i32>} : memref<2x128xf32, #tpu.memory_space<vmem>>, vector<2x128xf32>,
    %348 = vector.broadcast %331 : vector<2x1xf32> to vector<2x128xf32>
    %349 = arith.mulf %348, %328 : vector<2x128xf32>
    %350 = arith.index_cast %295 : i32 to index
    %c0_132 = arith.constant 0 : index
    %c0_133 = arith.constant 0 : index
    %351 = vector.load %arg8[%350, %c0_132, %c0_133] : memref<4x2x128xf32, #tpu.memory_space<vmem>>, vector<1x2x128xf32>
    %352 = vector.shape_cast %351 : vector<1x2x128xf32> to vector<2x128xf32>
    %353 = vector.shape_cast %349 : vector<2x128xf32> to vector<1x2x128xf32>
    tpu.vector_store %arg8[%350, %c0_132, %c0_133], %353 {strides = array<i32>} : memref<4x2x128xf32, #tpu.memory_space<vmem>>, vector<1x2x128xf32>,
    %c3_i32_134 = arith.constant 3 : i32
    %c0_135 = arith.constant 0 : index
    %c0_136 = arith.constant 0 : index
    %354 = vector.load %arg9[%c0_135, %c0_136] : memref<2x128xf32, #tpu.memory_space<vmem>>, vector<2x128xf32>
    %c0_137 = arith.constant 0 : index
    %c0_138 = arith.constant 0 : index
    %355 = vector.load %arg10[%c0_137, %c0_138] : memref<2x128xf32, #tpu.memory_space<vmem>>, vector<2x128xf32>
    %356 = arith.index_cast %c3_i32_134 : i32 to index
    %c0_139 = arith.constant 0 : index
    %c0_140 = arith.constant 0 : index
    %357 = vector.load %arg1[%356, %c0_139, %c0_140] : memref<4x2x512xf32, #tpu.memory_space<vmem>>, vector<1x2x512xf32>
    %358 = vector.shape_cast %357 : vector<1x2x512xf32> to vector<2x512xf32>
    %c0_141 = arith.constant 0 : index
    %c0_142 = arith.constant 0 : index
    %359 = vector.load %arg5[%c0_141, %c0_142] : memref<128x512xf32, #tpu.memory_space<vmem>>, vector<128x512xf32>
    %cst_143 = arith.constant dense<0.000000e+00> : vector<2x512xf32>
    %360 = tpu.matmul %354, %359, %cst_143 {dimension_numbers = #tpu.dot_dimension_numbers<[1], [0], [0], [1], [0, 0, 1, 1], [], []>} : vector<2x128xf32>, vector<128x512xf32>, vector<2x512xf32> -> vector<2x512xf32>
    %361 = arith.addf %358, %360 : vector<2x512xf32>
    %362 = vector.extract_strided_slice %361 {offsets = [0, 0], sizes = [2, 128], strides = [1, 1]} : vector<2x512xf32> to vector<2x128xf32>
    %363 = arith.negf %362 : vector<2x128xf32>
    %364 = math.exp %363 : vector<2x128xf32>
    %cst_144 = arith.constant 1.000000e+00 : f32
    %365 = vector.broadcast %cst_144 : f32 to vector<2x128xf32>
    %366 = arith.addf %365, %364 : vector<2x128xf32>
    %367 = arith.divf %365, %366 : vector<2x128xf32>
    %368 = vector.extract_strided_slice %361 {offsets = [0, 128], sizes = [2, 128], strides = [1, 1]} : vector<2x512xf32> to vector<2x128xf32>
    %369 = arith.negf %368 : vector<2x128xf32>
    %370 = math.exp %369 : vector<2x128xf32>
    %cst_145 = arith.constant 1.000000e+00 : f32
    %371 = vector.broadcast %cst_145 : f32 to vector<2x128xf32>
    %372 = arith.addf %371, %370 : vector<2x128xf32>
    %373 = arith.divf %371, %372 : vector<2x128xf32>
    %374 = vector.extract_strided_slice %361 {offsets = [0, 256], sizes = [2, 128], strides = [1, 1]} : vector<2x512xf32> to vector<2x128xf32>
    %375 = math.tanh %374 : vector<2x128xf32>
    %376 = vector.extract_strided_slice %361 {offsets = [0, 384], sizes = [2, 128], strides = [1, 1]} : vector<2x512xf32> to vector<2x128xf32>
    %377 = arith.negf %376 : vector<2x128xf32>
    %378 = math.exp %377 : vector<2x128xf32>
    %cst_146 = arith.constant 1.000000e+00 : f32
    %379 = vector.broadcast %cst_146 : f32 to vector<2x128xf32>
    %380 = arith.addf %379, %378 : vector<2x128xf32>
    %381 = arith.divf %379, %380 : vector<2x128xf32>
    %382 = arith.mulf %373, %355 : vector<2x128xf32>
    %383 = arith.mulf %367, %375 : vector<2x128xf32>
    %384 = arith.addf %382, %383 : vector<2x128xf32>
    %385 = math.tanh %384 : vector<2x128xf32>
    %386 = arith.mulf %381, %385 : vector<2x128xf32>
    %387 = arith.index_cast %c3_i32_134 : i32 to index
    %c0_147 = arith.constant 0 : index
    %c0_148 = arith.constant 0 : index
    %388 = vector.load %arg3[%387, %c0_147, %c0_148] : memref<4x2x1xf32, #tpu.memory_space<vmem>>, vector<1x2x1xf32>
    %389 = vector.shape_cast %388 : vector<1x2x1xf32> to vector<2x1xf32>
    %390 = vector.broadcast %389 : vector<2x1xf32> to vector<2x128xf32>
    %391 = arith.mulf %390, %386 : vector<2x128xf32>
    %cst_149 = arith.constant 1.000000e+00 : f32
    %392 = vector.broadcast %cst_149 : f32 to vector<2x1xf32>
    %393 = arith.subf %392, %389 : vector<2x1xf32>
    %394 = vector.broadcast %393 : vector<2x1xf32> to vector<2x128xf32>
    %395 = arith.mulf %394, %354 : vector<2x128xf32>
    %396 = arith.addf %391, %395 : vector<2x128xf32>
    %c0_150 = arith.constant 0 : index
    %c0_151 = arith.constant 0 : index
    %397 = vector.load %arg9[%c0_150, %c0_151] : memref<2x128xf32, #tpu.memory_space<vmem>>, vector<2x128xf32>
    tpu.vector_store %arg9[%c0_150, %c0_151], %396 {strides = array<i32>} : memref<2x128xf32, #tpu.memory_space<vmem>>, vector<2x128xf32>,
    %398 = vector.broadcast %389 : vector<2x1xf32> to vector<2x128xf32>
    %399 = arith.mulf %398, %384 : vector<2x128xf32>
    %cst_152 = arith.constant 1.000000e+00 : f32
    %400 = vector.broadcast %cst_152 : f32 to vector<2x1xf32>
    %401 = arith.subf %400, %389 : vector<2x1xf32>
    %402 = vector.broadcast %401 : vector<2x1xf32> to vector<2x128xf32>
    %403 = arith.mulf %402, %355 : vector<2x128xf32>
    %404 = arith.addf %399, %403 : vector<2x128xf32>
    %c0_153 = arith.constant 0 : index
    %c0_154 = arith.constant 0 : index
    %405 = vector.load %arg10[%c0_153, %c0_154] : memref<2x128xf32, #tpu.memory_space<vmem>>, vector<2x128xf32>
    tpu.vector_store %arg10[%c0_153, %c0_154], %404 {strides = array<i32>} : memref<2x128xf32, #tpu.memory_space<vmem>>, vector<2x128xf32>,
    %406 = vector.broadcast %389 : vector<2x1xf32> to vector<2x128xf32>
    %407 = arith.mulf %406, %386 : vector<2x128xf32>
    %408 = arith.index_cast %c3_i32_134 : i32 to index
    %c0_155 = arith.constant 0 : index
    %c0_156 = arith.constant 0 : index
    %409 = vector.load %arg7[%408, %c0_155, %c0_156] : memref<4x2x128xf32, #tpu.memory_space<vmem>>, vector<1x2x128xf32>
    %410 = vector.shape_cast %409 : vector<1x2x128xf32> to vector<2x128xf32>
    %411 = vector.shape_cast %407 : vector<2x128xf32> to vector<1x2x128xf32>
    tpu.vector_store %arg7[%408, %c0_155, %c0_156], %411 {strides = array<i32>} : memref<4x2x128xf32, #tpu.memory_space<vmem>>, vector<1x2x128xf32>,
    %c3_i32_157 = arith.constant 3 : i32
    %412 = arith.subi %c3_i32_157, %c3_i32_134 : i32
    %c0_158 = arith.constant 0 : index
    %c0_159 = arith.constant 0 : index
    %413 = vector.load %arg11[%c0_158, %c0_159] : memref<2x128xf32, #tpu.memory_space<vmem>>, vector<2x128xf32>
    %c0_160 = arith.constant 0 : index
    %c0_161 = arith.constant 0 : index
    %414 = vector.load %arg12[%c0_160, %c0_161] : memref<2x128xf32, #tpu.memory_space<vmem>>, vector<2x128xf32>
    %415 = arith.index_cast %412 : i32 to index
    %c0_162 = arith.constant 0 : index
    %c0_163 = arith.constant 0 : index
    %416 = vector.load %arg2[%415, %c0_162, %c0_163] : memref<4x2x512xf32, #tpu.memory_space<vmem>>, vector<1x2x512xf32>
    %417 = vector.shape_cast %416 : vector<1x2x512xf32> to vector<2x512xf32>
    %c0_164 = arith.constant 0 : index
    %c0_165 = arith.constant 0 : index
    %418 = vector.load %arg6[%c0_164, %c0_165] : memref<128x512xf32, #tpu.memory_space<vmem>>, vector<128x512xf32>
    %cst_166 = arith.constant dense<0.000000e+00> : vector<2x512xf32>
    %419 = tpu.matmul %413, %418, %cst_166 {dimension_numbers = #tpu.dot_dimension_numbers<[1], [0], [0], [1], [0, 0, 1, 1], [], []>} : vector<2x128xf32>, vector<128x512xf32>, vector<2x512xf32> -> vector<2x512xf32>
    %420 = arith.addf %417, %419 : vector<2x512xf32>
    %421 = vector.extract_strided_slice %420 {offsets = [0, 0], sizes = [2, 128], strides = [1, 1]} : vector<2x512xf32> to vector<2x128xf32>
    %422 = arith.negf %421 : vector<2x128xf32>
    %423 = math.exp %422 : vector<2x128xf32>
    %cst_167 = arith.constant 1.000000e+00 : f32
    %424 = vector.broadcast %cst_167 : f32 to vector<2x128xf32>
    %425 = arith.addf %424, %423 : vector<2x128xf32>
    %426 = arith.divf %424, %425 : vector<2x128xf32>
    %427 = vector.extract_strided_slice %420 {offsets = [0, 128], sizes = [2, 128], strides = [1, 1]} : vector<2x512xf32> to vector<2x128xf32>
    %428 = arith.negf %427 : vector<2x128xf32>
    %429 = math.exp %428 : vector<2x128xf32>
    %cst_168 = arith.constant 1.000000e+00 : f32
    %430 = vector.broadcast %cst_168 : f32 to vector<2x128xf32>
    %431 = arith.addf %430, %429 : vector<2x128xf32>
    %432 = arith.divf %430, %431 : vector<2x128xf32>
    %433 = vector.extract_strided_slice %420 {offsets = [0, 256], sizes = [2, 128], strides = [1, 1]} : vector<2x512xf32> to vector<2x128xf32>
    %434 = math.tanh %433 : vector<2x128xf32>
    %435 = vector.extract_strided_slice %420 {offsets = [0, 384], sizes = [2, 128], strides = [1, 1]} : vector<2x512xf32> to vector<2x128xf32>
    %436 = arith.negf %435 : vector<2x128xf32>
    %437 = math.exp %436 : vector<2x128xf32>
    %cst_169 = arith.constant 1.000000e+00 : f32
    %438 = vector.broadcast %cst_169 : f32 to vector<2x128xf32>
    %439 = arith.addf %438, %437 : vector<2x128xf32>
    %440 = arith.divf %438, %439 : vector<2x128xf32>
    %441 = arith.mulf %432, %414 : vector<2x128xf32>
    %442 = arith.mulf %426, %434 : vector<2x128xf32>
    %443 = arith.addf %441, %442 : vector<2x128xf32>
    %444 = math.tanh %443 : vector<2x128xf32>
    %445 = arith.mulf %440, %444 : vector<2x128xf32>
    %446 = arith.index_cast %412 : i32 to index
    %c0_170 = arith.constant 0 : index
    %c0_171 = arith.constant 0 : index
    %447 = vector.load %arg4[%446, %c0_170, %c0_171] : memref<4x2x1xf32, #tpu.memory_space<vmem>>, vector<1x2x1xf32>
    %448 = vector.shape_cast %447 : vector<1x2x1xf32> to vector<2x1xf32>
    %449 = vector.broadcast %448 : vector<2x1xf32> to vector<2x128xf32>
    %450 = arith.mulf %449, %445 : vector<2x128xf32>
    %cst_172 = arith.constant 1.000000e+00 : f32
    %451 = vector.broadcast %cst_172 : f32 to vector<2x1xf32>
    %452 = arith.subf %451, %448 : vector<2x1xf32>
    %453 = vector.broadcast %452 : vector<2x1xf32> to vector<2x128xf32>
    %454 = arith.mulf %453, %413 : vector<2x128xf32>
    %455 = arith.addf %450, %454 : vector<2x128xf32>
    %c0_173 = arith.constant 0 : index
    %c0_174 = arith.constant 0 : index
    %456 = vector.load %arg11[%c0_173, %c0_174] : memref<2x128xf32, #tpu.memory_space<vmem>>, vector<2x128xf32>
    tpu.vector_store %arg11[%c0_173, %c0_174], %455 {strides = array<i32>} : memref<2x128xf32, #tpu.memory_space<vmem>>, vector<2x128xf32>,
    %457 = vector.broadcast %448 : vector<2x1xf32> to vector<2x128xf32>
    %458 = arith.mulf %457, %443 : vector<2x128xf32>
    %cst_175 = arith.constant 1.000000e+00 : f32
    %459 = vector.broadcast %cst_175 : f32 to vector<2x1xf32>
    %460 = arith.subf %459, %448 : vector<2x1xf32>
    %461 = vector.broadcast %460 : vector<2x1xf32> to vector<2x128xf32>
    %462 = arith.mulf %461, %414 : vector<2x128xf32>
    %463 = arith.addf %458, %462 : vector<2x128xf32>
    %c0_176 = arith.constant 0 : index
    %c0_177 = arith.constant 0 : index
    %464 = vector.load %arg12[%c0_176, %c0_177] : memref<2x128xf32, #tpu.memory_space<vmem>>, vector<2x128xf32>
    tpu.vector_store %arg12[%c0_176, %c0_177], %463 {strides = array<i32>} : memref<2x128xf32, #tpu.memory_space<vmem>>, vector<2x128xf32>,
    %465 = vector.broadcast %448 : vector<2x1xf32> to vector<2x128xf32>
    %466 = arith.mulf %465, %445 : vector<2x128xf32>
    %467 = arith.index_cast %412 : i32 to index
    %c0_178 = arith.constant 0 : index
    %c0_179 = arith.constant 0 : index
    %468 = vector.load %arg8[%467, %c0_178, %c0_179] : memref<4x2x128xf32, #tpu.memory_space<vmem>>, vector<1x2x128xf32>
    %469 = vector.shape_cast %468 : vector<1x2x128xf32> to vector<2x128xf32>
    %470 = vector.shape_cast %466 : vector<2x128xf32> to vector<1x2x128xf32>
    tpu.vector_store %arg8[%467, %c0_178, %c0_179], %470 {strides = array<i32>} : memref<4x2x128xf32, #tpu.memory_space<vmem>>, vector<1x2x128xf32>,
    %c4_i32 = arith.constant 4 : i32
    return
  }
  func.func @transform_0(%arg0: i32) -> (i32, i32, i32) {
    %c0_i32 = arith.constant 0 : i32
    %c0_i32_0 = arith.constant 0 : i32
    %c0_i32_1 = arith.constant 0 : i32
    return %arg0, %c0_i32, %c0_i32_0 : i32, i32, i32
  }
  func.func @transform_1(%arg0: i32) -> (i32, i32, i32) {
    %c1_i32 = arith.constant 1 : i32
    %0 = arith.subi %c1_i32, %arg0 : i32
    %c0_i32 = arith.constant 0 : i32
    %c1_i32_0 = arith.constant 1 : i32
    %c0_i32_1 = arith.constant 0 : i32
    return %0, %c0_i32, %c1_i32_0 : i32, i32, i32
  }
  func.func @transform_2(%arg0: i32) -> (i32, i32, i32) {
    %c0_i32 = arith.constant 0 : i32
    %c0_i32_0 = arith.constant 0 : i32
    %c0_i32_1 = arith.constant 0 : i32
    return %arg0, %c0_i32, %c0_i32_0 : i32, i32, i32
  }
  func.func @transform_3(%arg0: i32) -> (i32, i32, i32) {
    %c1_i32 = arith.constant 1 : i32
    %0 = arith.subi %c1_i32, %arg0 : i32
    %c0_i32 = arith.constant 0 : i32
    %c0_i32_0 = arith.constant 0 : i32
    %c0_i32_1 = arith.constant 0 : i32
    return %0, %c0_i32, %c0_i32_0 : i32, i32, i32
  }
  func.func @transform_4(%arg0: i32) -> (i32, i32) {
    %c0_i32 = arith.constant 0 : i32
    %c0_i32_0 = arith.constant 0 : i32
    %c0_i32_1 = arith.constant 0 : i32
    return %c0_i32, %c0_i32_0 : i32, i32
  }
  func.func @transform_5(%arg0: i32) -> (i32, i32) {
    %c0_i32 = arith.constant 0 : i32
    %c0_i32_0 = arith.constant 0 : i32
    %c0_i32_1 = arith.constant 0 : i32
    return %c0_i32, %c0_i32_0 : i32, i32
  }
  func.func @transform_6(%arg0: i32) -> (i32, i32, i32) {
    %c0_i32 = arith.constant 0 : i32
    %c0_i32_0 = arith.constant 0 : i32
    %c0_i32_1 = arith.constant 0 : i32
    return %arg0, %c0_i32, %c0_i32_0 : i32, i32, i32
  }
  func.func @transform_7(%arg0: i32) -> (i32, i32, i32) {
    %c1_i32 = arith.constant 1 : i32
    %0 = arith.subi %c1_i32, %arg0 : i32
    %c0_i32 = arith.constant 0 : i32
    %c0_i32_0 = arith.constant 0 : i32
    %c0_i32_1 = arith.constant 0 : i32
    return %0, %c0_i32, %c0_i32_0 : i32, i32, i32
  }
}

</mosaic_0001>

<llo_original>
// kernel: bilstm_forward.2
$region0: #{bilstm_forward.2}
  #allocation0 [shape = 'u32[]', space=smem, size = 0x4, offset = 0x4, fixed_abs, tag = 'smem constant byte address 0x4 - core index']
  #allocation1 [shape = 'u32[144,128]{1,0:T(1,128)}', space=vmem, size = 0x12000, scoped, tag = 'internal scratch']
  %s0 = inlined_call_operand.vmem [shape: f32[16,128], index: 0, kind: input, shape index: {}]
  %s1 = inlined_call_operand.vmem [shape: f32[128,1024], index: 1, kind: input, shape index: {}]
  %s2 = inlined_call_operand.vmem [shape: f32[1,1024], index: 2, kind: input, shape index: {}]
  %s3 = inlined_call_operand.vmem [shape: f32[16,1024], index: 3, kind: output, shape index: {}]
  %s4 = sld [smem:[#allocation0]]
  $region22: #{bilstm_forward.2} parent=0
    _
  %s6 = ssub.s32 1, %s4
  %s7 = scalar_select 0, %s6, %s4
  // Predicated region
  $region2: #{bilstm_forward.2} parent=0 // pred_check
    _
  $region3: #{bilstm_forward.2} parent=0 // pred_check_branch
    %9 = sbr.rel (0) target = $region5
  $region4: #{bilstm_forward.2} parent=0 // pred_region
    _
  $region5: #{bilstm_forward.2} parent=0 // pred_fallthru
    _
  // Predicated region
  $region6: #{bilstm_forward.2} parent=0 // pred_check
    _
  $region7: #{bilstm_forward.2} parent=0 // pred_check_branch
    %11 = sbr.rel (0) target = $region9
  $region8: #{bilstm_forward.2} parent=0 // pred_region
    _
  $region9: #{bilstm_forward.2} parent=0 // pred_fallthru
    _
  // Predicated region
  $region10: #{bilstm_forward.2} parent=0 // pred_check
    _
  $region11: #{bilstm_forward.2} parent=0 // pred_check_branch
    %13 = sbr.rel (0) target = $region13
  $region12: #{bilstm_forward.2} parent=0 // pred_region
    _
  $region13: #{bilstm_forward.2} parent=0 // pred_fallthru
    _
  %v14 = vld [vmem:[%s0] sm:$0xff]
  %v15 = vld [vmem:[%s0 + $0x8] sm:$0xff]
  %v16 = vld [vmem:[%s1] sm:$0xff]
  %v17 = vld [vmem:[%s1 + $0x8] sm:$0xff]
  %v18 = vld [vmem:[%s1 + $0x10] sm:$0xff]
  %v19 = vld [vmem:[%s1 + $0x18] sm:$0xff]
  %v20 = vld [vmem:[%s1 + $0x20] sm:$0xff]
  %v21 = vld [vmem:[%s1 + $0x28] sm:$0xff]
  %v22 = vld [vmem:[%s1 + $0x30] sm:$0xff]
  %v23 = vld [vmem:[%s1 + $0x38] sm:$0xff]
  %v24 = vld [vmem:[%s1 + $0x40] sm:$0xff]
  %v25 = vld [vmem:[%s1 + $0x48] sm:$0xff]
  %v26 = vld [vmem:[%s1 + $0x50] sm:$0xff]
  %v27 = vld [vmem:[%s1 + $0x58] sm:$0xff]
  %v28 = vld [vmem:[%s1 + $0x60] sm:$0xff]
  %v29 = vld [vmem:[%s1 + $0x68] sm:$0xff]
  %v30 = vld [vmem:[%s1 + $0x70] sm:$0xff]
  %v31 = vld [vmem:[%s1 + $0x78] sm:$0xff]
  %v32 = vld [vmem:[%s1 + $0x80] sm:$0xff]
  %v33 = vld [vmem:[%s1 + $0x88] sm:$0xff]
  %v34 = vld [vmem:[%s1 + $0x90] sm:$0xff]
  %v35 = vld [vmem:[%s1 + $0x98] sm:$0xff]
  %v36 = vld [vmem:[%s1 + $0xa0] sm:$0xff]
  %v37 = vld [vmem:[%s1 + $0xa8] sm:$0xff]
  %v38 = vld [vmem:[%s1 + $0xb0] sm:$0xff]
  %v39 = vld [vmem:[%s1 + $0xb8] sm:$0xff]
  %v40 = vld [vmem:[%s1 + $0xc0] sm:$0xff]
  %v41 = vld [vmem:[%s1 + $0xc8] sm:$0xff]
  %v42 = vld [vmem:[%s1 + $0xd0] sm:$0xff]
  %v43 = vld [vmem:[%s1 + $0xd8] sm:$0xff]
  %v44 = vld [vmem:[%s1 + $0xe0] sm:$0xff]
  %v45 = vld [vmem:[%s1 + $0xe8] sm:$0xff]
  %v46 = vld [vmem:[%s1 + $0xf0] sm:$0xff]
  %v47 = vld [vmem:[%s1 + $0xf8] sm:$0xff]
  %v48 = vld [vmem:[%s1 + $0x100] sm:$0xff]
  %v49 = vld [vmem:[%s1 + $0x108] sm:$0xff]
  %v50 = vld [vmem:[%s1 + $0x110] sm:$0xff]
  %v51 = vld [vmem:[%s1 + $0x118] sm:$0xff]
  %v52 = vld [vmem:[%s1 + $0x120] sm:$0xff]
  %v53 = vld [vmem:[%s1 + $0x128] sm:$0xff]
  %v54 = vld [vmem:[%s1 + $0x130] sm:$0xff]
  %v55 = vld [vmem:[%s1 + $0x138] sm:$0xff]
  %v56 = vld [vmem:[%s1 + $0x140] sm:$0xff]
  %v57 = vld [vmem:[%s1 + $0x148] sm:$0xff]
  %v58 = vld [vmem:[%s1 + $0x150] sm:$0xff]
  %v59 = vld [vmem:[%s1 + $0x158] sm:$0xff]
  %v60 = vld [vmem:[%s1 + $0x160] sm:$0xff]
  %v61 = vld [vmem:[%s1 + $0x168] sm:$0xff]
  %v62 = vld [vmem:[%s1 + $0x170] sm:$0xff]
  %v63 = vld [vmem:[%s1 + $0x178] sm:$0xff]
  %v64 = vld [vmem:[%s1 + $0x180] sm:$0xff]
  %v65 = vld [vmem:[%s1 + $0x188] sm:$0xff]
  %v66 = vld [vmem:[%s1 + $0x190] sm:$0xff]
  %v67 = vld [vmem:[%s1 + $0x198] sm:$0xff]
  %v68 = vld [vmem:[%s1 + $0x1a0] sm:$0xff]
  %v69 = vld [vmem:[%s1 + $0x1a8] sm:$0xff]
  %v70 = vld [vmem:[%s1 + $0x1b0] sm:$0xff]
  %v71 = vld [vmem:[%s1 + $0x1b8] sm:$0xff]
  %v72 = vld [vmem:[%s1 + $0x1c0] sm:$0xff]
  %v73 = vld [vmem:[%s1 + $0x1c8] sm:$0xff]
  %v74 = vld [vmem:[%s1 + $0x1d0] sm:$0xff]
  %v75 = vld [vmem:[%s1 + $0x1d8] sm:$0xff]
  %v76 = vld [vmem:[%s1 + $0x1e0] sm:$0xff]
  %v77 = vld [vmem:[%s1 + $0x1e8] sm:$0xff]
  %v78 = vld [vmem:[%s1 + $0x1f0] sm:$0xff]
  %v79 = vld [vmem:[%s1 + $0x1f8] sm:$0xff]
  %v80 = vld [vmem:[%s1 + $0x200] sm:$0xff]
  %v81 = vld [vmem:[%s1 + $0x208] sm:$0xff]
  %v82 = vld [vmem:[%s1 + $0x210] sm:$0xff]
  %v83 = vld [vmem:[%s1 + $0x218] sm:$0xff]
  %v84 = vld [vmem:[%s1 + $0x220] sm:$0xff]
  %v85 = vld [vmem:[%s1 + $0x228] sm:$0xff]
  %v86 = vld [vmem:[%s1 + $0x230] sm:$0xff]
  %v87 = vld [vmem:[%s1 + $0x238] sm:$0xff]
  %v88 = vld [vmem:[%s1 + $0x240] sm:$0xff]
  %v89 = vld [vmem:[%s1 + $0x248] sm:$0xff]
  %v90 = vld [vmem:[%s1 + $0x250] sm:$0xff]
  %v91 = vld [vmem:[%s1 + $0x258] sm:$0xff]
  %v92 = vld [vmem:[%s1 + $0x260] sm:$0xff]
  %v93 = vld [vmem:[%s1 + $0x268] sm:$0xff]
  %v94 = vld [vmem:[%s1 + $0x270] sm:$0xff]
  %v95 = vld [vmem:[%s1 + $0x278] sm:$0xff]
  %v96 = vld [vmem:[%s1 + $0x280] sm:$0xff]
  %v97 = vld [vmem:[%s1 + $0x288] sm:$0xff]
  %v98 = vld [vmem:[%s1 + $0x290] sm:$0xff]
  %v99 = vld [vmem:[%s1 + $0x298] sm:$0xff]
  %v100 = vld [vmem:[%s1 + $0x2a0] sm:$0xff]
  %v101 = vld [vmem:[%s1 + $0x2a8] sm:$0xff]
  %v102 = vld [vmem:[%s1 + $0x2b0] sm:$0xff]
  %v103 = vld [vmem:[%s1 + $0x2b8] sm:$0xff]
  %v104 = vld [vmem:[%s1 + $0x2c0] sm:$0xff]
  %v105 = vld [vmem:[%s1 + $0x2c8] sm:$0xff]
  %v106 = vld [vmem:[%s1 + $0x2d0] sm:$0xff]
  %v107 = vld [vmem:[%s1 + $0x2d8] sm:$0xff]
  %v108 = vld [vmem:[%s1 + $0x2e0] sm:$0xff]
  %v109 = vld [vmem:[%s1 + $0x2e8] sm:$0xff]
  %v110 = vld [vmem:[%s1 + $0x2f0] sm:$0xff]
  %v111 = vld [vmem:[%s1 + $0x2f8] sm:$0xff]
  %v112 = vld [vmem:[%s1 + $0x300] sm:$0xff]
  %v113 = vld [vmem:[%s1 + $0x308] sm:$0xff]
  %v114 = vld [vmem:[%s1 + $0x310] sm:$0xff]
  %v115 = vld [vmem:[%s1 + $0x318] sm:$0xff]
  %v116 = vld [vmem:[%s1 + $0x320] sm:$0xff]
  %v117 = vld [vmem:[%s1 + $0x328] sm:$0xff]
  %v118 = vld [vmem:[%s1 + $0x330] sm:$0xff]
  %v119 = vld [vmem:[%s1 + $0x338] sm:$0xff]
  %v120 = vld [vmem:[%s1 + $0x340] sm:$0xff]
  %v121 = vld [vmem:[%s1 + $0x348] sm:$0xff]
  %v122 = vld [vmem:[%s1 + $0x350] sm:$0xff]
  %v123 = vld [vmem:[%s1 + $0x358] sm:$0xff]
  %v124 = vld [vmem:[%s1 + $0x360] sm:$0xff]
  %v125 = vld [vmem:[%s1 + $0x368] sm:$0xff]
  %v126 = vld [vmem:[%s1 + $0x370] sm:$0xff]
  %v127 = vld [vmem:[%s1 + $0x378] sm:$0xff]
  %v128 = vld [vmem:[%s1 + $0x380] sm:$0xff]
  %v129 = vld [vmem:[%s1 + $0x388] sm:$0xff]
  %v130 = vld [vmem:[%s1 + $0x390] sm:$0xff]
  %v131 = vld [vmem:[%s1 + $0x398] sm:$0xff]
  %v132 = vld [vmem:[%s1 + $0x3a0] sm:$0xff]
  %v133 = vld [vmem:[%s1 + $0x3a8] sm:$0xff]
  %v134 = vld [vmem:[%s1 + $0x3b0] sm:$0xff]
  %v135 = vld [vmem:[%s1 + $0x3b8] sm:$0xff]
  %v136 = vld [vmem:[%s1 + $0x3c0] sm:$0xff]
  %v137 = vld [vmem:[%s1 + $0x3c8] sm:$0xff]
  %v138 = vld [vmem:[%s1 + $0x3d0] sm:$0xff]
  %v139 = vld [vmem:[%s1 + $0x3d8] sm:$0xff]
  %v140 = vld [vmem:[%s1 + $0x3e0] sm:$0xff]
  %v141 = vld [vmem:[%s1 + $0x3e8] sm:$0xff]
  %v142 = vld [vmem:[%s1 + $0x3f0] sm:$0xff]
  %v143 = vld [vmem:[%s1 + $0x3f8] sm:$0xff]
  %v144 = vld [vmem:[%s2] sm:$0xff]
  %v146 = vlaneseq
  %v147 = vshrl.u32 %v146, 7
  %v148 = vsub.s32 0, %v147
  %v149 = vrot.slane %v144, %v148
  %v150 = vlaneseq
  %v151 = vshrl.u32 %v150, 7
  %v152 = vsub.s32 1, %v151
  %v153 = vrot.slane %v144, %v152
  %v154 = vlaneseq
  %v155 = vshrl.u32 %v154, 7
  %v156 = vsub.s32 2, %v155
  %v157 = vrot.slane %v144, %v156
  %v158 = vlaneseq
  %v159 = vshrl.u32 %v158, 7
  %v160 = vsub.s32 3, %v159
  %v161 = vrot.slane %v144, %v160
  %v162 = vlaneseq
  %v163 = vshrl.u32 %v162, 7
  %v164 = vsub.s32 4, %v163
  %v165 = vrot.slane %v144, %v164
  %v166 = vlaneseq
  %v167 = vshrl.u32 %v166, 7
  %v168 = vsub.s32 5, %v167
  %v169 = vrot.slane %v144, %v168
  %v170 = vlaneseq
  %v171 = vshrl.u32 %v170, 7
  %v172 = vsub.s32 6, %v171
  %v173 = vrot.slane %v144, %v172
  %v174 = vlaneseq
  %v175 = vshrl.u32 %v174, 7
  %v176 = vsub.s32 7, %v175
  %v177 = vrot.slane %v144, %v176
  %186 = vmatprep.subr.mxu0 %v137
  %187 = vmatpush1.msra.mxu0 %v136
  %188 = vmatprep.subr.mxu0 %v129
  %189 = vmatpush1.msra.mxu0 %v128
  %190 = vmatprep.subr.mxu0 %v121
  %191 = vmatpush1.msra.mxu0 %v120
  %192 = vmatprep.subr.mxu0 %v113
  %193 = vmatpush1.msra.mxu0 %v112
  %194 = vmatprep.subr.mxu0 %v105
  %195 = vmatpush1.msra.mxu0 %v104
  %196 = vmatprep.subr.mxu0 %v97
  %197 = vmatpush1.msra.mxu0 %v96
  %198 = vmatprep.subr.mxu0 %v89
  %199 = vmatpush1.msra.mxu0 %v88
  %200 = vmatprep.subr.mxu0 %v81
  %201 = vmatpush1.msra.mxu0 %v80
  %202 = vmatprep.subr.mxu0 %v73
  %203 = vmatpush1.msra.mxu0 %v72
  %204 = vmatprep.subr.mxu0 %v65
  %205 = vmatpush1.msra.mxu0 %v64
  %206 = vmatprep.subr.mxu0 %v57
  %207 = vmatpush1.msra.mxu0 %v56
  %208 = vmatprep.subr.mxu0 %v49
  %209 = vmatpush1.msra.mxu0 %v48
  %210 = vmatprep.subr.mxu0 %v41
  %211 = vmatpush1.msra.mxu0 %v40
  %212 = vmatprep.subr.mxu0 %v33
  %213 = vmatpush1.msra.mxu0 %v32
  %214 = vmatprep.subr.mxu0 %v25
  %215 = vmatpush1.msra.mxu0 %v24
  %216 = vmatprep.subr.mxu0 %v17
  %217 = vmatpush1.msra.mxu0 %v16
  %218 = vmatprep.subr.mxu0 0.0
  %219 = vmatpush2.msra.mxu0 0.0
  %220 = vmatprep.subr.mxu0 0.0
  %221 = vmatpush2.msra.mxu0 0.0
  %222 = vmatprep.subr.mxu0 0.0
  %223 = vmatpush2.msra.mxu0 0.0
  %224 = vmatprep.subr.mxu0 0.0
  %225 = vmatpush2.msra.mxu0 0.0
  %226 = vmatprep.subr.mxu0 0.0
  %227 = vmatpush2.msra.mxu0 0.0
  %228 = vmatprep.subr.mxu0 0.0
  %229 = vmatpush2.msra.mxu0 0.0
  %230 = vmatprep.subr.mxu0 0.0
  %231 = vmatpush2.msra.mxu0 0.0
  %232 = vmatprep.subr.mxu0 0.0
  %233 = vmatpush2.msra.mxu0 0.0
  %234 = vmatprep.subr.mxu0 0.0
  %235 = vmatpush2.msra.mxu0 0.0
  %236 = vmatprep.subr.mxu0 0.0
  %237 = vmatpush2.msra.mxu0 0.0
  %238 = vmatprep.subr.mxu0 0.0
  %239 = vmatpush2.msra.mxu0 0.0
  %240 = vmatprep.subr.mxu0 0.0
  %241 = vmatpush2.msra.mxu0 0.0
  %242 = vmatprep.subr.mxu0 0.0
  %243 = vmatpush2.msra.mxu0 0.0
  %244 = vmatprep.subr.mxu0 0.0
  %245 = vmatpush2.msra.mxu0 0.0
  %246 = vmatprep.subr.mxu0 0.0
  %247 = vmatpush2.msra.mxu0 0.0
  %248 = vmatprep.subr.mxu0 0.0
  %249 = vmatpush2.msra.mxu0 0.0
  %250 = vmatprep.mubr.f32.mxu0 0.0
  %251 = vmatmul.mubr.f32.gmra.mxu0 %v14
  %v252 = vpop.f32.mrf.mxu0
  %v253 = vadd.f32 %v149, %v252
  %v254 = vpop.f32.mrf.mxu0
  %v255 = vadd.f32 %v153, %v254
  %256 = vmatprep.mubr.f32.mxu0 0.0
  %257 = vmatmul.mubr.f32.gmra.mxu0 %v15
  %v258 = vpop.f32.mrf.mxu0
  %v259 = vadd.f32 %v149, %v258
  %v260 = vpop.f32.mrf.mxu0
  %v261 = vadd.f32 %v153, %v260
  %262 = vdwg.mxu0
  %263 = vmatprep.subr.mxu0 %v139
  %264 = vmatpush1.msra.mxu0 %v138
  %265 = vmatprep.subr.mxu0 %v131
  %266 = vmatpush1.msra.mxu0 %v130
  %267 = vmatprep.subr.mxu0 %v123
  %268 = vmatpush1.msra.mxu0 %v122
  %269 = vmatprep.subr.mxu0 %v115
  %270 = vmatpush1.msra.mxu0 %v114
  %271 = vmatprep.subr.mxu0 %v107
  %272 = vmatpush1.msra.mxu0 %v106
  %273 = vmatprep.subr.mxu0 %v99
  %274 = vmatpush1.msra.mxu0 %v98
  %275 = vmatprep.subr.mxu0 %v91
  %276 = vmatpush1.msra.mxu0 %v90
  %277 = vmatprep.subr.mxu0 %v83
  %278 = vmatpush1.msra.mxu0 %v82
  %279 = vmatprep.subr.mxu0 %v75
  %280 = vmatpush1.msra.mxu0 %v74
  %281 = vmatprep.subr.mxu0 %v67
  %282 = vmatpush1.msra.mxu0 %v66
  %283 = vmatprep.subr.mxu0 %v59
  %284 = vmatpush1.msra.mxu0 %v58
  %285 = vmatprep.subr.mxu0 %v51
  %286 = vmatpush1.msra.mxu0 %v50
  %287 = vmatprep.subr.mxu0 %v43
  %288 = vmatpush1.msra.mxu0 %v42
  %289 = vmatprep.subr.mxu0 %v35
  %290 = vmatpush1.msra.mxu0 %v34
  %291 = vmatprep.subr.mxu0 %v27
  %292 = vmatpush1.msra.mxu0 %v26
  %293 = vmatprep.subr.mxu0 %v19
  %294 = vmatpush1.msra.mxu0 %v18
  %295 = vmatprep.subr.mxu0 0.0
  %296 = vmatpush2.msra.mxu0 0.0
  %297 = vmatprep.subr.mxu0 0.0
  %298 = vmatpush2.msra.mxu0 0.0
  %299 = vmatprep.subr.mxu0 0.0
  %300 = vmatpush2.msra.mxu0 0.0
  %301 = vmatprep.subr.mxu0 0.0
  %302 = vmatpush2.msra.mxu0 0.0
  %303 = vmatprep.subr.mxu0 0.0
  %304 = vmatpush2.msra.mxu0 0.0
  %305 = vmatprep.subr.mxu0 0.0
  %306 = vmatpush2.msra.mxu0 0.0
  %307 = vmatprep.subr.mxu0 0.0
  %308 = vmatpush2.msra.mxu0 0.0
  %309 = vmatprep.subr.mxu0 0.0
  %310 = vmatpush2.msra.mxu0 0.0
  %311 = vmatprep.subr.mxu0 0.0
  %312 = vmatpush2.msra.mxu0 0.0
  %313 = vmatprep.subr.mxu0 0.0
  %314 = vmatpush2.msra.mxu0 0.0
  %315 = vmatprep.subr.mxu0 0.0
  %316 = vmatpush2.msra.mxu0 0.0
  %317 = vmatprep.subr.mxu0 0.0
  %318 = vmatpush2.msra.mxu0 0.0
  %319 = vmatprep.subr.mxu0 0.0
  %320 = vmatpush2.msra.mxu0 0.0
  %321 = vmatprep.subr.mxu0 0.0
  %322 = vmatpush2.msra.mxu0 0.0
  %323 = vmatprep.subr.mxu0 0.0
  %324 = vmatpush2.msra.mxu0 0.0
  %325 = vmatprep.subr.mxu0 0.0
  %326 = vmatpush2.msra.mxu0 0.0
  %327 = vmatprep.mubr.f32.mxu0 0.0
  %328 = vmatmul.mubr.f32.gmra.mxu0 %v14
  %v329 = vpop.f32.mrf.mxu0
  %v330 = vadd.f32 %v157, %v329
  %v331 = vpop.f32.mrf.mxu0
  %v332 = vadd.f32 %v161, %v331
  %333 = vmatprep.mubr.f32.mxu0 0.0
  %334 = vmatmul.mubr.f32.gmra.mxu0 %v15
  %v335 = vpop.f32.mrf.mxu0
  %v336 = vadd.f32 %v157, %v335
  %v337 = vpop.f32.mrf.mxu0
  %v338 = vadd.f32 %v161, %v337
  %339 = vdwg.mxu0
  %340 = vmatprep.subr.mxu0 %v141
  %341 = vmatpush1.msra.mxu0 %v140
  %342 = vmatprep.subr.mxu0 %v133
  %343 = vmatpush1.msra.mxu0 %v132
  %344 = vmatprep.subr.mxu0 %v125
  %345 = vmatpush1.msra.mxu0 %v124
  %346 = vmatprep.subr.mxu0 %v117
  %347 = vmatpush1.msra.mxu0 %v116
  %348 = vmatprep.subr.mxu0 %v109
  %349 = vmatpush1.msra.mxu0 %v108
  %350 = vmatprep.subr.mxu0 %v101
  %351 = vmatpush1.msra.mxu0 %v100
  %352 = vmatprep.subr.mxu0 %v93
  %353 = vmatpush1.msra.mxu0 %v92
  %354 = vmatprep.subr.mxu0 %v85
  %355 = vmatpush1.msra.mxu0 %v84
  %356 = vmatprep.subr.mxu0 %v77
  %357 = vmatpush1.msra.mxu0 %v76
  %358 = vmatprep.subr.mxu0 %v69
  %359 = vmatpush1.msra.mxu0 %v68
  %360 = vmatprep.subr.mxu0 %v61
  %361 = vmatpush1.msra.mxu0 %v60
  %362 = vmatprep.subr.mxu0 %v53
  %363 = vmatpush1.msra.mxu0 %v52
  %364 = vmatprep.subr.mxu0 %v45
  %365 = vmatpush1.msra.mxu0 %v44
  %366 = vmatprep.subr.mxu0 %v37
  %367 = vmatpush1.msra.mxu0 %v36
  %368 = vmatprep.subr.mxu0 %v29
  %369 = vmatpush1.msra.mxu0 %v28
  %370 = vmatprep.subr.mxu0 %v21
  %371 = vmatpush1.msra.mxu0 %v20
  %372 = vmatprep.subr.mxu0 0.0
  %373 = vmatpush2.msra.mxu0 0.0
  %374 = vmatprep.subr.mxu0 0.0
  %375 = vmatpush2.msra.mxu0 0.0
  %376 = vmatprep.subr.mxu0 0.0
  %377 = vmatpush2.msra.mxu0 0.0
  %378 = vmatprep.subr.mxu0 0.0
  %379 = vmatpush2.msra.mxu0 0.0
  %380 = vmatprep.subr.mxu0 0.0
  %381 = vmatpush2.msra.mxu0 0.0
  %382 = vmatprep.subr.mxu0 0.0
  %383 = vmatpush2.msra.mxu0 0.0
  %384 = vmatprep.subr.mxu0 0.0
  %385 = vmatpush2.msra.mxu0 0.0
  %386 = vmatprep.subr.mxu0 0.0
  %387 = vmatpush2.msra.mxu0 0.0
  %388 = vmatprep.subr.mxu0 0.0
  %389 = vmatpush2.msra.mxu0 0.0
  %390 = vmatprep.subr.mxu0 0.0
  %391 = vmatpush2.msra.mxu0 0.0
  %392 = vmatprep.subr.mxu0 0.0
  %393 = vmatpush2.msra.mxu0 0.0
  %394 = vmatprep.subr.mxu0 0.0
  %395 = vmatpush2.msra.mxu0 0.0
  %396 = vmatprep.subr.mxu0 0.0
  %397 = vmatpush2.msra.mxu0 0.0
  %398 = vmatprep.subr.mxu0 0.0
  %399 = vmatpush2.msra.mxu0 0.0
  %400 = vmatprep.subr.mxu0 0.0
  %401 = vmatpush2.msra.mxu0 0.0
  %402 = vmatprep.subr.mxu0 0.0
  %403 = vmatpush2.msra.mxu0 0.0
  %404 = vmatprep.mubr.f32.mxu0 0.0
  %405 = vmatmul.mubr.f32.gmra.mxu0 %v14
  %v406 = vpop.f32.mrf.mxu0
  %v407 = vadd.f32 %v165, %v406
  %v408 = vpop.f32.mrf.mxu0
  %v409 = vadd.f32 %v169, %v408
  %410 = vmatprep.mubr.f32.mxu0 0.0
  %411 = vmatmul.mubr.f32.gmra.mxu0 %v15
  %v412 = vpop.f32.mrf.mxu0
  %v413 = vadd.f32 %v165, %v412
  %v414 = vpop.f32.mrf.mxu0
  %v415 = vadd.f32 %v169, %v414
  %416 = vdwg.mxu0
  %417 = vmatprep.subr.mxu0 %v143
  %418 = vmatpush1.msra.mxu0 %v142
  %419 = vmatprep.subr.mxu0 %v135
  %420 = vmatpush1.msra.mxu0 %v134
  %421 = vmatprep.subr.mxu0 %v127
  %422 = vmatpush1.msra.mxu0 %v126
  %423 = vmatprep.subr.mxu0 %v119
  %424 = vmatpush1.msra.mxu0 %v118
  %425 = vmatprep.subr.mxu0 %v111
  %426 = vmatpush1.msra.mxu0 %v110
  %427 = vmatprep.subr.mxu0 %v103
  %428 = vmatpush1.msra.mxu0 %v102
  %429 = vmatprep.subr.mxu0 %v95
  %430 = vmatpush1.msra.mxu0 %v94
  %431 = vmatprep.subr.mxu0 %v87
  %432 = vmatpush1.msra.mxu0 %v86
  %433 = vmatprep.subr.mxu0 %v79
  %434 = vmatpush1.msra.mxu0 %v78
  %435 = vmatprep.subr.mxu0 %v71
  %436 = vmatpush1.msra.mxu0 %v70
  %437 = vmatprep.subr.mxu0 %v63
  %438 = vmatpush1.msra.mxu0 %v62
  %439 = vmatprep.subr.mxu0 %v55
  %440 = vmatpush1.msra.mxu0 %v54
  %441 = vmatprep.subr.mxu0 %v47
  %442 = vmatpush1.msra.mxu0 %v46
  %443 = vmatprep.subr.mxu0 %v39
  %444 = vmatpush1.msra.mxu0 %v38
  %445 = vmatprep.subr.mxu0 %v31
  %446 = vmatpush1.msra.mxu0 %v30
  %447 = vmatprep.subr.mxu0 %v23
  %448 = vmatpush1.msra.mxu0 %v22
  %449 = vmatprep.subr.mxu0 0.0
  %450 = vmatpush2.msra.mxu0 0.0
  %451 = vmatprep.subr.mxu0 0.0
  %452 = vmatpush2.msra.mxu0 0.0
  %453 = vmatprep.subr.mxu0 0.0
  %454 = vmatpush2.msra.mxu0 0.0
  %455 = vmatprep.subr.mxu0 0.0
  %456 = vmatpush2.msra.mxu0 0.0
  %457 = vmatprep.subr.mxu0 0.0
  %458 = vmatpush2.msra.mxu0 0.0
  %459 = vmatprep.subr.mxu0 0.0
  %460 = vmatpush2.msra.mxu0 0.0
  %461 = vmatprep.subr.mxu0 0.0
  %462 = vmatpush2.msra.mxu0 0.0
  %463 = vmatprep.subr.mxu0 0.0
  %464 = vmatpush2.msra.mxu0 0.0
  %465 = vmatprep.subr.mxu0 0.0
  %466 = vmatpush2.msra.mxu0 0.0
  %467 = vmatprep.subr.mxu0 0.0
  %468 = vmatpush2.msra.mxu0 0.0
  %469 = vmatprep.subr.mxu0 0.0
  %470 = vmatpush2.msra.mxu0 0.0
  %471 = vmatprep.subr.mxu0 0.0
  %472 = vmatpush2.msra.mxu0 0.0
  %473 = vmatprep.subr.mxu0 0.0
  %474 = vmatpush2.msra.mxu0 0.0
  %475 = vmatprep.subr.mxu0 0.0
  %476 = vmatpush2.msra.mxu0 0.0
  %477 = vmatprep.subr.mxu0 0.0
  %478 = vmatpush2.msra.mxu0 0.0
  %479 = vmatprep.subr.mxu0 0.0
  %480 = vmatpush2.msra.mxu0 0.0
  %481 = vmatprep.mubr.f32.mxu0 0.0
  %482 = vmatmul.mubr.f32.gmra.mxu0 %v14
  %v483 = vpop.f32.mrf.mxu0
  %v484 = vadd.f32 %v173, %v483
  %v485 = vpop.f32.mrf.mxu0
  %v486 = vadd.f32 %v177, %v485
  %487 = vmatprep.mubr.f32.mxu0 0.0
  %488 = vmatmul.mubr.f32.gmra.mxu0 %v15
  %v489 = vpop.f32.mrf.mxu0
  %v490 = vadd.f32 %v173, %v489
  %v491 = vpop.f32.mrf.mxu0
  %v492 = vadd.f32 %v177, %v491
  %493 = vdwg.mxu0
  %494 = vst [vmem:[%s3] sm:$0xff] %v253
  %495 = vst [vmem:[%s3 + $0x8] sm:$0xff] %v255
  %496 = vst [vmem:[%s3 + $0x10] sm:$0xff] %v330
  %497 = vst [vmem:[%s3 + $0x18] sm:$0xff] %v332
  %498 = vst [vmem:[%s3 + $0x20] sm:$0xff] %v407
  %499 = vst [vmem:[%s3 + $0x28] sm:$0xff] %v409
  %500 = vst [vmem:[%s3 + $0x30] sm:$0xff] %v484
  %501 = vst [vmem:[%s3 + $0x38] sm:$0xff] %v486
  %502 = vst [vmem:[%s3 + $0x40] sm:$0xff] %v259
  %503 = vst [vmem:[%s3 + $0x48] sm:$0xff] %v261
  %504 = vst [vmem:[%s3 + $0x50] sm:$0xff] %v336
  %505 = vst [vmem:[%s3 + $0x58] sm:$0xff] %v338
  %506 = vst [vmem:[%s3 + $0x60] sm:$0xff] %v413
  %507 = vst [vmem:[%s3 + $0x68] sm:$0xff] %v415
  %508 = vst [vmem:[%s3 + $0x70] sm:$0xff] %v490
  %509 = vst [vmem:[%s3 + $0x78] sm:$0xff] %v492
  // Predicated region
  $region14: #{bilstm_forward.2} parent=0 // pred_check
    _
  $region15: #{bilstm_forward.2} parent=0 // pred_check_branch
    %511 = sbr.rel (0) target = $region17
  $region16: #{bilstm_forward.2} parent=0 // pred_region
    _
  $region17: #{bilstm_forward.2} parent=0 // pred_fallthru
    _
  // Predicated region
  $region18: #{bilstm_forward.2} parent=0 // pred_check
    _
  $region19: #{bilstm_forward.2} parent=0 // pred_check_branch
    %513 = sbr.rel (0) target = $region21
  $region20: #{bilstm_forward.2} parent=0 // pred_region
    _
  $region21: #{bilstm_forward.2} parent=0 // pred_fallthru
    _

// kernel: bilstm_forward.3
$region0: #{bilstm_forward.3}
  #allocation0 [shape = 'u32[]', space=smem, size = 0x4, offset = 0x4, fixed_abs, tag = 'smem constant byte address 0x4 - core index']
  #allocation1 [shape = 'u32[144,128]{1,0:T(1,128)}', space=vmem, size = 0x12000, scoped, tag = 'internal scratch']
  #allocation2 [shape = 'f32[2,128]{1,0:T(2,128)}', space=vmem, size = 0x400, scoped, tag = 'scratch operand']
  #allocation3 [shape = 'f32[2,128]{1,0:T(2,128)}', space=vmem, size = 0x400, scoped, tag = 'scratch operand']
  #allocation4 [shape = 'f32[2,128]{1,0:T(2,128)}', space=vmem, size = 0x400, scoped, tag = 'scratch operand']
  #allocation5 [shape = 'f32[2,128]{1,0:T(2,128)}', space=vmem, size = 0x400, scoped, tag = 'scratch operand']
  %s0 = inlined_call_operand.vmem [shape: f32[8,2,1024], index: 0, kind: input, shape index: {}, may-alias: {0,1}]
  %s1 = inlined_call_operand.vmem [shape: f32[8,2,1024], index: 1, kind: input, shape index: {}, may-alias: {0,1}]
  %s2 = inlined_call_operand.vmem [shape: f32[8,2,1], index: 2, kind: input, shape index: {}, may-alias: {2,3}]
  %s3 = inlined_call_operand.vmem [shape: f32[8,2,1], index: 3, kind: input, shape index: {}, may-alias: {2,3}]
  %s4 = inlined_call_operand.vmem [shape: f32[128,512], index: 4, kind: input, shape index: {}]
  %s5 = inlined_call_operand.vmem [shape: f32[128,512], index: 5, kind: input, shape index: {}]
  %s6 = inlined_call_operand.vmem [shape: f32[8,2,128], index: 6, kind: output, shape index: {0}]
  %s7 = inlined_call_operand.vmem [shape: f32[8,2,128], index: 7, kind: output, shape index: {1}]
  %8 = xla_tuple %s6, %s7
  %s9 = sld [smem:[#allocation0]]
  $region145: #{bilstm_forward.3} parent=0
    _
  %s11 = ssub.s32 1, %s9
  %s12 = scalar_select 0, %s11, %s9
  $region1: #{bilstm_forward.3} parent=0
    #allocation6 [shape = 'u8[32768]{0}', space=vmem, size = 0x8000, scoped, tag = 'input window, operand 0']
    #allocation7 [shape = 'u8[32768]{0}', space=vmem, size = 0x8000, scoped, tag = 'input window, operand 1']
    loop: start=0, step=1, limit=4
    $region2: #{bilstm_forward.3} parent=1 // loop_pre_header
      _
    $region3: #{bilstm_forward.3} parent=1 // loop_header
      %s14 = sphi 0, %s18
      %p15 = scmp.ge.s32.totalorder %s14, 4
      %s24 = sphi 0, %s26
      %s27 = sphi 0, %s24
      %s28 = sphi 0, %s27
      %s44 = sphi 0, %s28
      %s52 = sphi 0, %s54
      %s55 = sphi 0, %s52
      %s56 = sphi 0, %s55
      %s72 = sphi 0, %s56
      %s78 = sphi 0, %s80
      %s81 = sphi 0, %s78
      %s82 = sphi 0, %s81
      %s98 = sphi 0, %s82
      %s106 = sphi 0, %s108
      %s109 = sphi 0, %s106
      %s110 = sphi 0, %s109
      %s126 = sphi 0, %s110
      %s130 = sphi 0, %s130
      %s132 = sphi 0, %s130
      %s133 = sphi 0, %s132
      %s147 = sphi 0, %s133
      %s151 = sphi 0, %s151
      %s153 = sphi 0, %s151
      %s154 = sphi 0, %s153
      %s168 = sphi 0, %s154
      %s174 = sphi 0, %s176
      %s177 = sphi 0, %s174
      %s178 = sphi 0, %s177
      %s194 = sphi 0, %s178
      %s202 = sphi 0, %s204
      %s205 = sphi 0, %s202
      %s206 = sphi 0, %s205
      %s222 = sphi 0, %s206
    $region4: #{bilstm_forward.3} parent=1 // loop_header_branch
      %17 = sbr.rel (%p15) target = $region8
    $region5: #{bilstm_forward.3} parent=1 // loop_body
      %s19 = ssub.s32 %s14, 1
      %s20 = ssub.s32 %s14, 2
      %s21 = sadd.s32 %s14, 1
      %s22 = ssub.s32 %s14, %s21
      %p23 = scmp.eq.s32.totalorder %s22, 0
      %s25 = sadd.s32 %s24, 1
      %s26 = scalar_select %p23, %s24, %s25
      %p29 = pneg %p23
      %p30 = scmp.eq.s32.totalorder %s14, 1
      %p31 = por %p29, %p30
      %p32 = scmp.ne.s32.totalorder %s24, %s27
      %p33 = scmp.eq.s32.totalorder %s14, 0
      %p34 = por %p32, %p33
      %p35 = scmp.ne.s32.totalorder %s24, %s27
      %p36 = scmp.eq.s32.totalorder %s19, 1
      %p37 = por %p35, %p36
      %p38 = scmp.ne.s32.totalorder %s27, %s28
      %p39 = scmp.eq.s32.totalorder %s19, 0
      %p40 = por %p38, %p39
      %p41 = scmp.ne.s32.totalorder %s27, %s28
      %p42 = scmp.eq.s32.totalorder %s20, 1
      %p43 = por %p41, %p42
      %p45 = scmp.ne.s32.totalorder %s28, %s44
      %p46 = scmp.eq.s32.totalorder %s20, 0
      %p47 = por %p45, %p46
      %s48 = ssub.s32 1, %s14
      %s49 = ssub.s32 1, %s21
      %s50 = ssub.s32 %s48, %s49
      %p51 = scmp.eq.s32.totalorder %s50, 0
      %s53 = sadd.s32 %s52, 1
      %s54 = scalar_select %p51, %s52, %s53
      %p57 = pneg %p51
      %p58 = scmp.eq.s32.totalorder %s14, 1
      %p59 = por %p57, %p58
      %p60 = scmp.ne.s32.totalorder %s52, %s55
      %p61 = scmp.eq.s32.totalorder %s14, 0
      %p62 = por %p60, %p61
      %p63 = scmp.ne.s32.totalorder %s52, %s55
      %p64 = scmp.eq.s32.totalorder %s19, 1
      %p65 = por %p63, %p64
      %p66 = scmp.ne.s32.totalorder %s55, %s56
      %p67 = scmp.eq.s32.totalorder %s19, 0
      %p68 = por %p66, %p67
      %p69 = scmp.ne.s32.totalorder %s55, %s56
      %p70 = scmp.eq.s32.totalorder %s20, 1
      %p71 = por %p69, %p70
      %p73 = scmp.ne.s32.totalorder %s56, %s72
      %p74 = scmp.eq.s32.totalorder %s20, 0
      %p75 = por %p73, %p74
      %s76 = ssub.s32 %s14, %s21
      %p77 = scmp.eq.s32.totalorder %s76, 0
      %s79 = sadd.s32 %s78, 1
      %s80 = scalar_select %p77, %s78, %s79
      %p83 = pneg %p77
      %p84 = scmp.eq.s32.totalorder %s14, 1
      %p85 = por %p83, %p84
      %p86 = scmp.ne.s32.totalorder %s78, %s81
      %p87 = scmp.eq.s32.totalorder %s14, 0
      %p88 = por %p86, %p87
      %p89 = scmp.ne.s32.totalorder %s78, %s81
      %p90 = scmp.eq.s32.totalorder %s19, 1
      %p91 = por %p89, %p90
      %p92 = scmp.ne.s32.totalorder %s81, %s82
      %p93 = scmp.eq.s32.totalorder %s19, 0
      %p94 = por %p92, %p93
      %p95 = scmp.ne.s32.totalorder %s81, %s82
      %p96 = scmp.eq.s32.totalorder %s20, 1
      %p97 = por %p95, %p96
      %p99 = scmp.ne.s32.totalorder %s82, %s98
      %p100 = scmp.eq.s32.totalorder %s20, 0
      %p101 = por %p99, %p100
      %s102 = ssub.s32 1, %s14
      %s103 = ssub.s32 1, %s21
      %s104 = ssub.s32 %s102, %s103
      %p105 = scmp.eq.s32.totalorder %s104, 0
      %s107 = sadd.s32 %s106, 1
      %s108 = scalar_select %p105, %s106, %s107
      %p111 = pneg %p105
      %p112 = scmp.eq.s32.totalorder %s14, 1
      %p113 = por %p111, %p112
      %p114 = scmp.ne.s32.totalorder %s106, %s109
      %p115 = scmp.eq.s32.totalorder %s14, 0
      %p116 = por %p114, %p115
      %p117 = scmp.ne.s32.totalorder %s106, %s109
      %p118 = scmp.eq.s32.totalorder %s19, 1
      %p119 = por %p117, %p118
      %p120 = scmp.ne.s32.totalorder %s109, %s110
      %p121 = scmp.eq.s32.totalorder %s19, 0
      %p122 = por %p120, %p121
      %p123 = scmp.ne.s32.totalorder %s109, %s110
      %p124 = scmp.eq.s32.totalorder %s20, 1
      %p125 = por %p123, %p124
      %p127 = scmp.ne.s32.totalorder %s110, %s126
      %p128 = scmp.eq.s32.totalorder %s20, 0
      %p129 = por %p127, %p128
      %s131 = sadd.s32 %s130, 1
      %p134 = scmp.eq.s32.totalorder %s14, 1
      %p135 = scmp.ne.s32.totalorder %s130, %s132
      %p136 = scmp.eq.s32.totalorder %s14, 0
      %p137 = por %p135, %p136
      %p138 = scmp.ne.s32.totalorder %s130, %s132
      %p139 = scmp.eq.s32.totalorder %s19, 1
      %p140 = por %p138, %p139
      %p141 = scmp.ne.s32.totalorder %s132, %s133
      %p142 = scmp.eq.s32.totalorder %s19, 0
      %p143 = por %p141, %p142
      %p144 = scmp.ne.s32.totalorder %s132, %s133
      %p145 = scmp.eq.s32.totalorder %s20, 1
      %p146 = por %p144, %p145
      %p148 = scmp.ne.s32.totalorder %s133, %s147
      %p149 = scmp.eq.s32.totalorder %s20, 0
      %p150 = por %p148, %p149
      %s152 = sadd.s32 %s151, 1
      %p155 = scmp.eq.s32.totalorder %s14, 1
      %p156 = scmp.ne.s32.totalorder %s151, %s153
      %p157 = scmp.eq.s32.totalorder %s14, 0
      %p158 = por %p156, %p157
      %p159 = scmp.ne.s32.totalorder %s151, %s153
      %p160 = scmp.eq.s32.totalorder %s19, 1
      %p161 = por %p159, %p160
      %p162 = scmp.ne.s32.totalorder %s153, %s154
      %p163 = scmp.eq.s32.totalorder %s19, 0
      %p164 = por %p162, %p163
      %p165 = scmp.ne.s32.totalorder %s153, %s154
      %p166 = scmp.eq.s32.totalorder %s20, 1
      %p167 = por %p165, %p166
      %p169 = scmp.ne.s32.totalorder %s154, %s168
      %p170 = scmp.eq.s32.totalorder %s20, 0
      %p171 = por %p169, %p170
      %s172 = ssub.s32 %s14, %s21
      %p173 = scmp.eq.s32.totalorder %s172, 0
      %s175 = sadd.s32 %s174, 1
      %s176 = scalar_select %p173, %s174, %s175
      %p179 = pneg %p173
      %p180 = scmp.eq.s32.totalorder %s14, 1
      %p181 = por %p179, %p180
      %p182 = scmp.ne.s32.totalorder %s174, %s177
      %p183 = scmp.eq.s32.totalorder %s14, 0
      %p184 = por %p182, %p183
      %p185 = scmp.ne.s32.totalorder %s174, %s177
      %p186 = scmp.eq.s32.totalorder %s19, 1
      %p187 = por %p185, %p186
      %p188 = scmp.ne.s32.totalorder %s177, %s178
      %p189 = scmp.eq.s32.totalorder %s19, 0
      %p190 = por %p188, %p189
      %p191 = scmp.ne.s32.totalorder %s177, %s178
      %p192 = scmp.eq.s32.totalorder %s20, 1
      %p193 = por %p191, %p192
      %p195 = scmp.ne.s32.totalorder %s178, %s194
      %p196 = scmp.eq.s32.totalorder %s20, 0
      %p197 = por %p195, %p196
      %s198 = ssub.s32 1, %s14
      %s199 = ssub.s32 1, %s21
      %s200 = ssub.s32 %s198, %s199
      %p201 = scmp.eq.s32.totalorder %s200, 0
      %s203 = sadd.s32 %s202, 1
      %s204 = scalar_select %p201, %s202, %s203
      %p207 = pneg %p201
      %p208 = scmp.eq.s32.totalorder %s14, 1
      %p209 = por %p207, %p208
      %p210 = scmp.ne.s32.totalorder %s202, %s205
      %p211 = scmp.eq.s32.totalorder %s14, 0
      %p212 = por %p210, %p211
      %p213 = scmp.ne.s32.totalorder %s202, %s205
      %p214 = scmp.eq.s32.totalorder %s19, 1
      %p215 = por %p213, %p214
      %p216 = scmp.ne.s32.totalorder %s205, %s206
      %p217 = scmp.eq.s32.totalorder %s19, 0
      %p218 = por %p216, %p217
      %p219 = scmp.ne.s32.totalorder %s205, %s206
      %p220 = scmp.eq.s32.totalorder %s20, 1
      %p221 = por %p219, %p220
      %p223 = scmp.ne.s32.totalorder %s206, %s222
      %p224 = scmp.eq.s32.totalorder %s20, 0
      %p225 = por %p223, %p224
      %p226 = scmp.le.s32.totalorder 1, %s14
      %p227 = scmp.lt.s32.totalorder %s14, 3
      %p228 = pnand %p226, %p227
      %p229 = pneg %p228
      // Predicated region
      $region9: #{bilstm_forward.3} parent=5 // pred_check
        _
      $region10: #{bilstm_forward.3} parent=5 // pred_check_branch
        %231 = sbr.rel (%p228) target = $region12
      $region11: #{bilstm_forward.3} parent=5 // pred_region
        %s232 = ssub.s32 %s14, 1
        // Predicated region
        $region13: #{bilstm_forward.3} parent=11 // pred_check
          %p233 = pneg %p143
        $region14: #{bilstm_forward.3} parent=11 // pred_check_branch
          %235 = sbr.rel (%p233) target = $region16
        $region15: #{bilstm_forward.3} parent=11 // pred_region
          _
        $region16: #{bilstm_forward.3} parent=11 // pred_fallthru
          _
        // Predicated region
        $region17: #{bilstm_forward.3} parent=11 // pred_check
          %p236 = pneg %p164
        $region18: #{bilstm_forward.3} parent=11 // pred_check_branch
          %238 = sbr.rel (%p236) target = $region20
        $region19: #{bilstm_forward.3} parent=11 // pred_region
          _
        $region20: #{bilstm_forward.3} parent=11 // pred_fallthru
          _
      $region12: #{bilstm_forward.3} parent=5 // pred_fallthru
        _
      %p239 = scmp.lt.s32.totalorder %s14, 2
      // Predicated region
      $region21: #{bilstm_forward.3} parent=5 // pred_check
        %p240 = pneg %p239
      $region22: #{bilstm_forward.3} parent=5 // pred_check_branch
        %242 = sbr.rel (%p240) target = $region24
      $region23: #{bilstm_forward.3} parent=5 // pred_region
        // Predicated region
        $region25: #{bilstm_forward.3} parent=23 // pred_check
          %p243 = pneg %p34
        $region26: #{bilstm_forward.3} parent=23 // pred_check_branch
          %245 = sbr.rel (%p243) target = $region28
        $region27: #{bilstm_forward.3} parent=23 // pred_region
          %s246 = sand.u32 %s24, 1
          %s247 = sand.u32 %s24, 1
          %s248 = smul.addr %s247, 32
          %s249 = scalar_lea.vmem [#allocation6], %s248
          %s250 = smul.u32 4, %s14
          %s251 = smul.addr %s250, 8
          %s252 = smul.addr %s251, 2
          %s253 = scalar_lea.vmem %s0, %s252
          // Predicated region
          $region29: #{bilstm_forward.3} parent=27 // pred_check
            _
          $region30: #{bilstm_forward.3} parent=27 // pred_check_branch
            %255 = sbr.rel (0) target = $region32
          $region31: #{bilstm_forward.3} parent=27 // pred_region
            // Predicated region
            $region33: #{bilstm_forward.3} parent=31 // pred_check
              _
            $region34: #{bilstm_forward.3} parent=31 // pred_check_branch
              %257 = sbr.rel (0) target = $region36
            $region35: #{bilstm_forward.3} parent=31 // pred_region
              // Predicated region
              $region48: #{bilstm_forward.3} parent=35 // pred_check
                _
              $region49: #{bilstm_forward.3} parent=35 // pred_check_branch
                %279 = sbr.rel (0) target = $region51
              $region50: #{bilstm_forward.3} parent=35 // pred_region
                loop: start=0, step=1, limit=1
                $region52: #{bilstm_forward.3} parent=50 // loop_pre_header
                  _
                $region53: #{bilstm_forward.3} parent=50 // loop_header
                  %s281 = sphi 0, %s285
                  %p282 = scmp.ge.s32.totalorder %s281, 1
                  %s286 = sphi %s253, %s253
                  %s287 = sphi %s249, %s249
                $region54: #{bilstm_forward.3} parent=50 // loop_header_branch
                  %284 = sbr.rel (%p282) target = $region58
                $region55: #{bilstm_forward.3} parent=50 // loop_body
                  %v288 = vld [vmem:[%s286] sm:$0xff]
                  %289 = vst [vmem:[%s287] sm:$0xff] %v288
                  %v290 = vld [vmem:[%s286 + $0x10] sm:$0xff]
                  %291 = vst [vmem:[%s287 + $0x8] sm:$0xff] %v290
                  %v292 = vld [vmem:[%s286 + $0x20] sm:$0xff]
                  %293 = vst [vmem:[%s287 + $0x10] sm:$0xff] %v292
                  %v294 = vld [vmem:[%s286 + $0x30] sm:$0xff]
                  %295 = vst [vmem:[%s287 + $0x18] sm:$0xff] %v294
                $region56: #{bilstm_forward.3} parent=50 // loop_footer
                  %s285 = sadd.s32 1, %s281
                $region57: #{bilstm_forward.3} parent=50 // loop_footer_branch
                  %280 = sbr.rel target = $region53
                $region58: #{bilstm_forward.3} parent=50 // loop_exit
                  _
              $region51: #{bilstm_forward.3} parent=35 // pred_fallthru
                _
              // Predicated region
              $region59: #{bilstm_forward.3} parent=35 // pred_check
                _
              $region60: #{bilstm_forward.3} parent=35 // pred_check_branch
                %297 = sbr.rel target = $region62
              $region61: #{bilstm_forward.3} parent=35 // pred_region
                _
              $region62: #{bilstm_forward.3} parent=35 // pred_fallthru
                _
            $region36: #{bilstm_forward.3} parent=31 // pred_fallthru
              _
            // Predicated region
            $region37: #{bilstm_forward.3} parent=31 // pred_check
              _
            $region38: #{bilstm_forward.3} parent=31 // pred_check_branch
              %259 = sbr.rel target = $region40
            $region39: #{bilstm_forward.3} parent=31 // pred_region
              %s261 = ssub.s32 256, 1
              loop: start=0, step=1, limit=1
              $region41: #{bilstm_forward.3} parent=39 // loop_pre_header
                _
              $region42: #{bilstm_forward.3} parent=39 // loop_header
                %s263 = sphi 0, %s267
                %p264 = scmp.ge.s32.totalorder %s263, 1
                %s268 = sphi %s253, %s253
                %s269 = sphi %s249, %s249
              $region43: #{bilstm_forward.3} parent=39 // loop_header_branch
                %266 = sbr.rel (%p264) target = $region47
              $region44: #{bilstm_forward.3} parent=39 // loop_body
                %v270 = vld [vmem:[%s268] sm:%s261]
                %271 = vst [vmem:[%s269] sm:%s261] %v270
                %v272 = vld [vmem:[%s268 + $0x10] sm:%s261]
                %273 = vst [vmem:[%s269 + $0x8] sm:%s261] %v272
                %v274 = vld [vmem:[%s268 + $0x20] sm:%s261]
                %275 = vst [vmem:[%s269 + $0x10] sm:%s261] %v274
                %v276 = vld [vmem:[%s268 + $0x30] sm:%s261]
                %277 = vst [vmem:[%s269 + $0x18] sm:%s261] %v276
              $region45: #{bilstm_forward.3} parent=39 // loop_footer
                %s267 = sadd.s32 1, %s263
              $region46: #{bilstm_forward.3} parent=39 // loop_footer_branch
                %262 = sbr.rel target = $region42
              $region47: #{bilstm_forward.3} parent=39 // loop_exit
                _
            $region40: #{bilstm_forward.3} parent=31 // pred_fallthru
              _
          $region32: #{bilstm_forward.3} parent=27 // pred_fallthru
            _
          %298 = vnop
        $region28: #{bilstm_forward.3} parent=23 // pred_fallthru
          _
        // Predicated region
        $region63: #{bilstm_forward.3} parent=23 // pred_check
          %p299 = pneg %p62
        $region64: #{bilstm_forward.3} parent=23 // pred_check_branch
          %301 = sbr.rel (%p299) target = $region66
        $region65: #{bilstm_forward.3} parent=23 // pred_region
          %s302 = sand.u32 %s52, 1
          %s303 = sand.u32 %s52, 1
          %s304 = smul.addr %s303, 32
          %s305 = scalar_lea.vmem [#allocation7], %s304
          %s306 = ssub.s32 1, %s14
          %s307 = smul.u32 4, %s306
          %s308 = smul.addr %s307, 8
          %s309 = sadd.s32 4, %s308
          %s310 = smul.addr %s309, 2
          %s311 = scalar_lea.vmem %s1, %s310
          // Predicated region
          $region67: #{bilstm_forward.3} parent=65 // pred_check
            _
          $region68: #{bilstm_forward.3} parent=65 // pred_check_branch
            %313 = sbr.rel (0) target = $region70
          $region69: #{bilstm_forward.3} parent=65 // pred_region
            // Predicated region
            $region71: #{bilstm_forward.3} parent=69 // pred_check
              _
            $region72: #{bilstm_forward.3} parent=69 // pred_check_branch
              %315 = sbr.rel (0) target = $region74
            $region73: #{bilstm_forward.3} parent=69 // pred_region
              // Predicated region
              $region86: #{bilstm_forward.3} parent=73 // pred_check
                _
              $region87: #{bilstm_forward.3} parent=73 // pred_check_branch
                %337 = sbr.rel (0) target = $region89
              $region88: #{bilstm_forward.3} parent=73 // pred_region
                loop: start=0, step=1, limit=1
                $region90: #{bilstm_forward.3} parent=88 // loop_pre_header
                  _
                $region91: #{bilstm_forward.3} parent=88 // loop_header
                  %s339 = sphi 0, %s343
                  %p340 = scmp.ge.s32.totalorder %s339, 1
                  %s344 = sphi %s311, %s311
                  %s345 = sphi %s305, %s305
                $region92: #{bilstm_forward.3} parent=88 // loop_header_branch
                  %342 = sbr.rel (%p340) target = $region96
                $region93: #{bilstm_forward.3} parent=88 // loop_body
                  %v346 = vld [vmem:[%s344] sm:$0xff]
                  %347 = vst [vmem:[%s345] sm:$0xff] %v346
                  %v348 = vld [vmem:[%s344 + $0x10] sm:$0xff]
                  %349 = vst [vmem:[%s345 + $0x8] sm:$0xff] %v348
                  %v350 = vld [vmem:[%s344 + $0x20] sm:$0xff]
                  %351 = vst [vmem:[%s345 + $0x10] sm:$0xff] %v350
                  %v352 = vld [vmem:[%s344 + $0x30] sm:$0xff]
                  %353 = vst [vmem:[%s345 + $0x18] sm:$0xff] %v352
                $region94: #{bilstm_forward.3} parent=88 // loop_footer
                  %s343 = sadd.s32 1, %s339
                $region95: #{bilstm_forward.3} parent=88 // loop_footer_branch
                  %338 = sbr.rel target = $region91
                $region96: #{bilstm_forward.3} parent=88 // loop_exit
                  _
              $region89: #{bilstm_forward.3} parent=73 // pred_fallthru
                _
              // Predicated region
              $region97: #{bilstm_forward.3} parent=73 // pred_check
                _
              $region98: #{bilstm_forward.3} parent=73 // pred_check_branch
                %355 = sbr.rel target = $region100
              $region99: #{bilstm_forward.3} parent=73 // pred_region
                _
              $region100: #{bilstm_forward.3} parent=73 // pred_fallthru
                _
            $region74: #{bilstm_forward.3} parent=69 // pred_fallthru
              _
            // Predicated region
            $region75: #{bilstm_forward.3} parent=69 // pred_check
              _
            $region76: #{bilstm_forward.3} parent=69 // pred_check_branch
              %317 = sbr.rel target = $region78
            $region77: #{bilstm_forward.3} parent=69 // pred_region
              %s319 = ssub.s32 256, 1
              loop: start=0, step=1, limit=1
              $region79: #{bilstm_forward.3} parent=77 // loop_pre_header
                _
              $region80: #{bilstm_forward.3} parent=77 // loop_header
                %s321 = sphi 0, %s325
                %p322 = scmp.ge.s32.totalorder %s321, 1
                %s326 = sphi %s311, %s311
                %s327 = sphi %s305, %s305
              $region81: #{bilstm_forward.3} parent=77 // loop_header_branch
                %324 = sbr.rel (%p322) target = $region85
              $region82: #{bilstm_forward.3} parent=77 // loop_body
                %v328 = vld [vmem:[%s326] sm:%s319]
                %329 = vst [vmem:[%s327] sm:%s319] %v328
                %v330 = vld [vmem:[%s326 + $0x10] sm:%s319]
                %331 = vst [vmem:[%s327 + $0x8] sm:%s319] %v330
                %v332 = vld [vmem:[%s326 + $0x20] sm:%s319]
                %333 = vst [vmem:[%s327 + $0x10] sm:%s319] %v332
                %v334 = vld [vmem:[%s326 + $0x30] sm:%s319]
                %335 = vst [vmem:[%s327 + $0x18] sm:%s319] %v334
              $region83: #{bilstm_forward.3} parent=77 // loop_footer
                %s325 = sadd.s32 1, %s321
              $region84: #{bilstm_forward.3} parent=77 // loop_footer_branch
                %320 = sbr.rel target = $region80
              $region85: #{bilstm_forward.3} parent=77 // loop_exit
                _
            $region78: #{bilstm_forward.3} parent=69 // pred_fallthru
              _
          $region70: #{bilstm_forward.3} parent=65 // pred_fallthru
            _
          %356 = vnop
        $region66: #{bilstm_forward.3} parent=23 // pred_fallthru
          _
        // Predicated region
        $region101: #{bilstm_forward.3} parent=23 // pred_check
          %p357 = pneg %p88
        $region102: #{bilstm_forward.3} parent=23 // pred_check_branch
          %359 = sbr.rel (%p357) target = $region104
        $region103: #{bilstm_forward.3} parent=23 // pred_region
          %s360 = smul.u32 4, %s14
          %p361 = scmp.lt.s32.totalorder %s360, 7
          %s362 = scalar_select %p361, %s360, 7
          %s363 = smul.addr %s362, 2
          %s364 = scalar_lea.vmem %s2, %s363
          %s365 = smul.u32 4, %s14
        $region104: #{bilstm_forward.3} parent=23 // pred_fallthru
          _
        // Predicated region
        $region105: #{bilstm_forward.3} parent=23 // pred_check
          %p366 = pneg %p116
        $region106: #{bilstm_forward.3} parent=23 // pred_check_branch
          %368 = sbr.rel (%p366) target = $region108
        $region107: #{bilstm_forward.3} parent=23 // pred_region
          %s369 = ssub.s32 1, %s14
          %s370 = smul.u32 4, %s369
          %p371 = scmp.lt.s32.totalorder %s370, 7
          %s372 = scalar_select %p371, %s370, 7
          %s373 = smul.addr %s372, 2
          %s374 = scalar_lea.vmem %s3, %s373
          %s375 = ssub.s32 1, %s14
          %s376 = smul.u32 4, %s375
        $region108: #{bilstm_forward.3} parent=23 // pred_fallthru
          _
      $region24: #{bilstm_forward.3} parent=5 // pred_fallthru
        _
      %p377 = scmp.le.s32.totalorder 1, %s14
      %p378 = scmp.lt.s32.totalorder %s14, 3
      %p379 = pnand %p377, %p378
      %p380 = pneg %p379
      // Predicated region
      $region109: #{bilstm_forward.3} parent=5 // pred_check
        _
      $region110: #{bilstm_forward.3} parent=5 // pred_check_branch
        %382 = sbr.rel (%p379) target = $region112
      $region111: #{bilstm_forward.3} parent=5 // pred_region
        %s383 = ssub.s32 %s14, 1
        %s384 = sand.u32 %s27, 1
        %s385 = sand.u32 %s27, 1
        %s386 = smul.addr %s385, 32
        %s387 = scalar_lea.vmem [#allocation6], %s386
        // Predicated region
        $region113: #{bilstm_forward.3} parent=111 // pred_check
          %p388 = pneg %p40
        $region114: #{bilstm_forward.3} parent=111 // pred_check_branch
          %390 = sbr.rel (%p388) target = $region116
        $region115: #{bilstm_forward.3} parent=111 // pred_region
          _
        $region116: #{bilstm_forward.3} parent=111 // pred_fallthru
          _
        %s391 = sand.u32 %s55, 1
        %s392 = sand.u32 %s55, 1
        %s393 = smul.addr %s392, 32
        %s394 = scalar_lea.vmem [#allocation7], %s393
        // Predicated region
        $region117: #{bilstm_forward.3} parent=111 // pred_check
          %p395 = pneg %p68
        $region118: #{bilstm_forward.3} parent=111 // pred_check_branch
          %397 = sbr.rel (%p395) target = $region120
        $region119: #{bilstm_forward.3} parent=111 // pred_region
          _
        $region120: #{bilstm_forward.3} parent=111 // pred_fallthru
          _
        %s398 = sand.u32 %s27, 1
        %s399 = sand.u32 %s27, 1
        %s400 = smul.addr %s399, 32
        %s401 = scalar_lea.vmem [#allocation6], %s400
        %p402 = pneg %p40
        %p403 = pneg %p37
        %s404 = sand.u32 %s55, 1
        %s405 = sand.u32 %s55, 1
        %s406 = smul.addr %s405, 32
        %s407 = scalar_lea.vmem [#allocation7], %s406
        %p408 = pneg %p68
        %p409 = pneg %p65
        %s410 = smul.u32 4, %s19
        %p411 = scmp.lt.s32.totalorder %s410, 7
        %s412 = scalar_select %p411, %s410, 7
        %s413 = smul.addr %s412, 2
        %s414 = scalar_lea.vmem %s2, %s413
        %p415 = pneg %p94
        %p416 = pneg %p91
        %s417 = ssub.s32 1, %s19
        %s418 = smul.u32 4, %s417
        %p419 = scmp.lt.s32.totalorder %s418, 7
        %s420 = scalar_select %p419, %s418, 7
        %s421 = smul.addr %s420, 2
        %s422 = scalar_lea.vmem %s3, %s421
        %p423 = pneg %p122
        %p424 = pneg %p119
        %p425 = pneg %p143
        %p426 = pneg %p140
        %p427 = pneg %p164
        %p428 = pneg %p161
        %p429 = pneg %p190
        %p430 = pneg %p187
        %s431 = smul.u32 4, %s19
        %p432 = scmp.lt.s32.totalorder %s431, 7
        %s433 = scalar_select %p432, %s431, 7
        %s434 = smul.addr %s433, 2
        %s435 = scalar_lea.vmem %s6, %s434
        %p436 = pneg %p218
        %p437 = pneg %p215
        %s438 = ssub.s32 1, %s19
        %s439 = smul.u32 4, %s438
        %p440 = scmp.lt.s32.totalorder %s439, 7
        %s441 = scalar_select %p440, %s439, 7
        %s442 = smul.addr %s441, 2
        %s443 = scalar_lea.vmem %s7, %s442
        %s444 = smul.u32 4, %s19
        %s445 = ssub.s32 1, %s19
        %s446 = smul.u32 4, %s445
        %s447 = smul.u32 4, %s19
        %p448 = scmp.lt.s32.totalorder %s447, 7
        %s449 = scalar_select %p448, %s447, 7
        %s450 = smul.addr %s449, 2
        %s451 = scalar_lea.vmem %s2, %s450
        %s452 = smul.u32 4, %s19
        %s453 = ssub.s32 1, %s19
        %s454 = smul.u32 4, %s453
        %p455 = scmp.lt.s32.totalorder %s454, 7
        %s456 = scalar_select %p455, %s454, 7
        %s457 = smul.addr %s456, 2
        %s458 = scalar_lea.vmem %s3, %s457
        %s459 = ssub.s32 1, %s19
        %s460 = smul.u32 4, %s459
        %s461 = smul.u32 4, %s19
        %p462 = scmp.lt.s32.totalorder %s461, 7
        %s463 = scalar_select %p462, %s461, 7
        %s464 = smul.addr %s463, 2
        %s465 = scalar_lea.vmem %s6, %s464
        %s466 = smul.u32 4, %s19
        %s467 = ssub.s32 1, %s19
        %s468 = smul.u32 4, %s467
        %p469 = scmp.lt.s32.totalorder %s468, 7
        %s470 = scalar_select %p469, %s468, 7
        %s471 = smul.addr %s470, 2
        %s472 = scalar_lea.vmem %s7, %s471
        %s473 = ssub.s32 1, %s19
        %s474 = smul.u32 4, %s473
        %p475 = scmp.eq.s32.totalorder %s19, 0
        // Predicated region
        $region121: #{bilstm_forward.3} parent=111 // pred_check
          %p476 = pneg %p475
        $region122: #{bilstm_forward.3} parent=111 // pred_check_branch
          %478 = sbr.rel (%p476) target = $region124
        $region123: #{bilstm_forward.3} parent=111 // pred_region
          %479 = vst [vmem:[#allocation2] sm:$0x3] 0.0
          %480 = vst [vmem:[#allocation3] sm:$0x3] 0.0
          %481 = vst [vmem:[#allocation4] sm:$0x3] 0.0
          %482 = vst [vmem:[#allocation5] sm:$0x3] 0.0
        $region124: #{bilstm_forward.3} parent=111 // pred_fallthru
          _
        %v483 = vld [vmem:[#allocation2] sm:$0x3]
        %v484 = vld [vmem:[#allocation3] sm:$0x3]
        %v485 = vld [vmem:[%s387] sm:$0xff]
        %v486 = vld [vmem:[%s4] sm:$0xff]
        %v487 = vld [vmem:[%s4 + $0x8] sm:$0xff]
        %v488 = vld [vmem:[%s4 + $0x10] sm:$0xff]
        %v489 = vld [vmem:[%s4 + $0x18] sm:$0xff]
        %v490 = vld [vmem:[%s4 + $0x20] sm:$0xff]
        %v491 = vld [vmem:[%s4 + $0x28] sm:$0xff]
        %v492 = vld [vmem:[%s4 + $0x30] sm:$0xff]
        %v493 = vld [vmem:[%s4 + $0x38] sm:$0xff]
        %v494 = vld [vmem:[%s4 + $0x40] sm:$0xff]
        %v495 = vld [vmem:[%s4 + $0x48] sm:$0xff]
        %v496 = vld [vmem:[%s4 + $0x50] sm:$0xff]
        %v497 = vld [vmem:[%s4 + $0x58] sm:$0xff]
        %v498 = vld [vmem:[%s4 + $0x60] sm:$0xff]
        %v499 = vld [vmem:[%s4 + $0x68] sm:$0xff]
        %v500 = vld [vmem:[%s4 + $0x70] sm:$0xff]
        %v501 = vld [vmem:[%s4 + $0x78] sm:$0xff]
        %v502 = vld [vmem:[%s4 + $0x80] sm:$0xff]
        %v503 = vld [vmem:[%s4 + $0x88] sm:$0xff]
        %v504 = vld [vmem:[%s4 + $0x90] sm:$0xff]
        %v505 = vld [vmem:[%s4 + $0x98] sm:$0xff]
        %v506 = vld [vmem:[%s4 + $0xa0] sm:$0xff]
        %v507 = vld [vmem:[%s4 + $0xa8] sm:$0xff]
        %v508 = vld [vmem:[%s4 + $0xb0] sm:$0xff]
        %v509 = vld [vmem:[%s4 + $0xb8] sm:$0xff]
        %v510 = vld [vmem:[%s4 + $0xc0] sm:$0xff]
        %v511 = vld [vmem:[%s4 + $0xc8] sm:$0xff]
        %v512 = vld [vmem:[%s4 + $0xd0] sm:$0xff]
        %v513 = vld [vmem:[%s4 + $0xd8] sm:$0xff]
        %v514 = vld [vmem:[%s4 + $0xe0] sm:$0xff]
        %v515 = vld [vmem:[%s4 + $0xe8] sm:$0xff]
        %v516 = vld [vmem:[%s4 + $0xf0] sm:$0xff]
        %v517 = vld [vmem:[%s4 + $0xf8] sm:$0xff]
        %v518 = vld [vmem:[%s4 + $0x100] sm:$0xff]
        %v519 = vld [vmem:[%s4 + $0x108] sm:$0xff]
        %v520 = vld [vmem:[%s4 + $0x110] sm:$0xff]
        %v521 = vld [vmem:[%s4 + $0x118] sm:$0xff]
        %v522 = vld [vmem:[%s4 + $0x120] sm:$0xff]
        %v523 = vld [vmem:[%s4 + $0x128] sm:$0xff]
        %v524 = vld [vmem:[%s4 + $0x130] sm:$0xff]
        %v525 = vld [vmem:[%s4 + $0x138] sm:$0xff]
        %v526 = vld [vmem:[%s4 + $0x140] sm:$0xff]
        %v527 = vld [vmem:[%s4 + $0x148] sm:$0xff]
        %v528 = vld [vmem:[%s4 + $0x150] sm:$0xff]
        %v529 = vld [vmem:[%s4 + $0x158] sm:$0xff]
        %v530 = vld [vmem:[%s4 + $0x160] sm:$0xff]
        %v531 = vld [vmem:[%s4 + $0x168] sm:$0xff]
        %v532 = vld [vmem:[%s4 + $0x170] sm:$0xff]
        %v533 = vld [vmem:[%s4 + $0x178] sm:$0xff]
        %v534 = vld [vmem:[%s4 + $0x180] sm:$0xff]
        %v535 = vld [vmem:[%s4 + $0x188] sm:$0xff]
        %v536 = vld [vmem:[%s4 + $0x190] sm:$0xff]
        %v537 = vld [vmem:[%s4 + $0x198] sm:$0xff]
        %v538 = vld [vmem:[%s4 + $0x1a0] sm:$0xff]
        %v539 = vld [vmem:[%s4 + $0x1a8] sm:$0xff]
        %v540 = vld [vmem:[%s4 + $0x1b0] sm:$0xff]
        %v541 = vld [vmem:[%s4 + $0x1b8] sm:$0xff]
        %v542 = vld [vmem:[%s4 + $0x1c0] sm:$0xff]
        %v543 = vld [vmem:[%s4 + $0x1c8] sm:$0xff]
        %v544 = vld [vmem:[%s4 + $0x1d0] sm:$0xff]
        %v545 = vld [vmem:[%s4 + $0x1d8] sm:$0xff]
        %v546 = vld [vmem:[%s4 + $0x1e0] sm:$0xff]
        %v547 = vld [vmem:[%s4 + $0x1e8] sm:$0xff]
        %v548 = vld [vmem:[%s4 + $0x1f0] sm:$0xff]
        %v549 = vld [vmem:[%s4 + $0x1f8] sm:$0xff]
        %550 = vmatprep.subr.mxu0 %v547
        %551 = vmatpush1.msra.mxu0 %v546
        %552 = vmatprep.subr.mxu0 %v543
        %553 = vmatpush1.msra.mxu0 %v542
        %554 = vmatprep.subr.mxu0 %v539
        %555 = vmatpush1.msra.mxu0 %v538
        %556 = vmatprep.subr.mxu0 %v535
        %557 = vmatpush1.msra.mxu0 %v534
        %558 = vmatprep.subr.mxu0 %v531
        %559 = vmatpush1.msra.mxu0 %v530
        %560 = vmatprep.subr.mxu0 %v527
        %561 = vmatpush1.msra.mxu0 %v526
        %562 = vmatprep.subr.mxu0 %v523
        %563 = vmatpush1.msra.mxu0 %v522
        %564 = vmatprep.subr.mxu0 %v519
        %565 = vmatpush1.msra.mxu0 %v518
        %566 = vmatprep.subr.mxu0 %v515
        %567 = vmatpush1.msra.mxu0 %v514
        %568 = vmatprep.subr.mxu0 %v511
        %569 = vmatpush1.msra.mxu0 %v510
        %570 = vmatprep.subr.mxu0 %v507
        %571 = vmatpush1.msra.mxu0 %v506
        %572 = vmatprep.subr.mxu0 %v503
        %573 = vmatpush1.msra.mxu0 %v502
        %574 = vmatprep.subr.mxu0 %v499
        %575 = vmatpush1.msra.mxu0 %v498
        %576 = vmatprep.subr.mxu0 %v495
        %577 = vmatpush1.msra.mxu0 %v494
        %578 = vmatprep.subr.mxu0 %v491
        %579 = vmatpush1.msra.mxu0 %v490
        %580 = vmatprep.subr.mxu0 %v487
        %581 = vmatpush1.msra.mxu0 %v486
        %582 = vmatprep.subr.mxu0 0.0
        %583 = vmatpush2.msra.mxu0 0.0
        %584 = vmatprep.subr.mxu0 0.0
        %585 = vmatpush2.msra.mxu0 0.0
        %586 = vmatprep.subr.mxu0 0.0
        %587 = vmatpush2.msra.mxu0 0.0
        %588 = vmatprep.subr.mxu0 0.0
        %589 = vmatpush2.msra.mxu0 0.0
        %590 = vmatprep.subr.mxu0 0.0
        %591 = vmatpush2.msra.mxu0 0.0
        %592 = vmatprep.subr.mxu0 0.0
        %593 = vmatpush2.msra.mxu0 0.0
        %594 = vmatprep.subr.mxu0 0.0
        %595 = vmatpush2.msra.mxu0 0.0
        %596 = vmatprep.subr.mxu0 0.0
        %597 = vmatpush2.msra.mxu0 0.0
        %598 = vmatprep.subr.mxu0 0.0
        %599 = vmatpush2.msra.mxu0 0.0
        %600 = vmatprep.subr.mxu0 0.0
        %601 = vmatpush2.msra.mxu0 0.0
        %602 = vmatprep.subr.mxu0 0.0
        %603 = vmatpush2.msra.mxu0 0.0
        %604 = vmatprep.subr.mxu0 0.0
        %605 = vmatpush2.msra.mxu0 0.0
        %606 = vmatprep.subr.mxu0 0.0
        %607 = vmatpush2.msra.mxu0 0.0
        %608 = vmatprep.subr.mxu0 0.0
        %609 = vmatpush2.msra.mxu0 0.0
        %610 = vmatprep.subr.mxu0 0.0
        %611 = vmatpush2.msra.mxu0 0.0
        %612 = vmatprep.subr.mxu0 0.0
        %613 = vmatpush2.msra.mxu0 0.0
        %614 = vmatprep.mubr.f32.mxu0 0.0
        %615 = vmatmul.mubr.f32.gmra.mxu0 %v483
        %v616 = vpop.f32.mrf.mxu0
        %v617 = vadd.f32 0.0, %v616
        %v618 = vpop.f32.mrf.mxu0
        %v619 = vadd.f32 0.0, %v618
        %620 = vdwg.mxu0
        %621 = vmatprep.subr.mxu0 %v549
        %622 = vmatpush1.msra.mxu0 %v548
        %623 = vmatprep.subr.mxu0 %v545
        %624 = vmatpush1.msra.mxu0 %v544
        %625 = vmatprep.subr.mxu0 %v541
        %626 = vmatpush1.msra.mxu0 %v540
        %627 = vmatprep.subr.mxu0 %v537
        %628 = vmatpush1.msra.mxu0 %v536
        %629 = vmatprep.subr.mxu0 %v533
        %630 = vmatpush1.msra.mxu0 %v532
        %631 = vmatprep.subr.mxu0 %v529
        %632 = vmatpush1.msra.mxu0 %v528
        %633 = vmatprep.subr.mxu0 %v525
        %634 = vmatpush1.msra.mxu0 %v524
        %635 = vmatprep.subr.mxu0 %v521
        %636 = vmatpush1.msra.mxu0 %v520
        %637 = vmatprep.subr.mxu0 %v517
        %638 = vmatpush1.msra.mxu0 %v516
        %639 = vmatprep.subr.mxu0 %v513
        %640 = vmatpush1.msra.mxu0 %v512
        %641 = vmatprep.subr.mxu0 %v509
        %642 = vmatpush1.msra.mxu0 %v508
        %643 = vmatprep.subr.mxu0 %v505
        %644 = vmatpush1.msra.mxu0 %v504
        %645 = vmatprep.subr.mxu0 %v501
        %646 = vmatpush1.msra.mxu0 %v500
        %647 = vmatprep.subr.mxu0 %v497
        %648 = vmatpush1.msra.mxu0 %v496
        %649 = vmatprep.subr.mxu0 %v493
        %650 = vmatpush1.msra.mxu0 %v492
        %651 = vmatprep.subr.mxu0 %v489
        %652 = vmatpush1.msra.mxu0 %v488
        %653 = vmatprep.subr.mxu0 0.0
        %654 = vmatpush2.msra.mxu0 0.0
        %655 = vmatprep.subr.mxu0 0.0
        %656 = vmatpush2.msra.mxu0 0.0
        %657 = vmatprep.subr.mxu0 0.0
        %658 = vmatpush2.msra.mxu0 0.0
        %659 = vmatprep.subr.mxu0 0.0
        %660 = vmatpush2.msra.mxu0 0.0
        %661 = vmatprep.subr.mxu0 0.0
        %662 = vmatpush2.msra.mxu0 0.0
        %663 = vmatprep.subr.mxu0 0.0
        %664 = vmatpush2.msra.mxu0 0.0
        %665 = vmatprep.subr.mxu0 0.0
        %666 = vmatpush2.msra.mxu0 0.0
        %667 = vmatprep.subr.mxu0 0.0
        %668 = vmatpush2.msra.mxu0 0.0
        %669 = vmatprep.subr.mxu0 0.0
        %670 = vmatpush2.msra.mxu0 0.0
        %671 = vmatprep.subr.mxu0 0.0
        %672 = vmatpush2.msra.mxu0 0.0
        %673 = vmatprep.subr.mxu0 0.0
        %674 = vmatpush2.msra.mxu0 0.0
        %675 = vmatprep.subr.mxu0 0.0
        %676 = vmatpush2.msra.mxu0 0.0
        %677 = vmatprep.subr.mxu0 0.0
        %678 = vmatpush2.msra.mxu0 0.0
        %679 = vmatprep.subr.mxu0 0.0
        %680 = vmatpush2.msra.mxu0 0.0
        %681 = vmatprep.subr.mxu0 0.0
        %682 = vmatpush2.msra.mxu0 0.0
        %683 = vmatprep.subr.mxu0 0.0
        %684 = vmatpush2.msra.mxu0 0.0
        %685 = vmatprep.mubr.f32.mxu0 0.0
        %686 = vmatmul.mubr.f32.gmra.mxu0 %v483
        %v687 = vpop.f32.mrf.mxu0
        %v688 = vadd.f32 0.0, %v687
        %v689 = vpop.f32.mrf.mxu0
        %v690 = vadd.f32 0.0, %v689
        %691 = vdwg.mxu0
        %v696 = vcombine.low %v617, %v619
        %v697 = vcombine.low %v688, %v690
        %v699 = vunpack.c.l.s4 1983009808
        %v700 = vunpack.c.0.s8 %v699
        %v701 = vlaneseq
        %v702 = vshrl.u32 %v701, 7
        %v703 = vsub.s32 %v700, %v702
        %v704 = vrot.slane %v696, %v703
        %v706 = vunpack.c.l.s4 1983009808
        %v707 = vunpack.c.0.s8 %v706
        %v708 = vlaneseq
        %v709 = vshrl.u32 %v708, 7
        %v710 = vsub.s32 %v707, %v709
        %v711 = vrot.slane %v697, %v710
        %v712 = vcombine.low %v704, %v711
        %v714 = vadd.f32 %v485, %v712
        %v715 = vxor.u32 %v714, 2147483648
        %v716 = vmul.f32 %v715, 1.442695
        %v717 = vpow.pop %v716
        %v718 = vadd.f32 %v717, 1.0
        %v719 = vrcp.pop %v718
        %v720 = vmul.f32 1.0, %v719
        %v722 = vrot.slane %v714, 2
        %v724 = vxor.u32 %v722, 2147483648
        %v725 = vmul.f32 %v724, 1.442695
        %v726 = vpow.pop %v725
        %v727 = vadd.f32 %v726, 1.0
        %v728 = vrcp.pop %v727
        %v729 = vmul.f32 1.0, %v728
        %v730 = vrot.slane %v714, 4
        %v732 = vtanh.pop %v730
        %v733 = vrot.slane %v714, 6
        %v735 = vxor.u32 %v733, 2147483648
        %v736 = vmul.f32 %v735, 1.442695
        %v737 = vpow.pop %v736
        %v738 = vadd.f32 %v737, 1.0
        %v739 = vrcp.pop %v738
        %v740 = vmul.f32 1.0, %v739
        %v741 = vmul.f32 %v729, %v484
        %v742 = vmul.f32 %v720, %v732
        %v743 = vadd.f32 %v741, %v742
        %v744 = vtanh.pop %v743
        %v745 = vmul.f32 %v740, %v744
        %v746 = vld [vmem:[%s451] sm:$0x3]
        %748 = vset.pattern.permute.xlu0 0
        %749 = vperm.xlu0 %748, %v746
        %v750 = vpop.permute.xlu0 %749
        %v752 = vmul.f32 %v750, %v745
        %v753 = vsub.f32 1.0, %v746
        %755 = vset.pattern.permute.xlu0 0
        %756 = vperm.xlu0 %755, %v753
        %v757 = vpop.permute.xlu0 %756
        %v759 = vmul.f32 %v757, %v483
        %v760 = vadd.f32 %v752, %v759
        %761 = vst [vmem:[#allocation2] sm:$0x3] %v760
        %v762 = vmul.f32 %v750, %v743
        %v763 = vmul.f32 %v757, %v484
        %v764 = vadd.f32 %v762, %v763
        %765 = vst [vmem:[#allocation3] sm:$0x3] %v764
        %766 = vst [vmem:[%s465] sm:$0x3] %v752
        %v767 = vld [vmem:[#allocation4] sm:$0x3]
        %v768 = vld [vmem:[#allocation5] sm:$0x3]
        %s769 = scalar_lea.vmem %s394, 24 [#allocation7]
        %v770 = vld [vmem:[%s769] sm:$0xff]
        %v771 = vld [vmem:[%s5] sm:$0xff]
        %v772 = vld [vmem:[%s5 + $0x8] sm:$0xff]
        %v773 = vld [vmem:[%s5 + $0x10] sm:$0xff]
        %v774 = vld [vmem:[%s5 + $0x18] sm:$0xff]
        %v775 = vld [vmem:[%s5 + $0x20] sm:$0xff]
        %v776 = vld [vmem:[%s5 + $0x28] sm:$0xff]
        %v777 = vld [vmem:[%s5 + $0x30] sm:$0xff]
        %v778 = vld [vmem:[%s5 + $0x38] sm:$0xff]
        %v779 = vld [vmem:[%s5 + $0x40] sm:$0xff]
        %v780 = vld [vmem:[%s5 + $0x48] sm:$0xff]
        %v781 = vld [vmem:[%s5 + $0x50] sm:$0xff]
        %v782 = vld [vmem:[%s5 + $0x58] sm:$0xff]
        %v783 = vld [vmem:[%s5 + $0x60] sm:$0xff]
        %v784 = vld [vmem:[%s5 + $0x68] sm:$0xff]
        %v785 = vld [vmem:[%s5 + $0x70] sm:$0xff]
        %v786 = vld [vmem:[%s5 + $0x78] sm:$0xff]
        %v787 = vld [vmem:[%s5 + $0x80] sm:$0xff]
        %v788 = vld [vmem:[%s5 + $0x88] sm:$0xff]
        %v789 = vld [vmem:[%s5 + $0x90] sm:$0xff]
        %v790 = vld [vmem:[%s5 + $0x98] sm:$0xff]
        %v791 = vld [vmem:[%s5 + $0xa0] sm:$0xff]
        %v792 = vld [vmem:[%s5 + $0xa8] sm:$0xff]
        %v793 = vld [vmem:[%s5 + $0xb0] sm:$0xff]
        %v794 = vld [vmem:[%s5 + $0xb8] sm:$0xff]
        %v795 = vld [vmem:[%s5 + $0xc0] sm:$0xff]
        %v796 = vld [vmem:[%s5 + $0xc8] sm:$0xff]
        %v797 = vld [vmem:[%s5 + $0xd0] sm:$0xff]
        %v798 = vld [vmem:[%s5 + $0xd8] sm:$0xff]
        %v799 = vld [vmem:[%s5 + $0xe0] sm:$0xff]
        %v800 = vld [vmem:[%s5 + $0xe8] sm:$0xff]
        %v801 = vld [vmem:[%s5 + $0xf0] sm:$0xff]
        %v802 = vld [vmem:[%s5 + $0xf8] sm:$0xff]
        %v803 = vld [vmem:[%s5 + $0x100] sm:$0xff]
        %v804 = vld [vmem:[%s5 + $0x108] sm:$0xff]
        %v805 = vld [vmem:[%s5 + $0x110] sm:$0xff]
        %v806 = vld [vmem:[%s5 + $0x118] sm:$0xff]
        %v807 = vld [vmem:[%s5 + $0x120] sm:$0xff]
        %v808 = vld [vmem:[%s5 + $0x128] sm:$0xff]
        %v809 = vld [vmem:[%s5 + $0x130] sm:$0xff]
        %v810 = vld [vmem:[%s5 + $0x138] sm:$0xff]
        %v811 = vld [vmem:[%s5 + $0x140] sm:$0xff]
        %v812 = vld [vmem:[%s5 + $0x148] sm:$0xff]
        %v813 = vld [vmem:[%s5 + $0x150] sm:$0xff]
        %v814 = vld [vmem:[%s5 + $0x158] sm:$0xff]
        %v815 = vld [vmem:[%s5 + $0x160] sm:$0xff]
        %v816 = vld [vmem:[%s5 + $0x168] sm:$0xff]
        %v817 = vld [vmem:[%s5 + $0x170] sm:$0xff]
        %v818 = vld [vmem:[%s5 + $0x178] sm:$0xff]
        %v819 = vld [vmem:[%s5 + $0x180] sm:$0xff]
        %v820 = vld [vmem:[%s5 + $0x188] sm:$0xff]
        %v821 = vld [vmem:[%s5 + $0x190] sm:$0xff]
        %v822 = vld [vmem:[%s5 + $0x198] sm:$0xff]
        %v823 = vld [vmem:[%s5 + $0x1a0] sm:$0xff]
        %v824 = vld [vmem:[%s5 + $0x1a8] sm:$0xff]
        %v825 = vld [vmem:[%s5 + $0x1b0] sm:$0xff]
        %v826 = vld [vmem:[%s5 + $0x1b8] sm:$0xff]
        %v827 = vld [vmem:[%s5 + $0x1c0] sm:$0xff]
        %v828 = vld [vmem:[%s5 + $0x1c8] sm:$0xff]
        %v829 = vld [vmem:[%s5 + $0x1d0] sm:$0xff]
        %v830 = vld [vmem:[%s5 + $0x1d8] sm:$0xff]
        %v831 = vld [vmem:[%s5 + $0x1e0] sm:$0xff]
        %v832 = vld [vmem:[%s5 + $0x1e8] sm:$0xff]
        %v833 = vld [vmem:[%s5 + $0x1f0] sm:$0xff]
        %v834 = vld [vmem:[%s5 + $0x1f8] sm:$0xff]
        %835 = vmatprep.subr.mxu0 %v832
        %836 = vmatpush1.msra.mxu0 %v831
        %837 = vmatprep.subr.mxu0 %v828
        %838 = vmatpush1.msra.mxu0 %v827
        %839 = vmatprep.subr.mxu0 %v824
        %840 = vmatpush1.msra.mxu0 %v823
        %841 = vmatprep.subr.mxu0 %v820
        %842 = vmatpush1.msra.mxu0 %v819
        %843 = vmatprep.subr.mxu0 %v816
        %844 = vmatpush1.msra.mxu0 %v815
        %845 = vmatprep.subr.mxu0 %v812
        %846 = vmatpush1.msra.mxu0 %v811
        %847 = vmatprep.subr.mxu0 %v808
        %848 = vmatpush1.msra.mxu0 %v807
        %849 = vmatprep.subr.mxu0 %v804
        %850 = vmatpush1.msra.mxu0 %v803
        %851 = vmatprep.subr.mxu0 %v800
        %852 = vmatpush1.msra.mxu0 %v799
        %853 = vmatprep.subr.mxu0 %v796
        %854 = vmatpush1.msra.mxu0 %v795
        %855 = vmatprep.subr.mxu0 %v792
        %856 = vmatpush1.msra.mxu0 %v791
        %857 = vmatprep.subr.mxu0 %v788
        %858 = vmatpush1.msra.mxu0 %v787
        %859 = vmatprep.subr.mxu0 %v784
        %860 = vmatpush1.msra.mxu0 %v783
        %861 = vmatprep.subr.mxu0 %v780
        %862 = vmatpush1.msra.mxu0 %v779
        %863 = vmatprep.subr.mxu0 %v776
        %864 = vmatpush1.msra.mxu0 %v775
        %865 = vmatprep.subr.mxu0 %v772
        %866 = vmatpush1.msra.mxu0 %v771
        %867 = vmatprep.subr.mxu0 0.0
        %868 = vmatpush2.msra.mxu0 0.0
        %869 = vmatprep.subr.mxu0 0.0
        %870 = vmatpush2.msra.mxu0 0.0
        %871 = vmatprep.subr.mxu0 0.0
        %872 = vmatpush2.msra.mxu0 0.0
        %873 = vmatprep.subr.mxu0 0.0
        %874 = vmatpush2.msra.mxu0 0.0
        %875 = vmatprep.subr.mxu0 0.0
        %876 = vmatpush2.msra.mxu0 0.0
        %877 = vmatprep.subr.mxu0 0.0
        %878 = vmatpush2.msra.mxu0 0.0
        %879 = vmatprep.subr.mxu0 0.0
        %880 = vmatpush2.msra.mxu0 0.0
        %881 = vmatprep.subr.mxu0 0.0
        %882 = vmatpush2.msra.mxu0 0.0
        %883 = vmatprep.subr.mxu0 0.0
        %884 = vmatpush2.msra.mxu0 0.0
        %885 = vmatprep.subr.mxu0 0.0
        %886 = vmatpush2.msra.mxu0 0.0
        %887 = vmatprep.subr.mxu0 0.0
        %888 = vmatpush2.msra.mxu0 0.0
        %889 = vmatprep.subr.mxu0 0.0
        %890 = vmatpush2.msra.mxu0 0.0
        %891 = vmatprep.subr.mxu0 0.0
        %892 = vmatpush2.msra.mxu0 0.0
        %893 = vmatprep.subr.mxu0 0.0
        %894 = vmatpush2.msra.mxu0 0.0
        %895 = vmatprep.subr.mxu0 0.0
        %896 = vmatpush2.msra.mxu0 0.0
        %897 = vmatprep.subr.mxu0 0.0
        %898 = vmatpush2.msra.mxu0 0.0
        %899 = vmatprep.mubr.f32.mxu0 0.0
        %900 = vmatmul.mubr.f32.gmra.mxu0 %v767
        %v901 = vpop.f32.mrf.mxu0
        %v902 = vadd.f32 0.0, %v901
        %v903 = vpop.f32.mrf.mxu0
        %v904 = vadd.f32 0.0, %v903
        %905 = vdwg.mxu0
        %906 = vmatprep.subr.mxu0 %v834
        %907 = vmatpush1.msra.mxu0 %v833
        %908 = vmatprep.subr.mxu0 %v830
        %909 = vmatpush1.msra.mxu0 %v829
        %910 = vmatprep.subr.mxu0 %v826
        %911 = vmatpush1.msra.mxu0 %v825
        %912 = vmatprep.subr.mxu0 %v822
        %913 = vmatpush1.msra.mxu0 %v821
        %914 = vmatprep.subr.mxu0 %v818
        %915 = vmatpush1.msra.mxu0 %v817
        %916 = vmatprep.subr.mxu0 %v814
        %917 = vmatpush1.msra.mxu0 %v813
        %918 = vmatprep.subr.mxu0 %v810
        %919 = vmatpush1.msra.mxu0 %v809
        %920 = vmatprep.subr.mxu0 %v806
        %921 = vmatpush1.msra.mxu0 %v805
        %922 = vmatprep.subr.mxu0 %v802
        %923 = vmatpush1.msra.mxu0 %v801
        %924 = vmatprep.subr.mxu0 %v798
        %925 = vmatpush1.msra.mxu0 %v797
        %926 = vmatprep.subr.mxu0 %v794
        %927 = vmatpush1.msra.mxu0 %v793
        %928 = vmatprep.subr.mxu0 %v790
        %929 = vmatpush1.msra.mxu0 %v789
        %930 = vmatprep.subr.mxu0 %v786
        %931 = vmatpush1.msra.mxu0 %v785
        %932 = vmatprep.subr.mxu0 %v782
        %933 = vmatpush1.msra.mxu0 %v781
        %934 = vmatprep.subr.mxu0 %v778
        %935 = vmatpush1.msra.mxu0 %v777
        %936 = vmatprep.subr.mxu0 %v774
        %937 = vmatpush1.msra.mxu0 %v773
        %938 = vmatprep.subr.mxu0 0.0
        %939 = vmatpush2.msra.mxu0 0.0
        %940 = vmatprep.subr.mxu0 0.0
        %941 = vmatpush2.msra.mxu0 0.0
        %942 = vmatprep.subr.mxu0 0.0
        %943 = vmatpush2.msra.mxu0 0.0
        %944 = vmatprep.subr.mxu0 0.0
        %945 = vmatpush2.msra.mxu0 0.0
        %946 = vmatprep.subr.mxu0 0.0
        %947 = vmatpush2.msra.mxu0 0.0
        %948 = vmatprep.subr.mxu0 0.0
        %949 = vmatpush2.msra.mxu0 0.0
        %950 = vmatprep.subr.mxu0 0.0
        %951 = vmatpush2.msra.mxu0 0.0
        %952 = vmatprep.subr.mxu0 0.0
        %953 = vmatpush2.msra.mxu0 0.0
        %954 = vmatprep.subr.mxu0 0.0
        %955 = vmatpush2.msra.mxu0 0.0
        %956 = vmatprep.subr.mxu0 0.0
        %957 = vmatpush2.msra.mxu0 0.0
        %958 = vmatprep.subr.mxu0 0.0
        %959 = vmatpush2.msra.mxu0 0.0
        %960 = vmatprep.subr.mxu0 0.0
        %961 = vmatpush2.msra.mxu0 0.0
        %962 = vmatprep.subr.mxu0 0.0
        %963 = vmatpush2.msra.mxu0 0.0
        %964 = vmatprep.subr.mxu0 0.0
        %965 = vmatpush2.msra.mxu0 0.0
        %966 = vmatprep.subr.mxu0 0.0
        %967 = vmatpush2.msra.mxu0 0.0
        %968 = vmatprep.subr.mxu0 0.0
        %969 = vmatpush2.msra.mxu0 0.0
        %970 = vmatprep.mubr.f32.mxu0 0.0
        %971 = vmatmul.mubr.f32.gmra.mxu0 %v767
        %v972 = vpop.f32.mrf.mxu0
        %v973 = vadd.f32 0.0, %v972
        %v974 = vpop.f32.mrf.mxu0
        %v975 = vadd.f32 0.0, %v974
        %976 = vdwg.mxu0
        %v981 = vcombine.low %v902, %v904
        %v982 = vcombine.low %v973, %v975
        %v984 = vunpack.c.l.s4 1983009808
        %v985 = vunpack.c.0.s8 %v984
        %v986 = vlaneseq
        %v987 = vshrl.u32 %v986, 7
        %v988 = vsub.s32 %v985, %v987
        %v989 = vrot.slane %v981, %v988
        %v991 = vunpack.c.l.s4 1983009808
        %v992 = vunpack.c.0.s8 %v991
        %v993 = vlaneseq
        %v994 = vshrl.u32 %v993, 7
        %v995 = vsub.s32 %v992, %v994
        %v996 = vrot.slane %v982, %v995
        %v997 = vcombine.low %v989, %v996
        %v999 = vadd.f32 %v770, %v997
        %v1000 = vxor.u32 %v999, 2147483648
        %v1001 = vmul.f32 %v1000, 1.442695
        %v1002 = vpow.pop %v1001
        %v1003 = vadd.f32 %v1002, 1.0
        %v1004 = vrcp.pop %v1003
        %v1005 = vmul.f32 1.0, %v1004
        %v1007 = vrot.slane %v999, 2
        %v1009 = vxor.u32 %v1007, 2147483648
        %v1010 = vmul.f32 %v1009, 1.442695
        %v1011 = vpow.pop %v1010
        %v1012 = vadd.f32 %v1011, 1.0
        %v1013 = vrcp.pop %v1012
        %v1014 = vmul.f32 1.0, %v1013
        %v1015 = vrot.slane %v999, 4
        %v1017 = vtanh.pop %v1015
        %v1018 = vrot.slane %v999, 6
        %v1020 = vxor.u32 %v1018, 2147483648
        %v1021 = vmul.f32 %v1020, 1.442695
        %v1022 = vpow.pop %v1021
        %v1023 = vadd.f32 %v1022, 1.0
        %v1024 = vrcp.pop %v1023
        %v1025 = vmul.f32 1.0, %v1024
        %v1026 = vmul.f32 %v1014, %v768
        %v1027 = vmul.f32 %v1005, %v1017
        %v1028 = vadd.f32 %v1026, %v1027
        %v1029 = vtanh.pop %v1028
        %v1030 = vmul.f32 %v1025, %v1029
        %s1031 = scalar_lea.vmem %s458, 6
        %v1032 = vld [vmem:[%s1031] sm:$0x3]
        %1034 = vset.pattern.permute.xlu0 0
        %1035 = vperm.xlu0 %1034, %v1032
        %v1036 = vpop.permute.xlu0 %1035
        %v1038 = vmul.f32 %v1036, %v1030
        %v1039 = vsub.f32 1.0, %v1032
        %1041 = vset.pattern.permute.xlu0 0
        %1042 = vperm.xlu0 %1041, %v1039
        %v1043 = vpop.permute.xlu0 %1042
        %v1045 = vmul.f32 %v1043, %v767
        %v1046 = vadd.f32 %v1038, %v1045
        %1047 = vst [vmem:[#allocation4] sm:$0x3] %v1046
        %v1048 = vmul.f32 %v1036, %v1028
        %v1049 = vmul.f32 %v1043, %v768
        %v1050 = vadd.f32 %v1048, %v1049
        %1051 = vst [vmem:[#allocation5] sm:$0x3] %v1050
        %s1052 = scalar_lea.vmem %s472, 6
        %1053 = vst [vmem:[%s1052] sm:$0x3] %v1038
        %v1054 = vld [vmem:[#allocation2] sm:$0x3]
        %v1055 = vld [vmem:[#allocation3] sm:$0x3]
        %s1056 = scalar_lea.vmem %s387, 8 [#allocation6]
        %v1057 = vld [vmem:[%s1056] sm:$0xff]
        %v1058 = vld [vmem:[%s4] sm:$0xff]
        %v1059 = vld [vmem:[%s4 + $0x8] sm:$0xff]
        %v1060 = vld [vmem:[%s4 + $0x10] sm:$0xff]
        %v1061 = vld [vmem:[%s4 + $0x18] sm:$0xff]
        %v1062 = vld [vmem:[%s4 + $0x20] sm:$0xff]
        %v1063 = vld [vmem:[%s4 + $0x28] sm:$0xff]
        %v1064 = vld [vmem:[%s4 + $0x30] sm:$0xff]
        %v1065 = vld [vmem:[%s4 + $0x38] sm:$0xff]
        %v1066 = vld [vmem:[%s4 + $0x40] sm:$0xff]
        %v1067 = vld [vmem:[%s4 + $0x48] sm:$0xff]
        %v1068 = vld [vmem:[%s4 + $0x50] sm:$0xff]
        %v1069 = vld [vmem:[%s4 + $0x58] sm:$0xff]
        %v1070 = vld [vmem:[%s4 + $0x60] sm:$0xff]
        %v1071 = vld [vmem:[%s4 + $0x68] sm:$0xff]
        %v1072 = vld [vmem:[%s4 + $0x70] sm:$0xff]
        %v1073 = vld [vmem:[%s4 + $0x78] sm:$0xff]
        %v1074 = vld [vmem:[%s4 + $0x80] sm:$0xff]
        %v1075 = vld [vmem:[%s4 + $0x88] sm:$0xff]
        %v1076 = vld [vmem:[%s4 + $0x90] sm:$0xff]
        %v1077 = vld [vmem:[%s4 + $0x98] sm:$0xff]
        %v1078 = vld [vmem:[%s4 + $0xa0] sm:$0xff]
        %v1079 = vld [vmem:[%s4 + $0xa8] sm:$0xff]
        %v1080 = vld [vmem:[%s4 + $0xb0] sm:$0xff]
        %v1081 = vld [vmem:[%s4 + $0xb8] sm:$0xff]
        %v1082 = vld [vmem:[%s4 + $0xc0] sm:$0xff]
        %v1083 = vld [vmem:[%s4 + $0xc8] sm:$0xff]
        %v1084 = vld [vmem:[%s4 + $0xd0] sm:$0xff]
        %v1085 = vld [vmem:[%s4 + $0xd8] sm:$0xff]
        %v1086 = vld [vmem:[%s4 + $0xe0] sm:$0xff]
        %v1087 = vld [vmem:[%s4 + $0xe8] sm:$0xff]
        %v1088 = vld [vmem:[%s4 + $0xf0] sm:$0xff]
        %v1089 = vld [vmem:[%s4 + $0xf8] sm:$0xff]
        %v1090 = vld [vmem:[%s4 + $0x100] sm:$0xff]
        %v1091 = vld [vmem:[%s4 + $0x108] sm:$0xff]
        %v1092 = vld [vmem:[%s4 + $0x110] sm:$0xff]
        %v1093 = vld [vmem:[%s4 + $0x118] sm:$0xff]
        %v1094 = vld [vmem:[%s4 + $0x120] sm:$0xff]
        %v1095 = vld [vmem:[%s4 + $0x128] sm:$0xff]
        %v1096 = vld [vmem:[%s4 + $0x130] sm:$0xff]
        %v1097 = vld [vmem:[%s4 + $0x138] sm:$0xff]
        %v1098 = vld [vmem:[%s4 + $0x140] sm:$0xff]
        %v1099 = vld [vmem:[%s4 + $0x148] sm:$0xff]
        %v1100 = vld [vmem:[%s4 + $0x150] sm:$0xff]
        %v1101 = vld [vmem:[%s4 + $0x158] sm:$0xff]
        %v1102 = vld [vmem:[%s4 + $0x160] sm:$0xff]
        %v1103 = vld [vmem:[%s4 + $0x168] sm:$0xff]
        %v1104 = vld [vmem:[%s4 + $0x170] sm:$0xff]
        %v1105 = vld [vmem:[%s4 + $0x178] sm:$0xff]
        %v1106 = vld [vmem:[%s4 + $0x180] sm:$0xff]
        %v1107 = vld [vmem:[%s4 + $0x188] sm:$0xff]
        %v1108 = vld [vmem:[%s4 + $0x190] sm:$0xff]
        %v1109 = vld [vmem:[%s4 + $0x198] sm:$0xff]
        %v1110 = vld [vmem:[%s4 + $0x1a0] sm:$0xff]
        %v1111 = vld [vmem:[%s4 + $0x1a8] sm:$0xff]
        %v1112 = vld [vmem:[%s4 + $0x1b0] sm:$0xff]
        %v1113 = vld [vmem:[%s4 + $0x1b8] sm:$0xff]
        %v1114 = vld [vmem:[%s4 + $0x1c0] sm:$0xff]
        %v1115 = vld [vmem:[%s4 + $0x1c8] sm:$0xff]
        %v1116 = vld [vmem:[%s4 + $0x1d0] sm:$0xff]
        %v1117 = vld [vmem:[%s4 + $0x1d8] sm:$0xff]
        %v1118 = vld [vmem:[%s4 + $0x1e0] sm:$0xff]
        %v1119 = vld [vmem:[%s4 + $0x1e8] sm:$0xff]
        %v1120 = vld [vmem:[%s4 + $0x1f0] sm:$0xff]
        %v1121 = vld [vmem:[%s4 + $0x1f8] sm:$0xff]
        %1122 = vmatprep.subr.mxu0 %v1119
        %1123 = vmatpush1.msra.mxu0 %v1118
        %1124 = vmatprep.subr.mxu0 %v1115
        %1125 = vmatpush1.msra.mxu0 %v1114
        %1126 = vmatprep.subr.mxu0 %v1111
        %1127 = vmatpush1.msra.mxu0 %v1110
        %1128 = vmatprep.subr.mxu0 %v1107
        %1129 = vmatpush1.msra.mxu0 %v1106
        %1130 = vmatprep.subr.mxu0 %v1103
        %1131 = vmatpush1.msra.mxu0 %v1102
        %1132 = vmatprep.subr.mxu0 %v1099
        %1133 = vmatpush1.msra.mxu0 %v1098
        %1134 = vmatprep.subr.mxu0 %v1095
        %1135 = vmatpush1.msra.mxu0 %v1094
        %1136 = vmatprep.subr.mxu0 %v1091
        %1137 = vmatpush1.msra.mxu0 %v1090
        %1138 = vmatprep.subr.mxu0 %v1087
        %1139 = vmatpush1.msra.mxu0 %v1086
        %1140 = vmatprep.subr.mxu0 %v1083
        %1141 = vmatpush1.msra.mxu0 %v1082
        %1142 = vmatprep.subr.mxu0 %v1079
        %1143 = vmatpush1.msra.mxu0 %v1078
        %1144 = vmatprep.subr.mxu0 %v1075
        %1145 = vmatpush1.msra.mxu0 %v1074
        %1146 = vmatprep.subr.mxu0 %v1071
        %1147 = vmatpush1.msra.mxu0 %v1070
        %1148 = vmatprep.subr.mxu0 %v1067
        %1149 = vmatpush1.msra.mxu0 %v1066
        %1150 = vmatprep.subr.mxu0 %v1063
        %1151 = vmatpush1.msra.mxu0 %v1062
        %1152 = vmatprep.subr.mxu0 %v1059
        %1153 = vmatpush1.msra.mxu0 %v1058
        %1154 = vmatprep.subr.mxu0 0.0
        %1155 = vmatpush2.msra.mxu0 0.0
        %1156 = vmatprep.subr.mxu0 0.0
        %1157 = vmatpush2.msra.mxu0 0.0
        %1158 = vmatprep.subr.mxu0 0.0
        %1159 = vmatpush2.msra.mxu0 0.0
        %1160 = vmatprep.subr.mxu0 0.0
        %1161 = vmatpush2.msra.mxu0 0.0
        %1162 = vmatprep.subr.mxu0 0.0
        %1163 = vmatpush2.msra.mxu0 0.0
        %1164 = vmatprep.subr.mxu0 0.0
        %1165 = vmatpush2.msra.mxu0 0.0
        %1166 = vmatprep.subr.mxu0 0.0
        %1167 = vmatpush2.msra.mxu0 0.0
        %1168 = vmatprep.subr.mxu0 0.0
        %1169 = vmatpush2.msra.mxu0 0.0
        %1170 = vmatprep.subr.mxu0 0.0
        %1171 = vmatpush2.msra.mxu0 0.0
        %1172 = vmatprep.subr.mxu0 0.0
        %1173 = vmatpush2.msra.mxu0 0.0
        %1174 = vmatprep.subr.mxu0 0.0
        %1175 = vmatpush2.msra.mxu0 0.0
        %1176 = vmatprep.subr.mxu0 0.0
        %1177 = vmatpush2.msra.mxu0 0.0
        %1178 = vmatprep.subr.mxu0 0.0
        %1179 = vmatpush2.msra.mxu0 0.0
        %1180 = vmatprep.subr.mxu0 0.0
        %1181 = vmatpush2.msra.mxu0 0.0
        %1182 = vmatprep.subr.mxu0 0.0
        %1183 = vmatpush2.msra.mxu0 0.0
        %1184 = vmatprep.subr.mxu0 0.0
        %1185 = vmatpush2.msra.mxu0 0.0
        %1186 = vmatprep.mubr.f32.mxu0 0.0
        %1187 = vmatmul.mubr.f32.gmra.mxu0 %v1054
        %v1188 = vpop.f32.mrf.mxu0
        %v1189 = vadd.f32 0.0, %v1188
        %v1190 = vpop.f32.mrf.mxu0
        %v1191 = vadd.f32 0.0, %v1190
        %1192 = vdwg.mxu0
        %1193 = vmatprep.subr.mxu0 %v1121
        %1194 = vmatpush1.msra.mxu0 %v1120
        %1195 = vmatprep.subr.mxu0 %v1117
        %1196 = vmatpush1.msra.mxu0 %v1116
        %1197 = vmatprep.subr.mxu0 %v1113
        %1198 = vmatpush1.msra.mxu0 %v1112
        %1199 = vmatprep.subr.mxu0 %v1109
        %1200 = vmatpush1.msra.mxu0 %v1108
        %1201 = vmatprep.subr.mxu0 %v1105
        %1202 = vmatpush1.msra.mxu0 %v1104
        %1203 = vmatprep.subr.mxu0 %v1101
        %1204 = vmatpush1.msra.mxu0 %v1100
        %1205 = vmatprep.subr.mxu0 %v1097
        %1206 = vmatpush1.msra.mxu0 %v1096
        %1207 = vmatprep.subr.mxu0 %v1093
        %1208 = vmatpush1.msra.mxu0 %v1092
        %1209 = vmatprep.subr.mxu0 %v1089
        %1210 = vmatpush1.msra.mxu0 %v1088
        %1211 = vmatprep.subr.mxu0 %v1085
        %1212 = vmatpush1.msra.mxu0 %v1084
        %1213 = vmatprep.subr.mxu0 %v1081
        %1214 = vmatpush1.msra.mxu0 %v1080
        %1215 = vmatprep.subr.mxu0 %v1077
        %1216 = vmatpush1.msra.mxu0 %v1076
        %1217 = vmatprep.subr.mxu0 %v1073
        %1218 = vmatpush1.msra.mxu0 %v1072
        %1219 = vmatprep.subr.mxu0 %v1069
        %1220 = vmatpush1.msra.mxu0 %v1068
        %1221 = vmatprep.subr.mxu0 %v1065
        %1222 = vmatpush1.msra.mxu0 %v1064
        %1223 = vmatprep.subr.mxu0 %v1061
        %1224 = vmatpush1.msra.mxu0 %v1060
        %1225 = vmatprep.subr.mxu0 0.0
        %1226 = vmatpush2.msra.mxu0 0.0
        %1227 = vmatprep.subr.mxu0 0.0
        %1228 = vmatpush2.msra.mxu0 0.0
        %1229 = vmatprep.subr.mxu0 0.0
        %1230 = vmatpush2.msra.mxu0 0.0
        %1231 = vmatprep.subr.mxu0 0.0
        %1232 = vmatpush2.msra.mxu0 0.0
        %1233 = vmatprep.subr.mxu0 0.0
        %1234 = vmatpush2.msra.mxu0 0.0
        %1235 = vmatprep.subr.mxu0 0.0
        %1236 = vmatpush2.msra.mxu0 0.0
        %1237 = vmatprep.subr.mxu0 0.0
        %1238 = vmatpush2.msra.mxu0 0.0
        %1239 = vmatprep.subr.mxu0 0.0
        %1240 = vmatpush2.msra.mxu0 0.0
        %1241 = vmatprep.subr.mxu0 0.0
        %1242 = vmatpush2.msra.mxu0 0.0
        %1243 = vmatprep.subr.mxu0 0.0
        %1244 = vmatpush2.msra.mxu0 0.0
        %1245 = vmatprep.subr.mxu0 0.0
        %1246 = vmatpush2.msra.mxu0 0.0
        %1247 = vmatprep.subr.mxu0 0.0
        %1248 = vmatpush2.msra.mxu0 0.0
        %1249 = vmatprep.subr.mxu0 0.0
        %1250 = vmatpush2.msra.mxu0 0.0
        %1251 = vmatprep.subr.mxu0 0.0
        %1252 = vmatpush2.msra.mxu0 0.0
        %1253 = vmatprep.subr.mxu0 0.0
        %1254 = vmatpush2.msra.mxu0 0.0
        %1255 = vmatprep.subr.mxu0 0.0
        %1256 = vmatpush2.msra.mxu0 0.0
        %1257 = vmatprep.mubr.f32.mxu0 0.0
        %1258 = vmatmul.mubr.f32.gmra.mxu0 %v1054
        %v1259 = vpop.f32.mrf.mxu0
        %v1260 = vadd.f32 0.0, %v1259
        %v1261 = vpop.f32.mrf.mxu0
        %v1262 = vadd.f32 0.0, %v1261
        %1263 = vdwg.mxu0
        %v1268 = vcombine.low %v1189, %v1191
        %v1269 = vcombine.low %v1260, %v1262
        %v1271 = vunpack.c.l.s4 1983009808
        %v1272 = vunpack.c.0.s8 %v1271
        %v1273 = vlaneseq
        %v1274 = vshrl.u32 %v1273, 7
        %v1275 = vsub.s32 %v1272, %v1274
        %v1276 = vrot.slane %v1268, %v1275
        %v1278 = vunpack.c.l.s4 1983009808
        %v1279 = vunpack.c.0.s8 %v1278
        %v1280 = vlaneseq
        %v1281 = vshrl.u32 %v1280, 7
        %v1282 = vsub.s32 %v1279, %v1281
        %v1283 = vrot.slane %v1269, %v1282
        %v1284 = vcombine.low %v1276, %v1283
        %v1286 = vadd.f32 %v1057, %v1284
        %v1287 = vxor.u32 %v1286, 2147483648
        %v1288 = vmul.f32 %v1287, 1.442695
        %v1289 = vpow.pop %v1288
        %v1290 = vadd.f32 %v1289, 1.0
        %v1291 = vrcp.pop %v1290
        %v1292 = vmul.f32 1.0, %v1291
        %v1294 = vrot.slane %v1286, 2
        %v1296 = vxor.u32 %v1294, 2147483648
        %v1297 = vmul.f32 %v1296, 1.442695
        %v1298 = vpow.pop %v1297
        %v1299 = vadd.f32 %v1298, 1.0
        %v1300 = vrcp.pop %v1299
        %v1301 = vmul.f32 1.0, %v1300
        %v1302 = vrot.slane %v1286, 4
        %v1304 = vtanh.pop %v1302
        %v1305 = vrot.slane %v1286, 6
        %v1307 = vxor.u32 %v1305, 2147483648
        %v1308 = vmul.f32 %v1307, 1.442695
        %v1309 = vpow.pop %v1308
        %v1310 = vadd.f32 %v1309, 1.0
        %v1311 = vrcp.pop %v1310
        %v1312 = vmul.f32 1.0, %v1311
        %v1313 = vmul.f32 %v1301, %v1055
        %v1314 = vmul.f32 %v1292, %v1304
        %v1315 = vadd.f32 %v1313, %v1314
        %v1316 = vtanh.pop %v1315
        %v1317 = vmul.f32 %v1312, %v1316
        %s1318 = scalar_lea.vmem %s451, 2
        %v1319 = vld [vmem:[%s1318] sm:$0x3]
        %1321 = vset.pattern.permute.xlu0 0
        %1322 = vperm.xlu0 %1321, %v1319
        %v1323 = vpop.permute.xlu0 %1322
        %v1325 = vmul.f32 %v1323, %v1317
        %v1326 = vsub.f32 1.0, %v1319
        %1328 = vset.pattern.permute.xlu0 0
        %1329 = vperm.xlu0 %1328, %v1326
        %v1330 = vpop.permute.xlu0 %1329
        %v1332 = vmul.f32 %v1330, %v1054
        %v1333 = vadd.f32 %v1325, %v1332
        %1334 = vst [vmem:[#allocation2] sm:$0x3] %v1333
        %v1335 = vmul.f32 %v1323, %v1315
        %v1336 = vmul.f32 %v1330, %v1055
        %v1337 = vadd.f32 %v1335, %v1336
        %1338 = vst [vmem:[#allocation3] sm:$0x3] %v1337
        %s1339 = scalar_lea.vmem %s465, 2
        %1340 = vst [vmem:[%s1339] sm:$0x3] %v1325
        %v1341 = vld [vmem:[#allocation4] sm:$0x3]
        %v1342 = vld [vmem:[#allocation5] sm:$0x3]
        %s1343 = scalar_lea.vmem %s394, 16 [#allocation7]
        %v1344 = vld [vmem:[%s1343] sm:$0xff]
        %v1345 = vld [vmem:[%s5] sm:$0xff]
        %v1346 = vld [vmem:[%s5 + $0x8] sm:$0xff]
        %v1347 = vld [vmem:[%s5 + $0x10] sm:$0xff]
        %v1348 = vld [vmem:[%s5 + $0x18] sm:$0xff]
        %v1349 = vld [vmem:[%s5 + $0x20] sm:$0xff]
        %v1350 = vld [vmem:[%s5 + $0x28] sm:$0xff]
        %v1351 = vld [vmem:[%s5 + $0x30] sm:$0xff]
        %v1352 = vld [vmem:[%s5 + $0x38] sm:$0xff]
        %v1353 = vld [vmem:[%s5 + $0x40] sm:$0xff]
        %v1354 = vld [vmem:[%s5 + $0x48] sm:$0xff]
        %v1355 = vld [vmem:[%s5 + $0x50] sm:$0xff]
        %v1356 = vld [vmem:[%s5 + $0x58] sm:$0xff]
        %v1357 = vld [vmem:[%s5 + $0x60] sm:$0xff]
        %v1358 = vld [vmem:[%s5 + $0x68] sm:$0xff]
        %v1359 = vld [vmem:[%s5 + $0x70] sm:$0xff]
        %v1360 = vld [vmem:[%s5 + $0x78] sm:$0xff]
        %v1361 = vld [vmem:[%s5 + $0x80] sm:$0xff]
        %v1362 = vld [vmem:[%s5 + $0x88] sm:$0xff]
        %v1363 = vld [vmem:[%s5 + $0x90] sm:$0xff]
        %v1364 = vld [vmem:[%s5 + $0x98] sm:$0xff]
        %v1365 = vld [vmem:[%s5 + $0xa0] sm:$0xff]
        %v1366 = vld [vmem:[%s5 + $0xa8] sm:$0xff]
        %v1367 = vld [vmem:[%s5 + $0xb0] sm:$0xff]
        %v1368 = vld [vmem:[%s5 + $0xb8] sm:$0xff]
        %v1369 = vld [vmem:[%s5 + $0xc0] sm:$0xff]
        %v1370 = vld [vmem:[%s5 + $0xc8] sm:$0xff]
        %v1371 = vld [vmem:[%s5 + $0xd0] sm:$0xff]
        %v1372 = vld [vmem:[%s5 + $0xd8] sm:$0xff]
        %v1373 = vld [vmem:[%s5 + $0xe0] sm:$0xff]
        %v1374 = vld [vmem:[%s5 + $0xe8] sm:$0xff]
        %v1375 = vld [vmem:[%s5 + $0xf0] sm:$0xff]
        %v1376 = vld [vmem:[%s5 + $0xf8] sm:$0xff]
        %v1377 = vld [vmem:[%s5 + $0x100] sm:$0xff]
        %v1378 = vld [vmem:[%s5 + $0x108] sm:$0xff]
        %v1379 = vld [vmem:[%s5 + $0x110] sm:$0xff]
        %v1380 = vld [vmem:[%s5 + $0x118] sm:$0xff]
        %v1381 = vld [vmem:[%s5 + $0x120] sm:$0xff]
        %v1382 = vld [vmem:[%s5 + $0x128] sm:$0xff]
        %v1383 = vld [vmem:[%s5 + $0x130] sm:$0xff]
        %v1384 = vld [vmem:[%s5 + $0x138] sm:$0xff]
        %v1385 = vld [vmem:[%s5 + $0x140] sm:$0xff]
        %v1386 = vld [vmem:[%s5 + $0x148] sm:$0xff]
        %v1387 = vld [vmem:[%s5 + $0x150] sm:$0xff]
        %v1388 = vld [vmem:[%s5 + $0x158] sm:$0xff]
        %v1389 = vld [vmem:[%s5 + $0x160] sm:$0xff]
        %v1390 = vld [vmem:[%s5 + $0x168] sm:$0xff]
        %v1391 = vld [vmem:[%s5 + $0x170] sm:$0xff]
        %v1392 = vld [vmem:[%s5 + $0x178] sm:$0xff]
        %v1393 = vld [vmem:[%s5 + $0x180] sm:$0xff]
        %v1394 = vld [vmem:[%s5 + $0x188] sm:$0xff]
        %v1395 = vld [vmem:[%s5 + $0x190] sm:$0xff]
        %v1396 = vld [vmem:[%s5 + $0x198] sm:$0xff]
        %v1397 = vld [vmem:[%s5 + $0x1a0] sm:$0xff]
        %v1398 = vld [vmem:[%s5 + $0x1a8] sm:$0xff]
        %v1399 = vld [vmem:[%s5 + $0x1b0] sm:$0xff]
        %v1400 = vld [vmem:[%s5 + $0x1b8] sm:$0xff]
        %v1401 = vld [vmem:[%s5 + $0x1c0] sm:$0xff]
        %v1402 = vld [vmem:[%s5 + $0x1c8] sm:$0xff]
        %v1403 = vld [vmem:[%s5 + $0x1d0] sm:$0xff]
        %v1404 = vld [vmem:[%s5 + $0x1d8] sm:$0xff]
        %v1405 = vld [vmem:[%s5 + $0x1e0] sm:$0xff]
        %v1406 = vld [vmem:[%s5 + $0x1e8] sm:$0xff]
        %v1407 = vld [vmem:[%s5 + $0x1f0] sm:$0xff]
        %v1408 = vld [vmem:[%s5 + $0x1f8] sm:$0xff]
        %1409 = vmatprep.subr.mxu0 %v1406
        %1410 = vmatpush1.msra.mxu0 %v1405
        %1411 = vmatprep.subr.mxu0 %v1402
        %1412 = vmatpush1.msra.mxu0 %v1401
        %1413 = vmatprep.subr.mxu0 %v1398
        %1414 = vmatpush1.msra.mxu0 %v1397
        %1415 = vmatprep.subr.mxu0 %v1394
        %1416 = vmatpush1.msra.mxu0 %v1393
        %1417 = vmatprep.subr.mxu0 %v1390
        %1418 = vmatpush1.msra.mxu0 %v1389
        %1419 = vmatprep.subr.mxu0 %v1386
        %1420 = vmatpush1.msra.mxu0 %v1385
        %1421 = vmatprep.subr.mxu0 %v1382
        %1422 = vmatpush1.msra.mxu0 %v1381
        %1423 = vmatprep.subr.mxu0 %v1378
        %1424 = vmatpush1.msra.mxu0 %v1377
        %1425 = vmatprep.subr.mxu0 %v1374
        %1426 = vmatpush1.msra.mxu0 %v1373
        %1427 = vmatprep.subr.mxu0 %v1370
        %1428 = vmatpush1.msra.mxu0 %v1369
        %1429 = vmatprep.subr.mxu0 %v1366
        %1430 = vmatpush1.msra.mxu0 %v1365
        %1431 = vmatprep.subr.mxu0 %v1362
        %1432 = vmatpush1.msra.mxu0 %v1361
        %1433 = vmatprep.subr.mxu0 %v1358
        %1434 = vmatpush1.msra.mxu0 %v1357
        %1435 = vmatprep.subr.mxu0 %v1354
        %1436 = vmatpush1.msra.mxu0 %v1353
        %1437 = vmatprep.subr.mxu0 %v1350
        %1438 = vmatpush1.msra.mxu0 %v1349
        %1439 = vmatprep.subr.mxu0 %v1346
        %1440 = vmatpush1.msra.mxu0 %v1345
        %1441 = vmatprep.subr.mxu0 0.0
        %1442 = vmatpush2.msra.mxu0 0.0
        %1443 = vmatprep.subr.mxu0 0.0
        %1444 = vmatpush2.msra.mxu0 0.0
        %1445 = vmatprep.subr.mxu0 0.0
        %1446 = vmatpush2.msra.mxu0 0.0
        %1447 = vmatprep.subr.mxu0 0.0
        %1448 = vmatpush2.msra.mxu0 0.0
        %1449 = vmatprep.subr.mxu0 0.0
        %1450 = vmatpush2.msra.mxu0 0.0
        %1451 = vmatprep.subr.mxu0 0.0
        %1452 = vmatpush2.msra.mxu0 0.0
        %1453 = vmatprep.subr.mxu0 0.0
        %1454 = vmatpush2.msra.mxu0 0.0
        %1455 = vmatprep.subr.mxu0 0.0
        %1456 = vmatpush2.msra.mxu0 0.0
        %1457 = vmatprep.subr.mxu0 0.0
        %1458 = vmatpush2.msra.mxu0 0.0
        %1459 = vmatprep.subr.mxu0 0.0
        %1460 = vmatpush2.msra.mxu0 0.0
        %1461 = vmatprep.subr.mxu0 0.0
        %1462 = vmatpush2.msra.mxu0 0.0
        %1463 = vmatprep.subr.mxu0 0.0
        %1464 = vmatpush2.msra.mxu0 0.0
        %1465 = vmatprep.subr.mxu0 0.0
        %1466 = vmatpush2.msra.mxu0 0.0
        %1467 = vmatprep.subr.mxu0 0.0
        %1468 = vmatpush2.msra.mxu0 0.0
        %1469 = vmatprep.subr.mxu0 0.0
        %1470 = vmatpush2.msra.mxu0 0.0
        %1471 = vmatprep.subr.mxu0 0.0
        %1472 = vmatpush2.msra.mxu0 0.0
        %1473 = vmatprep.mubr.f32.mxu0 0.0
        %1474 = vmatmul.mubr.f32.gmra.mxu0 %v1341
        %v1475 = vpop.f32.mrf.mxu0
        %v1476 = vadd.f32 0.0, %v1475
        %v1477 = vpop.f32.mrf.mxu0
        %v1478 = vadd.f32 0.0, %v1477
        %1479 = vdwg.mxu0
        %1480 = vmatprep.subr.mxu0 %v1408
        %1481 = vmatpush1.msra.mxu0 %v1407
        %1482 = vmatprep.subr.mxu0 %v1404
        %1483 = vmatpush1.msra.mxu0 %v1403
        %1484 = vmatprep.subr.mxu0 %v1400
        %1485 = vmatpush1.msra.mxu0 %v1399
        %1486 = vmatprep.subr.mxu0 %v1396
        %1487 = vmatpush1.msra.mxu0 %v1395
        %1488 = vmatprep.subr.mxu0 %v1392
        %1489 = vmatpush1.msra.mxu0 %v1391
        %1490 = vmatprep.subr.mxu0 %v1388
        %1491 = vmatpush1.msra.mxu0 %v1387
        %1492 = vmatprep.subr.mxu0 %v1384
        %1493 = vmatpush1.msra.mxu0 %v1383
        %1494 = vmatprep.subr.mxu0 %v1380
        %1495 = vmatpush1.msra.mxu0 %v1379
        %1496 = vmatprep.subr.mxu0 %v1376
        %1497 = vmatpush1.msra.mxu0 %v1375
        %1498 = vmatprep.subr.mxu0 %v1372
        %1499 = vmatpush1.msra.mxu0 %v1371
        %1500 = vmatprep.subr.mxu0 %v1368
        %1501 = vmatpush1.msra.mxu0 %v1367
        %1502 = vmatprep.subr.mxu0 %v1364
        %1503 = vmatpush1.msra.mxu0 %v1363
        %1504 = vmatprep.subr.mxu0 %v1360
        %1505 = vmatpush1.msra.mxu0 %v1359
        %1506 = vmatprep.subr.mxu0 %v1356
        %1507 = vmatpush1.msra.mxu0 %v1355
        %1508 = vmatprep.subr.mxu0 %v1352
        %1509 = vmatpush1.msra.mxu0 %v1351
        %1510 = vmatprep.subr.mxu0 %v1348
        %1511 = vmatpush1.msra.mxu0 %v1347
        %1512 = vmatprep.subr.mxu0 0.0
        %1513 = vmatpush2.msra.mxu0 0.0
        %1514 = vmatprep.subr.mxu0 0.0
        %1515 = vmatpush2.msra.mxu0 0.0
        %1516 = vmatprep.subr.mxu0 0.0
        %1517 = vmatpush2.msra.mxu0 0.0
        %1518 = vmatprep.subr.mxu0 0.0
        %1519 = vmatpush2.msra.mxu0 0.0
        %1520 = vmatprep.subr.mxu0 0.0
        %1521 = vmatpush2.msra.mxu0 0.0
        %1522 = vmatprep.subr.mxu0 0.0
        %1523 = vmatpush2.msra.mxu0 0.0
        %1524 = vmatprep.subr.mxu0 0.0
        %1525 = vmatpush2.msra.mxu0 0.0
        %1526 = vmatprep.subr.mxu0 0.0
        %1527 = vmatpush2.msra.mxu0 0.0
        %1528 = vmatprep.subr.mxu0 0.0
        %1529 = vmatpush2.msra.mxu0 0.0
        %1530 = vmatprep.subr.mxu0 0.0
        %1531 = vmatpush2.msra.mxu0 0.0
        %1532 = vmatprep.subr.mxu0 0.0
        %1533 = vmatpush2.msra.mxu0 0.0
        %1534 = vmatprep.subr.mxu0 0.0
        %1535 = vmatpush2.msra.mxu0 0.0
        %1536 = vmatprep.subr.mxu0 0.0
        %1537 = vmatpush2.msra.mxu0 0.0
        %1538 = vmatprep.subr.mxu0 0.0
        %1539 = vmatpush2.msra.mxu0 0.0
        %1540 = vmatprep.subr.mxu0 0.0
        %1541 = vmatpush2.msra.mxu0 0.0
        %1542 = vmatprep.subr.mxu0 0.0
        %1543 = vmatpush2.msra.mxu0 0.0
        %1544 = vmatprep.mubr.f32.mxu0 0.0
        %1545 = vmatmul.mubr.f32.gmra.mxu0 %v1341
        %v1546 = vpop.f32.mrf.mxu0
        %v1547 = vadd.f32 0.0, %v1546
        %v1548 = vpop.f32.mrf.mxu0
        %v1549 = vadd.f32 0.0, %v1548
        %1550 = vdwg.mxu0
        %v1555 = vcombine.low %v1476, %v1478
        %v1556 = vcombine.low %v1547, %v1549
        %v1558 = vunpack.c.l.s4 1983009808
        %v1559 = vunpack.c.0.s8 %v1558
        %v1560 = vlaneseq
        %v1561 = vshrl.u32 %v1560, 7
        %v1562 = vsub.s32 %v1559, %v1561
        %v1563 = vrot.slane %v1555, %v1562
        %v1565 = vunpack.c.l.s4 1983009808
        %v1566 = vunpack.c.0.s8 %v1565
        %v1567 = vlaneseq
        %v1568 = vshrl.u32 %v1567, 7
        %v1569 = vsub.s32 %v1566, %v1568
        %v1570 = vrot.slane %v1556, %v1569
        %v1571 = vcombine.low %v1563, %v1570
        %v1573 = vadd.f32 %v1344, %v1571
        %v1574 = vxor.u32 %v1573, 2147483648
        %v1575 = vmul.f32 %v1574, 1.442695
        %v1576 = vpow.pop %v1575
        %v1577 = vadd.f32 %v1576, 1.0
        %v1578 = vrcp.pop %v1577
        %v1579 = vmul.f32 1.0, %v1578
        %v1581 = vrot.slane %v1573, 2
        %v1583 = vxor.u32 %v1581, 2147483648
        %v1584 = vmul.f32 %v1583, 1.442695
        %v1585 = vpow.pop %v1584
        %v1586 = vadd.f32 %v1585, 1.0
        %v1587 = vrcp.pop %v1586
        %v1588 = vmul.f32 1.0, %v1587
        %v1589 = vrot.slane %v1573, 4
        %v1591 = vtanh.pop %v1589
        %v1592 = vrot.slane %v1573, 6
        %v1594 = vxor.u32 %v1592, 2147483648
        %v1595 = vmul.f32 %v1594, 1.442695
        %v1596 = vpow.pop %v1595
        %v1597 = vadd.f32 %v1596, 1.0
        %v1598 = vrcp.pop %v1597
        %v1599 = vmul.f32 1.0, %v1598
        %v1600 = vmul.f32 %v1588, %v1342
        %v1601 = vmul.f32 %v1579, %v1591
        %v1602 = vadd.f32 %v1600, %v1601
        %v1603 = vtanh.pop %v1602
        %v1604 = vmul.f32 %v1599, %v1603
        %s1605 = scalar_lea.vmem %s458, 4
        %v1606 = vld [vmem:[%s1605] sm:$0x3]
        %1608 = vset.pattern.permute.xlu0 0
        %1609 = vperm.xlu0 %1608, %v1606
        %v1610 = vpop.permute.xlu0 %1609
        %v1612 = vmul.f32 %v1610, %v1604
        %v1613 = vsub.f32 1.0, %v1606
        %1615 = vset.pattern.permute.xlu0 0
        %1616 = vperm.xlu0 %1615, %v1613
        %v1617 = vpop.permute.xlu0 %1616
        %v1619 = vmul.f32 %v1617, %v1341
        %v1620 = vadd.f32 %v1612, %v1619
        %1621 = vst [vmem:[#allocation4] sm:$0x3] %v1620
        %v1622 = vmul.f32 %v1610, %v1602
        %v1623 = vmul.f32 %v1617, %v1342
        %v1624 = vadd.f32 %v1622, %v1623
        %1625 = vst [vmem:[#allocation5] sm:$0x3] %v1624
        %s1626 = scalar_lea.vmem %s472, 4
        %1627 = vst [vmem:[%s1626] sm:$0x3] %v1612
        %v1628 = vld [vmem:[#allocation2] sm:$0x3]
        %v1629 = vld [vmem:[#allocation3] sm:$0x3]
        %s1630 = scalar_lea.vmem %s387, 16 [#allocation6]
        %v1631 = vld [vmem:[%s1630] sm:$0xff]
        %v1632 = vld [vmem:[%s4] sm:$0xff]
        %v1633 = vld [vmem:[%s4 + $0x8] sm:$0xff]
        %v1634 = vld [vmem:[%s4 + $0x10] sm:$0xff]
        %v1635 = vld [vmem:[%s4 + $0x18] sm:$0xff]
        %v1636 = vld [vmem:[%s4 + $0x20] sm:$0xff]
        %v1637 = vld [vmem:[%s4 + $0x28] sm:$0xff]
        %v1638 = vld [vmem:[%s4 + $0x30] sm:$0xff]
        %v1639 = vld [vmem:[%s4 + $0x38] sm:$0xff]
        %v1640 = vld [vmem:[%s4 + $0x40] sm:$0xff]
        %v1641 = vld [vmem:[%s4 + $0x48] sm:$0xff]
        %v1642 = vld [vmem:[%s4 + $0x50] sm:$0xff]
        %v1643 = vld [vmem:[%s4 + $0x58] sm:$0xff]
        %v1644 = vld [vmem:[%s4 + $0x60] sm:$0xff]
        %v1645 = vld [vmem:[%s4 + $0x68] sm:$0xff]
        %v1646 = vld [vmem:[%s4 + $0x70] sm:$0xff]
        %v1647 = vld [vmem:[%s4 + $0x78] sm:$0xff]
        %v1648 = vld [vmem:[%s4 + $0x80] sm:$0xff]
        %v1649 = vld [vmem:[%s4 + $0x88] sm:$0xff]
        %v1650 = vld [vmem:[%s4 + $0x90] sm:$0xff]
        %v1651 = vld [vmem:[%s4 + $0x98] sm:$0xff]
        %v1652 = vld [vmem:[%s4 + $0xa0] sm:$0xff]
        %v1653 = vld [vmem:[%s4 + $0xa8] sm:$0xff]
        %v1654 = vld [vmem:[%s4 + $0xb0] sm:$0xff]
        %v1655 = vld [vmem:[%s4 + $0xb8] sm:$0xff]
        %v1656 = vld [vmem:[%s4 + $0xc0] sm:$0xff]
        %v1657 = vld [vmem:[%s4 + $0xc8] sm:$0xff]
        %v1658 = vld [vmem:[%s4 + $0xd0] sm:$0xff]
        %v1659 = vld [vmem:[%s4 + $0xd8] sm:$0xff]
        %v1660 = vld [vmem:[%s4 + $0xe0] sm:$0xff]
        %v1661 = vld [vmem:[%s4 + $0xe8] sm:$0xff]
        %v1662 = vld [vmem:[%s4 + $0xf0] sm:$0xff]
        %v1663 = vld [vmem:[%s4 + $0xf8] sm:$0xff]
        %v1664 = vld [vmem:[%s4 + $0x100] sm:$0xff]
        %v1665 = vld [vmem:[%s4 + $0x108] sm:$0xff]
        %v1666 = vld [vmem:[%s4 + $0x110] sm:$0xff]
        %v1667 = vld [vmem:[%s4 + $0x118] sm:$0xff]
        %v1668 = vld [vmem:[%s4 + $0x120] sm:$0xff]
        %v1669 = vld [vmem:[%s4 + $0x128] sm:$0xff]
        %v1670 = vld [vmem:[%s4 + $0x130] sm:$0xff]
        %v1671 = vld [vmem:[%s4 + $0x138] sm:$0xff]
        %v1672 = vld [vmem:[%s4 + $0x140] sm:$0xff]
        %v1673 = vld [vmem:[%s4 + $0x148] sm:$0xff]
        %v1674 = vld [vmem:[%s4 + $0x150] sm:$0xff]
        %v1675 = vld [vmem:[%s4 + $0x158] sm:$0xff]
        %v1676 = vld [vmem:[%s4 + $0x160] sm:$0xff]
        %v1677 = vld [vmem:[%s4 + $0x168] sm:$0xff]
        %v1678 = vld [vmem:[%s4 + $0x170] sm:$0xff]
        %v1679 = vld [vmem:[%s4 + $0x178] sm:$0xff]
        %v1680 = vld [vmem:[%s4 + $0x180] sm:$0xff]
        %v1681 = vld [vmem:[%s4 + $0x188] sm:$0xff]
        %v1682 = vld [vmem:[%s4 + $0x190] sm:$0xff]
        %v1683 = vld [vmem:[%s4 + $0x198] sm:$0xff]
        %v1684 = vld [vmem:[%s4 + $0x1a0] sm:$0xff]
        %v1685 = vld [vmem:[%s4 + $0x1a8] sm:$0xff]
        %v1686 = vld [vmem:[%s4 + $0x1b0] sm:$0xff]
        %v1687 = vld [vmem:[%s4 + $0x1b8] sm:$0xff]
        %v1688 = vld [vmem:[%s4 + $0x1c0] sm:$0xff]
        %v1689 = vld [vmem:[%s4 + $0x1c8] sm:$0xff]
        %v1690 = vld [vmem:[%s4 + $0x1d0] sm:$0xff]
        %v1691 = vld [vmem:[%s4 + $0x1d8] sm:$0xff]
        %v1692 = vld [vmem:[%s4 + $0x1e0] sm:$0xff]
        %v1693 = vld [vmem:[%s4 + $0x1e8] sm:$0xff]
        %v1694 = vld [vmem:[%s4 + $0x1f0] sm:$0xff]
        %v1695 = vld [vmem:[%s4 + $0x1f8] sm:$0xff]
        %1696 = vmatprep.subr.mxu0 %v1693
        %1697 = vmatpush1.msra.mxu0 %v1692
        %1698 = vmatprep.subr.mxu0 %v1689
        %1699 = vmatpush1.msra.mxu0 %v1688
        %1700 = vmatprep.subr.mxu0 %v1685
        %1701 = vmatpush1.msra.mxu0 %v1684
        %1702 = vmatprep.subr.mxu0 %v1681
        %1703 = vmatpush1.msra.mxu0 %v1680
        %1704 = vmatprep.subr.mxu0 %v1677
        %1705 = vmatpush1.msra.mxu0 %v1676
        %1706 = vmatprep.subr.mxu0 %v1673
        %1707 = vmatpush1.msra.mxu0 %v1672
        %1708 = vmatprep.subr.mxu0 %v1669
        %1709 = vmatpush1.msra.mxu0 %v1668
        %1710 = vmatprep.subr.mxu0 %v1665
        %1711 = vmatpush1.msra.mxu0 %v1664
        %1712 = vmatprep.subr.mxu0 %v1661
        %1713 = vmatpush1.msra.mxu0 %v1660
        %1714 = vmatprep.subr.mxu0 %v1657
        %1715 = vmatpush1.msra.mxu0 %v1656
        %1716 = vmatprep.subr.mxu0 %v1653
        %1717 = vmatpush1.msra.mxu0 %v1652
        %1718 = vmatprep.subr.mxu0 %v1649
        %1719 = vmatpush1.msra.mxu0 %v1648
        %1720 = vmatprep.subr.mxu0 %v1645
        %1721 = vmatpush1.msra.mxu0 %v1644
        %1722 = vmatprep.subr.mxu0 %v1641
        %1723 = vmatpush1.msra.mxu0 %v1640
        %1724 = vmatprep.subr.mxu0 %v1637
        %1725 = vmatpush1.msra.mxu0 %v1636
        %1726 = vmatprep.subr.mxu0 %v1633
        %1727 = vmatpush1.msra.mxu0 %v1632
        %1728 = vmatprep.subr.mxu0 0.0
        %1729 = vmatpush2.msra.mxu0 0.0
        %1730 = vmatprep.subr.mxu0 0.0
        %1731 = vmatpush2.msra.mxu0 0.0
        %1732 = vmatprep.subr.mxu0 0.0
        %1733 = vmatpush2.msra.mxu0 0.0
        %1734 = vmatprep.subr.mxu0 0.0
        %1735 = vmatpush2.msra.mxu0 0.0
        %1736 = vmatprep.subr.mxu0 0.0
        %1737 = vmatpush2.msra.mxu0 0.0
        %1738 = vmatprep.subr.mxu0 0.0
        %1739 = vmatpush2.msra.mxu0 0.0
        %1740 = vmatprep.subr.mxu0 0.0
        %1741 = vmatpush2.msra.mxu0 0.0
        %1742 = vmatprep.subr.mxu0 0.0
        %1743 = vmatpush2.msra.mxu0 0.0
        %1744 = vmatprep.subr.mxu0 0.0
        %1745 = vmatpush2.msra.mxu0 0.0
        %1746 = vmatprep.subr.mxu0 0.0
        %1747 = vmatpush2.msra.mxu0 0.0
        %1748 = vmatprep.subr.mxu0 0.0
        %1749 = vmatpush2.msra.mxu0 0.0
        %1750 = vmatprep.subr.mxu0 0.0
        %1751 = vmatpush2.msra.mxu0 0.0
        %1752 = vmatprep.subr.mxu0 0.0
        %1753 = vmatpush2.msra.mxu0 0.0
        %1754 = vmatprep.subr.mxu0 0.0
        %1755 = vmatpush2.msra.mxu0 0.0
        %1756 = vmatprep.subr.mxu0 0.0
        %1757 = vmatpush2.msra.mxu0 0.0
        %1758 = vmatprep.subr.mxu0 0.0
        %1759 = vmatpush2.msra.mxu0 0.0
        %1760 = vmatprep.mubr.f32.mxu0 0.0
        %1761 = vmatmul.mubr.f32.gmra.mxu0 %v1628
        %v1762 = vpop.f32.mrf.mxu0
        %v1763 = vadd.f32 0.0, %v1762
        %v1764 = vpop.f32.mrf.mxu0
        %v1765 = vadd.f32 0.0, %v1764
        %1766 = vdwg.mxu0
        %1767 = vmatprep.subr.mxu0 %v1695
        %1768 = vmatpush1.msra.mxu0 %v1694
        %1769 = vmatprep.subr.mxu0 %v1691
        %1770 = vmatpush1.msra.mxu0 %v1690
        %1771 = vmatprep.subr.mxu0 %v1687
        %1772 = vmatpush1.msra.mxu0 %v1686
        %1773 = vmatprep.subr.mxu0 %v1683
        %1774 = vmatpush1.msra.mxu0 %v1682
        %1775 = vmatprep.subr.mxu0 %v1679
        %1776 = vmatpush1.msra.mxu0 %v1678
        %1777 = vmatprep.subr.mxu0 %v1675
        %1778 = vmatpush1.msra.mxu0 %v1674
        %1779 = vmatprep.subr.mxu0 %v1671
        %1780 = vmatpush1.msra.mxu0 %v1670
        %1781 = vmatprep.subr.mxu0 %v1667
        %1782 = vmatpush1.msra.mxu0 %v1666
        %1783 = vmatprep.subr.mxu0 %v1663
        %1784 = vmatpush1.msra.mxu0 %v1662
        %1785 = vmatprep.subr.mxu0 %v1659
        %1786 = vmatpush1.msra.mxu0 %v1658
        %1787 = vmatprep.subr.mxu0 %v1655
        %1788 = vmatpush1.msra.mxu0 %v1654
        %1789 = vmatprep.subr.mxu0 %v1651
        %1790 = vmatpush1.msra.mxu0 %v1650
        %1791 = vmatprep.subr.mxu0 %v1647
        %1792 = vmatpush1.msra.mxu0 %v1646
        %1793 = vmatprep.subr.mxu0 %v1643
        %1794 = vmatpush1.msra.mxu0 %v1642
        %1795 = vmatprep.subr.mxu0 %v1639
        %1796 = vmatpush1.msra.mxu0 %v1638
        %1797 = vmatprep.subr.mxu0 %v1635
        %1798 = vmatpush1.msra.mxu0 %v1634
        %1799 = vmatprep.subr.mxu0 0.0
        %1800 = vmatpush2.msra.mxu0 0.0
        %1801 = vmatprep.subr.mxu0 0.0
        %1802 = vmatpush2.msra.mxu0 0.0
        %1803 = vmatprep.subr.mxu0 0.0
        %1804 = vmatpush2.msra.mxu0 0.0
        %1805 = vmatprep.subr.mxu0 0.0
        %1806 = vmatpush2.msra.mxu0 0.0
        %1807 = vmatprep.subr.mxu0 0.0
        %1808 = vmatpush2.msra.mxu0 0.0
        %1809 = vmatprep.subr.mxu0 0.0
        %1810 = vmatpush2.msra.mxu0 0.0
        %1811 = vmatprep.subr.mxu0 0.0
        %1812 = vmatpush2.msra.mxu0 0.0
        %1813 = vmatprep.subr.mxu0 0.0
        %1814 = vmatpush2.msra.mxu0 0.0
        %1815 = vmatprep.subr.mxu0 0.0
        %1816 = vmatpush2.msra.mxu0 0.0
        %1817 = vmatprep.subr.mxu0 0.0
        %1818 = vmatpush2.msra.mxu0 0.0
        %1819 = vmatprep.subr.mxu0 0.0
        %1820 = vmatpush2.msra.mxu0 0.0
        %1821 = vmatprep.subr.mxu0 0.0
        %1822 = vmatpush2.msra.mxu0 0.0
        %1823 = vmatprep.subr.mxu0 0.0
        %1824 = vmatpush2.msra.mxu0 0.0
        %1825 = vmatprep.subr.mxu0 0.0
        %1826 = vmatpush2.msra.mxu0 0.0
        %1827 = vmatprep.subr.mxu0 0.0
        %1828 = vmatpush2.msra.mxu0 0.0
        %1829 = vmatprep.subr.mxu0 0.0
        %1830 = vmatpush2.msra.mxu0 0.0
        %1831 = vmatprep.mubr.f32.mxu0 0.0
        %1832 = vmatmul.mubr.f32.gmra.mxu0 %v1628
        %v1833 = vpop.f32.mrf.mxu0
        %v1834 = vadd.f32 0.0, %v1833
        %v1835 = vpop.f32.mrf.mxu0
        %v1836 = vadd.f32 0.0, %v1835
        %1837 = vdwg.mxu0
        %v1842 = vcombine.low %v1763, %v1765
        %v1843 = vcombine.low %v1834, %v1836
        %v1845 = vunpack.c.l.s4 1983009808
        %v1846 = vunpack.c.0.s8 %v1845
        %v1847 = vlaneseq
        %v1848 = vshrl.u32 %v1847, 7
        %v1849 = vsub.s32 %v1846, %v1848
        %v1850 = vrot.slane %v1842, %v1849
        %v1852 = vunpack.c.l.s4 1983009808
        %v1853 = vunpack.c.0.s8 %v1852
        %v1854 = vlaneseq
        %v1855 = vshrl.u32 %v1854, 7
        %v1856 = vsub.s32 %v1853, %v1855
        %v1857 = vrot.slane %v1843, %v1856
        %v1858 = vcombine.low %v1850, %v1857
        %v1860 = vadd.f32 %v1631, %v1858
        %v1861 = vxor.u32 %v1860, 2147483648
        %v1862 = vmul.f32 %v1861, 1.442695
        %v1863 = vpow.pop %v1862
        %v1864 = vadd.f32 %v1863, 1.0
        %v1865 = vrcp.pop %v1864
        %v1866 = vmul.f32 1.0, %v1865
        %v1868 = vrot.slane %v1860, 2
        %v1870 = vxor.u32 %v1868, 2147483648
        %v1871 = vmul.f32 %v1870, 1.442695
        %v1872 = vpow.pop %v1871
        %v1873 = vadd.f32 %v1872, 1.0
        %v1874 = vrcp.pop %v1873
        %v1875 = vmul.f32 1.0, %v1874
        %v1876 = vrot.slane %v1860, 4
        %v1878 = vtanh.pop %v1876
        %v1879 = vrot.slane %v1860, 6
        %v1881 = vxor.u32 %v1879, 2147483648
        %v1882 = vmul.f32 %v1881, 1.442695
        %v1883 = vpow.pop %v1882
        %v1884 = vadd.f32 %v1883, 1.0
        %v1885 = vrcp.pop %v1884
        %v1886 = vmul.f32 1.0, %v1885
        %v1887 = vmul.f32 %v1875, %v1629
        %v1888 = vmul.f32 %v1866, %v1878
        %v1889 = vadd.f32 %v1887, %v1888
        %v1890 = vtanh.pop %v1889
        %v1891 = vmul.f32 %v1886, %v1890
        %s1892 = scalar_lea.vmem %s451, 4
        %v1893 = vld [vmem:[%s1892] sm:$0x3]
        %1895 = vset.pattern.permute.xlu0 0
        %1896 = vperm.xlu0 %1895, %v1893
        %v1897 = vpop.permute.xlu0 %1896
        %v1899 = vmul.f32 %v1897, %v1891
        %v1900 = vsub.f32 1.0, %v1893
        %1902 = vset.pattern.permute.xlu0 0
        %1903 = vperm.xlu0 %1902, %v1900
        %v1904 = vpop.permute.xlu0 %1903
        %v1906 = vmul.f32 %v1904, %v1628
        %v1907 = vadd.f32 %v1899, %v1906
        %1908 = vst [vmem:[#allocation2] sm:$0x3] %v1907
        %v1909 = vmul.f32 %v1897, %v1889
        %v1910 = vmul.f32 %v1904, %v1629
        %v1911 = vadd.f32 %v1909, %v1910
        %1912 = vst [vmem:[#allocation3] sm:$0x3] %v1911
        %s1913 = scalar_lea.vmem %s465, 4
        %1914 = vst [vmem:[%s1913] sm:$0x3] %v1899
        %v1915 = vld [vmem:[#allocation4] sm:$0x3]
        %v1916 = vld [vmem:[#allocation5] sm:$0x3]
        %s1917 = scalar_lea.vmem %s394, 8 [#allocation7]
        %v1918 = vld [vmem:[%s1917] sm:$0xff]
        %v1919 = vld [vmem:[%s5] sm:$0xff]
        %v1920 = vld [vmem:[%s5 + $0x8] sm:$0xff]
        %v1921 = vld [vmem:[%s5 + $0x10] sm:$0xff]
        %v1922 = vld [vmem:[%s5 + $0x18] sm:$0xff]
        %v1923 = vld [vmem:[%s5 + $0x20] sm:$0xff]
        %v1924 = vld [vmem:[%s5 + $0x28] sm:$0xff]
        %v1925 = vld [vmem:[%s5 + $0x30] sm:$0xff]
        %v1926 = vld [vmem:[%s5 + $0x38] sm:$0xff]
        %v1927 = vld [vmem:[%s5 + $0x40] sm:$0xff]
        %v1928 = vld [vmem:[%s5 + $0x48] sm:$0xff]
        %v1929 = vld [vmem:[%s5 + $0x50] sm:$0xff]
        %v1930 = vld [vmem:[%s5 + $0x58] sm:$0xff]
        %v1931 = vld [vmem:[%s5 + $0x60] sm:$0xff]
        %v1932 = vld [vmem:[%s5 + $0x68] sm:$0xff]
        %v1933 = vld [vmem:[%s5 + $0x70] sm:$0xff]
        %v1934 = vld [vmem:[%s5 + $0x78] sm:$0xff]
        %v1935 = vld [vmem:[%s5 + $0x80] sm:$0xff]
        %v1936 = vld [vmem:[%s5 + $0x88] sm:$0xff]
        %v1937 = vld [vmem:[%s5 + $0x90] sm:$0xff]
        %v1938 = vld [vmem:[%s5 + $0x98] sm:$0xff]
        %v1939 = vld [vmem:[%s5 + $0xa0] sm:$0xff]
        %v1940 = vld [vmem:[%s5 + $0xa8] sm:$0xff]
        %v1941 = vld [vmem:[%s5 + $0xb0] sm:$0xff]
        %v1942 = vld [vmem:[%s5 + $0xb8] sm:$0xff]
        %v1943 = vld [vmem:[%s5 + $0xc0] sm:$0xff]
        %v1944 = vld [vmem:[%s5 + $0xc8] sm:$0xff]
        %v1945 = vld [vmem:[%s5 + $0xd0] sm:$0xff]
        %v1946 = vld [vmem:[%s5 + $0xd8] sm:$0xff]
        %v1947 = vld [vmem:[%s5 + $0xe0] sm:$0xff]
        %v1948 = vld [vmem:[%s5 + $0xe8] sm:$0xff]
        %v1949 = vld [vmem:[%s5 + $0xf0] sm:$0xff]
        %v1950 = vld [vmem:[%s5 + $0xf8] sm:$0xff]
        %v1951 = vld [vmem:[%s5 + $0x100] sm:$0xff]
        %v1952 = vld [vmem:[%s5 + $0x108] sm:$0xff]
        %v1953 = vld [vmem:[%s5 + $0x110] sm:$0xff]
        %v1954 = vld [vmem:[%s5 + $0x118] sm:$0xff]
        %v1955 = vld [vmem:[%s5 + $0x120] sm:$0xff]
        %v1956 = vld [vmem:[%s5 + $0x128] sm:$0xff]
        %v1957 = vld [vmem:[%s5 + $0x130] sm:$0xff]
        %v1958 = vld [vmem:[%s5 + $0x138] sm:$0xff]
        %v1959 = vld [vmem:[%s5 + $0x140] sm:$0xff]
        %v1960 = vld [vmem:[%s5 + $0x148] sm:$0xff]
        %v1961 = vld [vmem:[%s5 + $0x150] sm:$0xff]
        %v1962 = vld [vmem:[%s5 + $0x158] sm:$0xff]
        %v1963 = vld [vmem:[%s5 + $0x160] sm:$0xff]
        %v1964 = vld [vmem:[%s5 + $0x168] sm:$0xff]
        %v1965 = vld [vmem:[%s5 + $0x170] sm:$0xff]
        %v1966 = vld [vmem:[%s5 + $0x178] sm:$0xff]
        %v1967 = vld [vmem:[%s5 + $0x180] sm:$0xff]
        %v1968 = vld [vmem:[%s5 + $0x188] sm:$0xff]
        %v1969 = vld [vmem:[%s5 + $0x190] sm:$0xff]
        %v1970 = vld [vmem:[%s5 + $0x198] sm:$0xff]
        %v1971 = vld [vmem:[%s5 + $0x1a0] sm:$0xff]
        %v1972 = vld [vmem:[%s5 + $0x1a8] sm:$0xff]
        %v1973 = vld [vmem:[%s5 + $0x1b0] sm:$0xff]
        %v1974 = vld [vmem:[%s5 + $0x1b8] sm:$0xff]
        %v1975 = vld [vmem:[%s5 + $0x1c0] sm:$0xff]
        %v1976 = vld [vmem:[%s5 + $0x1c8] sm:$0xff]
        %v1977 = vld [vmem:[%s5 + $0x1d0] sm:$0xff]
        %v1978 = vld [vmem:[%s5 + $0x1d8] sm:$0xff]
        %v1979 = vld [vmem:[%s5 + $0x1e0] sm:$0xff]
        %v1980 = vld [vmem:[%s5 + $0x1e8] sm:$0xff]
        %v1981 = vld [vmem:[%s5 + $0x1f0] sm:$0xff]
        %v1982 = vld [vmem:[%s5 + $0x1f8] sm:$0xff]
        %1983 = vmatprep.subr.mxu0 %v1980
        %1984 = vmatpush1.msra.mxu0 %v1979
        %1985 = vmatprep.subr.mxu0 %v1976
        %1986 = vmatpush1.msra.mxu0 %v1975
        %1987 = vmatprep.subr.mxu0 %v1972
        %1988 = vmatpush1.msra.mxu0 %v1971
        %1989 = vmatprep.subr.mxu0 %v1968
        %1990 = vmatpush1.msra.mxu0 %v1967
        %1991 = vmatprep.subr.mxu0 %v1964
        %1992 = vmatpush1.msra.mxu0 %v1963
        %1993 = vmatprep.subr.mxu0 %v1960
        %1994 = vmatpush1.msra.mxu0 %v1959
        %1995 = vmatprep.subr.mxu0 %v1956
        %1996 = vmatpush1.msra.mxu0 %v1955
        %1997 = vmatprep.subr.mxu0 %v1952
        %1998 = vmatpush1.msra.mxu0 %v1951
        %1999 = vmatprep.subr.mxu0 %v1948
        %2000 = vmatpush1.msra.mxu0 %v1947
        %2001 = vmatprep.subr.mxu0 %v1944
        %2002 = vmatpush1.msra.mxu0 %v1943
        %2003 = vmatprep.subr.mxu0 %v1940
        %2004 = vmatpush1.msra.mxu0 %v1939
        %2005 = vmatprep.subr.mxu0 %v1936
        %2006 = vmatpush1.msra.mxu0 %v1935
        %2007 = vmatprep.subr.mxu0 %v1932
        %2008 = vmatpush1.msra.mxu0 %v1931
        %2009 = vmatprep.subr.mxu0 %v1928
        %2010 = vmatpush1.msra.mxu0 %v1927
        %2011 = vmatprep.subr.mxu0 %v1924
        %2012 = vmatpush1.msra.mxu0 %v1923
        %2013 = vmatprep.subr.mxu0 %v1920
        %2014 = vmatpush1.msra.mxu0 %v1919
        %2015 = vmatprep.subr.mxu0 0.0
        %2016 = vmatpush2.msra.mxu0 0.0
        %2017 = vmatprep.subr.mxu0 0.0
        %2018 = vmatpush2.msra.mxu0 0.0
        %2019 = vmatprep.subr.mxu0 0.0
        %2020 = vmatpush2.msra.mxu0 0.0
        %2021 = vmatprep.subr.mxu0 0.0
        %2022 = vmatpush2.msra.mxu0 0.0
        %2023 = vmatprep.subr.mxu0 0.0
        %2024 = vmatpush2.msra.mxu0 0.0
        %2025 = vmatprep.subr.mxu0 0.0
        %2026 = vmatpush2.msra.mxu0 0.0
        %2027 = vmatprep.subr.mxu0 0.0
        %2028 = vmatpush2.msra.mxu0 0.0
        %2029 = vmatprep.subr.mxu0 0.0
        %2030 = vmatpush2.msra.mxu0 0.0
        %2031 = vmatprep.subr.mxu0 0.0
        %2032 = vmatpush2.msra.mxu0 0.0
        %2033 = vmatprep.subr.mxu0 0.0
        %2034 = vmatpush2.msra.mxu0 0.0
        %2035 = vmatprep.subr.mxu0 0.0
        %2036 = vmatpush2.msra.mxu0 0.0
        %2037 = vmatprep.subr.mxu0 0.0
        %2038 = vmatpush2.msra.mxu0 0.0
        %2039 = vmatprep.subr.mxu0 0.0
        %2040 = vmatpush2.msra.mxu0 0.0
        %2041 = vmatprep.subr.mxu0 0.0
        %2042 = vmatpush2.msra.mxu0 0.0
        %2043 = vmatprep.subr.mxu0 0.0
        %2044 = vmatpush2.msra.mxu0 0.0
        %2045 = vmatprep.subr.mxu0 0.0
        %2046 = vmatpush2.msra.mxu0 0.0
        %2047 = vmatprep.mubr.f32.mxu0 0.0
        %2048 = vmatmul.mubr.f32.gmra.mxu0 %v1915
        %v2049 = vpop.f32.mrf.mxu0
        %v2050 = vadd.f32 0.0, %v2049
        %v2051 = vpop.f32.mrf.mxu0
        %v2052 = vadd.f32 0.0, %v2051
        %2053 = vdwg.mxu0
        %2054 = vmatprep.subr.mxu0 %v1982
        %2055 = vmatpush1.msra.mxu0 %v1981
        %2056 = vmatprep.subr.mxu0 %v1978
        %2057 = vmatpush1.msra.mxu0 %v1977
        %2058 = vmatprep.subr.mxu0 %v1974
        %2059 = vmatpush1.msra.mxu0 %v1973
        %2060 = vmatprep.subr.mxu0 %v1970
        %2061 = vmatpush1.msra.mxu0 %v1969
        %2062 = vmatprep.subr.mxu0 %v1966
        %2063 = vmatpush1.msra.mxu0 %v1965
        %2064 = vmatprep.subr.mxu0 %v1962
        %2065 = vmatpush1.msra.mxu0 %v1961
        %2066 = vmatprep.subr.mxu0 %v1958
        %2067 = vmatpush1.msra.mxu0 %v1957
        %2068 = vmatprep.subr.mxu0 %v1954
        %2069 = vmatpush1.msra.mxu0 %v1953
        %2070 = vmatprep.subr.mxu0 %v1950
        %2071 = vmatpush1.msra.mxu0 %v1949
        %2072 = vmatprep.subr.mxu0 %v1946
        %2073 = vmatpush1.msra.mxu0 %v1945
        %2074 = vmatprep.subr.mxu0 %v1942
        %2075 = vmatpush1.msra.mxu0 %v1941
        %2076 = vmatprep.subr.mxu0 %v1938
        %2077 = vmatpush1.msra.mxu0 %v1937
        %2078 = vmatprep.subr.mxu0 %v1934
        %2079 = vmatpush1.msra.mxu0 %v1933
        %2080 = vmatprep.subr.mxu0 %v1930
        %2081 = vmatpush1.msra.mxu0 %v1929
        %2082 = vmatprep.subr.mxu0 %v1926
        %2083 = vmatpush1.msra.mxu0 %v1925
        %2084 = vmatprep.subr.mxu0 %v1922
        %2085 = vmatpush1.msra.mxu0 %v1921
        %2086 = vmatprep.subr.mxu0 0.0
        %2087 = vmatpush2.msra.mxu0 0.0
        %2088 = vmatprep.subr.mxu0 0.0
        %2089 = vmatpush2.msra.mxu0 0.0
        %2090 = vmatprep.subr.mxu0 0.0
        %2091 = vmatpush2.msra.mxu0 0.0
        %2092 = vmatprep.subr.mxu0 0.0
        %2093 = vmatpush2.msra.mxu0 0.0
        %2094 = vmatprep.subr.mxu0 0.0
        %2095 = vmatpush2.msra.mxu0 0.0
        %2096 = vmatprep.subr.mxu0 0.0
        %2097 = vmatpush2.msra.mxu0 0.0
        %2098 = vmatprep.subr.mxu0 0.0
        %2099 = vmatpush2.msra.mxu0 0.0
        %2100 = vmatprep.subr.mxu0 0.0
        %2101 = vmatpush2.msra.mxu0 0.0
        %2102 = vmatprep.subr.mxu0 0.0
        %2103 = vmatpush2.msra.mxu0 0.0
        %2104 = vmatprep.subr.mxu0 0.0
        %2105 = vmatpush2.msra.mxu0 0.0
        %2106 = vmatprep.subr.mxu0 0.0
        %2107 = vmatpush2.msra.mxu0 0.0
        %2108 = vmatprep.subr.mxu0 0.0
        %2109 = vmatpush2.msra.mxu0 0.0
        %2110 = vmatprep.subr.mxu0 0.0
        %2111 = vmatpush2.msra.mxu0 0.0
        %2112 = vmatprep.subr.mxu0 0.0
        %2113 = vmatpush2.msra.mxu0 0.0
        %2114 = vmatprep.subr.mxu0 0.0
        %2115 = vmatpush2.msra.mxu0 0.0
        %2116 = vmatprep.subr.mxu0 0.0
        %2117 = vmatpush2.msra.mxu0 0.0
        %2118 = vmatprep.mubr.f32.mxu0 0.0
        %2119 = vmatmul.mubr.f32.gmra.mxu0 %v1915
        %v2120 = vpop.f32.mrf.mxu0
        %v2121 = vadd.f32 0.0, %v2120
        %v2122 = vpop.f32.mrf.mxu0
        %v2123 = vadd.f32 0.0, %v2122
        %2124 = vdwg.mxu0
        %v2129 = vcombine.low %v2050, %v2052
        %v2130 = vcombine.low %v2121, %v2123
        %v2132 = vunpack.c.l.s4 1983009808
        %v2133 = vunpack.c.0.s8 %v2132
        %v2134 = vlaneseq
        %v2135 = vshrl.u32 %v2134, 7
        %v2136 = vsub.s32 %v2133, %v2135
        %v2137 = vrot.slane %v2129, %v2136
        %v2139 = vunpack.c.l.s4 1983009808
        %v2140 = vunpack.c.0.s8 %v2139
        %v2141 = vlaneseq
        %v2142 = vshrl.u32 %v2141, 7
        %v2143 = vsub.s32 %v2140, %v2142
        %v2144 = vrot.slane %v2130, %v2143
        %v2145 = vcombine.low %v2137, %v2144
        %v2147 = vadd.f32 %v1918, %v2145
        %v2148 = vxor.u32 %v2147, 2147483648
        %v2149 = vmul.f32 %v2148, 1.442695
        %v2150 = vpow.pop %v2149
        %v2151 = vadd.f32 %v2150, 1.0
        %v2152 = vrcp.pop %v2151
        %v2153 = vmul.f32 1.0, %v2152
        %v2155 = vrot.slane %v2147, 2
        %v2157 = vxor.u32 %v2155, 2147483648
        %v2158 = vmul.f32 %v2157, 1.442695
        %v2159 = vpow.pop %v2158
        %v2160 = vadd.f32 %v2159, 1.0
        %v2161 = vrcp.pop %v2160
        %v2162 = vmul.f32 1.0, %v2161
        %v2163 = vrot.slane %v2147, 4
        %v2165 = vtanh.pop %v2163
        %v2166 = vrot.slane %v2147, 6
        %v2168 = vxor.u32 %v2166, 2147483648
        %v2169 = vmul.f32 %v2168, 1.442695
        %v2170 = vpow.pop %v2169
        %v2171 = vadd.f32 %v2170, 1.0
        %v2172 = vrcp.pop %v2171
        %v2173 = vmul.f32 1.0, %v2172
        %v2174 = vmul.f32 %v2162, %v1916
        %v2175 = vmul.f32 %v2153, %v2165
        %v2176 = vadd.f32 %v2174, %v2175
        %v2177 = vtanh.pop %v2176
        %v2178 = vmul.f32 %v2173, %v2177
        %s2179 = scalar_lea.vmem %s458, 2
        %v2180 = vld [vmem:[%s2179] sm:$0x3]
        %2182 = vset.pattern.permute.xlu0 0
        %2183 = vperm.xlu0 %2182, %v2180
        %v2184 = vpop.permute.xlu0 %2183
        %v2186 = vmul.f32 %v2184, %v2178
        %v2187 = vsub.f32 1.0, %v2180
        %2189 = vset.pattern.permute.xlu0 0
        %2190 = vperm.xlu0 %2189, %v2187
        %v2191 = vpop.permute.xlu0 %2190
        %v2193 = vmul.f32 %v2191, %v1915
        %v2194 = vadd.f32 %v2186, %v2193
        %2195 = vst [vmem:[#allocation4] sm:$0x3] %v2194
        %v2196 = vmul.f32 %v2184, %v2176
        %v2197 = vmul.f32 %v2191, %v1916
        %v2198 = vadd.f32 %v2196, %v2197
        %2199 = vst [vmem:[#allocation5] sm:$0x3] %v2198
        %s2200 = scalar_lea.vmem %s472, 2
        %2201 = vst [vmem:[%s2200] sm:$0x3] %v2186
        %v2202 = vld [vmem:[#allocation2] sm:$0x3]
        %v2203 = vld [vmem:[#allocation3] sm:$0x3]
        %s2204 = scalar_lea.vmem %s387, 24 [#allocation6]
        %v2205 = vld [vmem:[%s2204] sm:$0xff]
        %v2206 = vld [vmem:[%s4] sm:$0xff]
        %v2207 = vld [vmem:[%s4 + $0x8] sm:$0xff]
        %v2208 = vld [vmem:[%s4 + $0x10] sm:$0xff]
        %v2209 = vld [vmem:[%s4 + $0x18] sm:$0xff]
        %v2210 = vld [vmem:[%s4 + $0x20] sm:$0xff]
        %v2211 = vld [vmem:[%s4 + $0x28] sm:$0xff]
        %v2212 = vld [vmem:[%s4 + $0x30] sm:$0xff]
        %v2213 = vld [vmem:[%s4 + $0x38] sm:$0xff]
        %v2214 = vld [vmem:[%s4 + $0x40] sm:$0xff]
        %v2215 = vld [vmem:[%s4 + $0x48] sm:$0xff]
        %v2216 = vld [vmem:[%s4 + $0x50] sm:$0xff]
        %v2217 = vld [vmem:[%s4 + $0x58] sm:$0xff]
        %v2218 = vld [vmem:[%s4 + $0x60] sm:$0xff]
        %v2219 = vld [vmem:[%s4 + $0x68] sm:$0xff]
        %v2220 = vld [vmem:[%s4 + $0x70] sm:$0xff]
        %v2221 = vld [vmem:[%s4 + $0x78] sm:$0xff]
        %v2222 = vld [vmem:[%s4 + $0x80] sm:$0xff]
        %v2223 = vld [vmem:[%s4 + $0x88] sm:$0xff]
        %v2224 = vld [vmem:[%s4 + $0x90] sm:$0xff]
        %v2225 = vld [vmem:[%s4 + $0x98] sm:$0xff]
        %v2226 = vld [vmem:[%s4 + $0xa0] sm:$0xff]
        %v2227 = vld [vmem:[%s4 + $0xa8] sm:$0xff]
        %v2228 = vld [vmem:[%s4 + $0xb0] sm:$0xff]
        %v2229 = vld [vmem:[%s4 + $0xb8] sm:$0xff]
        %v2230 = vld [vmem:[%s4 + $0xc0] sm:$0xff]
        %v2231 = vld [vmem:[%s4 + $0xc8] sm:$0xff]
        %v2232 = vld [vmem:[%s4 + $0xd0] sm:$0xff]
        %v2233 = vld [vmem:[%s4 + $0xd8] sm:$0xff]
        %v2234 = vld [vmem:[%s4 + $0xe0] sm:$0xff]
        %v2235 = vld [vmem:[%s4 + $0xe8] sm:$0xff]
        %v2236 = vld [vmem:[%s4 + $0xf0] sm:$0xff]
        %v2237 = vld [vmem:[%s4 + $0xf8] sm:$0xff]
        %v2238 = vld [vmem:[%s4 + $0x100] sm:$0xff]
        %v2239 = vld [vmem:[%s4 + $0x108] sm:$0xff]
        %v2240 = vld [vmem:[%s4 + $0x110] sm:$0xff]
        %v2241 = vld [vmem:[%s4 + $0x118] sm:$0xff]
        %v2242 = vld [vmem:[%s4 + $0x120] sm:$0xff]
        %v2243 = vld [vmem:[%s4 + $0x128] sm:$0xff]
        %v2244 = vld [vmem:[%s4 + $0x130] sm:$0xff]
        %v2245 = vld [vmem:[%s4 + $0x138] sm:$0xff]
        %v2246 = vld [vmem:[%s4 + $0x140] sm:$0xff]
        %v2247 = vld [vmem:[%s4 + $0x148] sm:$0xff]
        %v2248 = vld [vmem:[%s4 + $0x150] sm:$0xff]
        %v2249 = vld [vmem:[%s4 + $0x158] sm:$0xff]
        %v2250 = vld [vmem:[%s4 + $0x160] sm:$0xff]
        %v2251 = vld [vmem:[%s4 + $0x168] sm:$0xff]
        %v2252 = vld [vmem:[%s4 + $0x170] sm:$0xff]
        %v2253 = vld [vmem:[%s4 + $0x178] sm:$0xff]
        %v2254 = vld [vmem:[%s4 + $0x180] sm:$0xff]
        %v2255 = vld [vmem:[%s4 + $0x188] sm:$0xff]
        %v2256 = vld [vmem:[%s4 + $0x190] sm:$0xff]
        %v2257 = vld [vmem:[%s4 + $0x198] sm:$0xff]
        %v2258 = vld [vmem:[%s4 + $0x1a0] sm:$0xff]
        %v2259 = vld [vmem:[%s4 + $0x1a8] sm:$0xff]
        %v2260 = vld [vmem:[%s4 + $0x1b0] sm:$0xff]
        %v2261 = vld [vmem:[%s4 + $0x1b8] sm:$0xff]
        %v2262 = vld [vmem:[%s4 + $0x1c0] sm:$0xff]
        %v2263 = vld [vmem:[%s4 + $0x1c8] sm:$0xff]
        %v2264 = vld [vmem:[%s4 + $0x1d0] sm:$0xff]
        %v2265 = vld [vmem:[%s4 + $0x1d8] sm:$0xff]
        %v2266 = vld [vmem:[%s4 + $0x1e0] sm:$0xff]
        %v2267 = vld [vmem:[%s4 + $0x1e8] sm:$0xff]
        %v2268 = vld [vmem:[%s4 + $0x1f0] sm:$0xff]
        %v2269 = vld [vmem:[%s4 + $0x1f8] sm:$0xff]
        %2270 = vmatprep.subr.mxu0 %v2267
        %2271 = vmatpush1.msra.mxu0 %v2266
        %2272 = vmatprep.subr.mxu0 %v2263
        %2273 = vmatpush1.msra.mxu0 %v2262
        %2274 = vmatprep.subr.mxu0 %v2259
        %2275 = vmatpush1.msra.mxu0 %v2258
        %2276 = vmatprep.subr.mxu0 %v2255
        %2277 = vmatpush1.msra.mxu0 %v2254
        %2278 = vmatprep.subr.mxu0 %v2251
        %2279 = vmatpush1.msra.mxu0 %v2250
        %2280 = vmatprep.subr.mxu0 %v2247
        %2281 = vmatpush1.msra.mxu0 %v2246
        %2282 = vmatprep.subr.mxu0 %v2243
        %2283 = vmatpush1.msra.mxu0 %v2242
        %2284 = vmatprep.subr.mxu0 %v2239
        %2285 = vmatpush1.msra.mxu0 %v2238
        %2286 = vmatprep.subr.mxu0 %v2235
        %2287 = vmatpush1.msra.mxu0 %v2234
        %2288 = vmatprep.subr.mxu0 %v2231
        %2289 = vmatpush1.msra.mxu0 %v2230
        %2290 = vmatprep.subr.mxu0 %v2227
        %2291 = vmatpush1.msra.mxu0 %v2226
        %2292 = vmatprep.subr.mxu0 %v2223
        %2293 = vmatpush1.msra.mxu0 %v2222
        %2294 = vmatprep.subr.mxu0 %v2219
        %2295 = vmatpush1.msra.mxu0 %v2218
        %2296 = vmatprep.subr.mxu0 %v2215
        %2297 = vmatpush1.msra.mxu0 %v2214
        %2298 = vmatprep.subr.mxu0 %v2211
        %2299 = vmatpush1.msra.mxu0 %v2210
        %2300 = vmatprep.subr.mxu0 %v2207
        %2301 = vmatpush1.msra.mxu0 %v2206
        %2302 = vmatprep.subr.mxu0 0.0
        %2303 = vmatpush2.msra.mxu0 0.0
        %2304 = vmatprep.subr.mxu0 0.0
        %2305 = vmatpush2.msra.mxu0 0.0
        %2306 = vmatprep.subr.mxu0 0.0
        %2307 = vmatpush2.msra.mxu0 0.0
        %2308 = vmatprep.subr.mxu0 0.0
        %2309 = vmatpush2.msra.mxu0 0.0
        %2310 = vmatprep.subr.mxu0 0.0
        %2311 = vmatpush2.msra.mxu0 0.0
        %2312 = vmatprep.subr.mxu0 0.0
        %2313 = vmatpush2.msra.mxu0 0.0
        %2314 = vmatprep.subr.mxu0 0.0
        %2315 = vmatpush2.msra.mxu0 0.0
        %2316 = vmatprep.subr.mxu0 0.0
        %2317 = vmatpush2.msra.mxu0 0.0
        %2318 = vmatprep.subr.mxu0 0.0
        %2319 = vmatpush2.msra.mxu0 0.0
        %2320 = vmatprep.subr.mxu0 0.0
        %2321 = vmatpush2.msra.mxu0 0.0
        %2322 = vmatprep.subr.mxu0 0.0
        %2323 = vmatpush2.msra.mxu0 0.0
        %2324 = vmatprep.subr.mxu0 0.0
        %2325 = vmatpush2.msra.mxu0 0.0
        %2326 = vmatprep.subr.mxu0 0.0
        %2327 = vmatpush2.msra.mxu0 0.0
        %2328 = vmatprep.subr.mxu0 0.0
        %2329 = vmatpush2.msra.mxu0 0.0
        %2330 = vmatprep.subr.mxu0 0.0
        %2331 = vmatpush2.msra.mxu0 0.0
        %2332 = vmatprep.subr.mxu0 0.0
        %2333 = vmatpush2.msra.mxu0 0.0
        %2334 = vmatprep.mubr.f32.mxu0 0.0
        %2335 = vmatmul.mubr.f32.gmra.mxu0 %v2202
        %v2336 = vpop.f32.mrf.mxu0
        %v2337 = vadd.f32 0.0, %v2336
        %v2338 = vpop.f32.mrf.mxu0
        %v2339 = vadd.f32 0.0, %v2338
        %2340 = vdwg.mxu0
        %2341 = vmatprep.subr.mxu0 %v2269
        %2342 = vmatpush1.msra.mxu0 %v2268
        %2343 = vmatprep.subr.mxu0 %v2265
        %2344 = vmatpush1.msra.mxu0 %v2264
        %2345 = vmatprep.subr.mxu0 %v2261
        %2346 = vmatpush1.msra.mxu0 %v2260
        %2347 = vmatprep.subr.mxu0 %v2257
        %2348 = vmatpush1.msra.mxu0 %v2256
        %2349 = vmatprep.subr.mxu0 %v2253
        %2350 = vmatpush1.msra.mxu0 %v2252
        %2351 = vmatprep.subr.mxu0 %v2249
        %2352 = vmatpush1.msra.mxu0 %v2248
        %2353 = vmatprep.subr.mxu0 %v2245
        %2354 = vmatpush1.msra.mxu0 %v2244
        %2355 = vmatprep.subr.mxu0 %v2241
        %2356 = vmatpush1.msra.mxu0 %v2240
        %2357 = vmatprep.subr.mxu0 %v2237
        %2358 = vmatpush1.msra.mxu0 %v2236
        %2359 = vmatprep.subr.mxu0 %v2233
        %2360 = vmatpush1.msra.mxu0 %v2232
        %2361 = vmatprep.subr.mxu0 %v2229
        %2362 = vmatpush1.msra.mxu0 %v2228
        %2363 = vmatprep.subr.mxu0 %v2225
        %2364 = vmatpush1.msra.mxu0 %v2224
        %2365 = vmatprep.subr.mxu0 %v2221
        %2366 = vmatpush1.msra.mxu0 %v2220
        %2367 = vmatprep.subr.mxu0 %v2217
        %2368 = vmatpush1.msra.mxu0 %v2216
        %2369 = vmatprep.subr.mxu0 %v2213
        %2370 = vmatpush1.msra.mxu0 %v2212
        %2371 = vmatprep.subr.mxu0 %v2209
        %2372 = vmatpush1.msra.mxu0 %v2208
        %2373 = vmatprep.subr.mxu0 0.0
        %2374 = vmatpush2.msra.mxu0 0.0
        %2375 = vmatprep.subr.mxu0 0.0
        %2376 = vmatpush2.msra.mxu0 0.0
        %2377 = vmatprep.subr.mxu0 0.0
        %2378 = vmatpush2.msra.mxu0 0.0
        %2379 = vmatprep.subr.mxu0 0.0
        %2380 = vmatpush2.msra.mxu0 0.0
        %2381 = vmatprep.subr.mxu0 0.0
        %2382 = vmatpush2.msra.mxu0 0.0
        %2383 = vmatprep.subr.mxu0 0.0
        %2384 = vmatpush2.msra.mxu0 0.0
        %2385 = vmatprep.subr.mxu0 0.0
        %2386 = vmatpush2.msra.mxu0 0.0
        %2387 = vmatprep.subr.mxu0 0.0
        %2388 = vmatpush2.msra.mxu0 0.0
        %2389 = vmatprep.subr.mxu0 0.0
        %2390 = vmatpush2.msra.mxu0 0.0
        %2391 = vmatprep.subr.mxu0 0.0
        %2392 = vmatpush2.msra.mxu0 0.0
        %2393 = vmatprep.subr.mxu0 0.0
        %2394 = vmatpush2.msra.mxu0 0.0
        %2395 = vmatprep.subr.mxu0 0.0
        %2396 = vmatpush2.msra.mxu0 0.0
        %2397 = vmatprep.subr.mxu0 0.0
        %2398 = vmatpush2.msra.mxu0 0.0
        %2399 = vmatprep.subr.mxu0 0.0
        %2400 = vmatpush2.msra.mxu0 0.0
        %2401 = vmatprep.subr.mxu0 0.0
        %2402 = vmatpush2.msra.mxu0 0.0
        %2403 = vmatprep.subr.mxu0 0.0
        %2404 = vmatpush2.msra.mxu0 0.0
        %2405 = vmatprep.mubr.f32.mxu0 0.0
        %2406 = vmatmul.mubr.f32.gmra.mxu0 %v2202
        %v2407 = vpop.f32.mrf.mxu0
        %v2408 = vadd.f32 0.0, %v2407
        %v2409 = vpop.f32.mrf.mxu0
        %v2410 = vadd.f32 0.0, %v2409
        %2411 = vdwg.mxu0
        %v2416 = vcombine.low %v2337, %v2339
        %v2417 = vcombine.low %v2408, %v2410
        %v2419 = vunpack.c.l.s4 1983009808
        %v2420 = vunpack.c.0.s8 %v2419
        %v2421 = vlaneseq
        %v2422 = vshrl.u32 %v2421, 7
        %v2423 = vsub.s32 %v2420, %v2422
        %v2424 = vrot.slane %v2416, %v2423
        %v2426 = vunpack.c.l.s4 1983009808
        %v2427 = vunpack.c.0.s8 %v2426
        %v2428 = vlaneseq
        %v2429 = vshrl.u32 %v2428, 7
        %v2430 = vsub.s32 %v2427, %v2429
        %v2431 = vrot.slane %v2417, %v2430
        %v2432 = vcombine.low %v2424, %v2431
        %v2434 = vadd.f32 %v2205, %v2432
        %v2435 = vxor.u32 %v2434, 2147483648
        %v2436 = vmul.f32 %v2435, 1.442695
        %v2437 = vpow.pop %v2436
        %v2438 = vadd.f32 %v2437, 1.0
        %v2439 = vrcp.pop %v2438
        %v2440 = vmul.f32 1.0, %v2439
        %v2442 = vrot.slane %v2434, 2
        %v2444 = vxor.u32 %v2442, 2147483648
        %v2445 = vmul.f32 %v2444, 1.442695
        %v2446 = vpow.pop %v2445
        %v2447 = vadd.f32 %v2446, 1.0
        %v2448 = vrcp.pop %v2447
        %v2449 = vmul.f32 1.0, %v2448
        %v2450 = vrot.slane %v2434, 4
        %v2452 = vtanh.pop %v2450
        %v2453 = vrot.slane %v2434, 6
        %v2455 = vxor.u32 %v2453, 2147483648
        %v2456 = vmul.f32 %v2455, 1.442695
        %v2457 = vpow.pop %v2456
        %v2458 = vadd.f32 %v2457, 1.0
        %v2459 = vrcp.pop %v2458
        %v2460 = vmul.f32 1.0, %v2459
        %v2461 = vmul.f32 %v2449, %v2203
        %v2462 = vmul.f32 %v2440, %v2452
        %v2463 = vadd.f32 %v2461, %v2462
        %v2464 = vtanh.pop %v2463
        %v2465 = vmul.f32 %v2460, %v2464
        %s2466 = scalar_lea.vmem %s451, 6
        %v2467 = vld [vmem:[%s2466] sm:$0x3]
        %2469 = vset.pattern.permute.xlu0 0
        %2470 = vperm.xlu0 %2469, %v2467
        %v2471 = vpop.permute.xlu0 %2470
        %v2473 = vmul.f32 %v2471, %v2465
        %v2474 = vsub.f32 1.0, %v2467
        %2476 = vset.pattern.permute.xlu0 0
        %2477 = vperm.xlu0 %2476, %v2474
        %v2478 = vpop.permute.xlu0 %2477
        %v2480 = vmul.f32 %v2478, %v2202
        %v2481 = vadd.f32 %v2473, %v2480
        %2482 = vst [vmem:[#allocation2] sm:$0x3] %v2481
        %v2483 = vmul.f32 %v2471, %v2463
        %v2484 = vmul.f32 %v2478, %v2203
        %v2485 = vadd.f32 %v2483, %v2484
        %2486 = vst [vmem:[#allocation3] sm:$0x3] %v2485
        %s2487 = scalar_lea.vmem %s465, 6
        %2488 = vst [vmem:[%s2487] sm:$0x3] %v2473
        %v2489 = vld [vmem:[#allocation4] sm:$0x3]
        %v2490 = vld [vmem:[#allocation5] sm:$0x3]
        %v2491 = vld [vmem:[%s394] sm:$0xff]
        %v2492 = vld [vmem:[%s5] sm:$0xff]
        %v2493 = vld [vmem:[%s5 + $0x8] sm:$0xff]
        %v2494 = vld [vmem:[%s5 + $0x10] sm:$0xff]
        %v2495 = vld [vmem:[%s5 + $0x18] sm:$0xff]
        %v2496 = vld [vmem:[%s5 + $0x20] sm:$0xff]
        %v2497 = vld [vmem:[%s5 + $0x28] sm:$0xff]
        %v2498 = vld [vmem:[%s5 + $0x30] sm:$0xff]
        %v2499 = vld [vmem:[%s5 + $0x38] sm:$0xff]
        %v2500 = vld [vmem:[%s5 + $0x40] sm:$0xff]
        %v2501 = vld [vmem:[%s5 + $0x48] sm:$0xff]
        %v2502 = vld [vmem:[%s5 + $0x50] sm:$0xff]
        %v2503 = vld [vmem:[%s5 + $0x58] sm:$0xff]
        %v2504 = vld [vmem:[%s5 + $0x60] sm:$0xff]
        %v2505 = vld [vmem:[%s5 + $0x68] sm:$0xff]
        %v2506 = vld [vmem:[%s5 + $0x70] sm:$0xff]
        %v2507 = vld [vmem:[%s5 + $0x78] sm:$0xff]
        %v2508 = vld [vmem:[%s5 + $0x80] sm:$0xff]
        %v2509 = vld [vmem:[%s5 + $0x88] sm:$0xff]
        %v2510 = vld [vmem:[%s5 + $0x90] sm:$0xff]
        %v2511 = vld [vmem:[%s5 + $0x98] sm:$0xff]
        %v2512 = vld [vmem:[%s5 + $0xa0] sm:$0xff]
        %v2513 = vld [vmem:[%s5 + $0xa8] sm:$0xff]
        %v2514 = vld [vmem:[%s5 + $0xb0] sm:$0xff]
        %v2515 = vld [vmem:[%s5 + $0xb8] sm:$0xff]
        %v2516 = vld [vmem:[%s5 + $0xc0] sm:$0xff]
        %v2517 = vld [vmem:[%s5 + $0xc8] sm:$0xff]
        %v2518 = vld [vmem:[%s5 + $0xd0] sm:$0xff]
        %v2519 = vld [vmem:[%s5 + $0xd8] sm:$0xff]
        %v2520 = vld [vmem:[%s5 + $0xe0] sm:$0xff]
        %v2521 = vld [vmem:[%s5 + $0xe8] sm:$0xff]
        %v2522 = vld [vmem:[%s5 + $0xf0] sm:$0xff]
        %v2523 = vld [vmem:[%s5 + $0xf8] sm:$0xff]
        %v2524 = vld [vmem:[%s5 + $0x100] sm:$0xff]
        %v2525 = vld [vmem:[%s5 + $0x108] sm:$0xff]
        %v2526 = vld [vmem:[%s5 + $0x110] sm:$0xff]
        %v2527 = vld [vmem:[%s5 + $0x118] sm:$0xff]
        %v2528 = vld [vmem:[%s5 + $0x120] sm:$0xff]
        %v2529 = vld [vmem:[%s5 + $0x128] sm:$0xff]
        %v2530 = vld [vmem:[%s5 + $0x130] sm:$0xff]
        %v2531 = vld [vmem:[%s5 + $0x138] sm:$0xff]
        %v2532 = vld [vmem:[%s5 + $0x140] sm:$0xff]
        %v2533 = vld [vmem:[%s5 + $0x148] sm:$0xff]
        %v2534 = vld [vmem:[%s5 + $0x150] sm:$0xff]
        %v2535 = vld [vmem:[%s5 + $0x158] sm:$0xff]
        %v2536 = vld [vmem:[%s5 + $0x160] sm:$0xff]
        %v2537 = vld [vmem:[%s5 + $0x168] sm:$0xff]
        %v2538 = vld [vmem:[%s5 + $0x170] sm:$0xff]
        %v2539 = vld [vmem:[%s5 + $0x178] sm:$0xff]
        %v2540 = vld [vmem:[%s5 + $0x180] sm:$0xff]
        %v2541 = vld [vmem:[%s5 + $0x188] sm:$0xff]
        %v2542 = vld [vmem:[%s5 + $0x190] sm:$0xff]
        %v2543 = vld [vmem:[%s5 + $0x198] sm:$0xff]
        %v2544 = vld [vmem:[%s5 + $0x1a0] sm:$0xff]
        %v2545 = vld [vmem:[%s5 + $0x1a8] sm:$0xff]
        %v2546 = vld [vmem:[%s5 + $0x1b0] sm:$0xff]
        %v2547 = vld [vmem:[%s5 + $0x1b8] sm:$0xff]
        %v2548 = vld [vmem:[%s5 + $0x1c0] sm:$0xff]
        %v2549 = vld [vmem:[%s5 + $0x1c8] sm:$0xff]
        %v2550 = vld [vmem:[%s5 + $0x1d0] sm:$0xff]
        %v2551 = vld [vmem:[%s5 + $0x1d8] sm:$0xff]
        %v2552 = vld [vmem:[%s5 + $0x1e0] sm:$0xff]
        %v2553 = vld [vmem:[%s5 + $0x1e8] sm:$0xff]
        %v2554 = vld [vmem:[%s5 + $0x1f0] sm:$0xff]
        %v2555 = vld [vmem:[%s5 + $0x1f8] sm:$0xff]
        %2556 = vmatprep.subr.mxu0 %v2553
        %2557 = vmatpush1.msra.mxu0 %v2552
        %2558 = vmatprep.subr.mxu0 %v2549
        %2559 = vmatpush1.msra.mxu0 %v2548
        %2560 = vmatprep.subr.mxu0 %v2545
        %2561 = vmatpush1.msra.mxu0 %v2544
        %2562 = vmatprep.subr.mxu0 %v2541
        %2563 = vmatpush1.msra.mxu0 %v2540
        %2564 = vmatprep.subr.mxu0 %v2537
        %2565 = vmatpush1.msra.mxu0 %v2536
        %2566 = vmatprep.subr.mxu0 %v2533
        %2567 = vmatpush1.msra.mxu0 %v2532
        %2568 = vmatprep.subr.mxu0 %v2529
        %2569 = vmatpush1.msra.mxu0 %v2528
        %2570 = vmatprep.subr.mxu0 %v2525
        %2571 = vmatpush1.msra.mxu0 %v2524
        %2572 = vmatprep.subr.mxu0 %v2521
        %2573 = vmatpush1.msra.mxu0 %v2520
        %2574 = vmatprep.subr.mxu0 %v2517
        %2575 = vmatpush1.msra.mxu0 %v2516
        %2576 = vmatprep.subr.mxu0 %v2513
        %2577 = vmatpush1.msra.mxu0 %v2512
        %2578 = vmatprep.subr.mxu0 %v2509
        %2579 = vmatpush1.msra.mxu0 %v2508
        %2580 = vmatprep.subr.mxu0 %v2505
        %2581 = vmatpush1.msra.mxu0 %v2504
        %2582 = vmatprep.subr.mxu0 %v2501
        %2583 = vmatpush1.msra.mxu0 %v2500
        %2584 = vmatprep.subr.mxu0 %v2497
        %2585 = vmatpush1.msra.mxu0 %v2496
        %2586 = vmatprep.subr.mxu0 %v2493
        %2587 = vmatpush1.msra.mxu0 %v2492
        %2588 = vmatprep.subr.mxu0 0.0
        %2589 = vmatpush2.msra.mxu0 0.0
        %2590 = vmatprep.subr.mxu0 0.0
        %2591 = vmatpush2.msra.mxu0 0.0
        %2592 = vmatprep.subr.mxu0 0.0
        %2593 = vmatpush2.msra.mxu0 0.0
        %2594 = vmatprep.subr.mxu0 0.0
        %2595 = vmatpush2.msra.mxu0 0.0
        %2596 = vmatprep.subr.mxu0 0.0
        %2597 = vmatpush2.msra.mxu0 0.0
        %2598 = vmatprep.subr.mxu0 0.0
        %2599 = vmatpush2.msra.mxu0 0.0
        %2600 = vmatprep.subr.mxu0 0.0
        %2601 = vmatpush2.msra.mxu0 0.0
        %2602 = vmatprep.subr.mxu0 0.0
        %2603 = vmatpush2.msra.mxu0 0.0
        %2604 = vmatprep.subr.mxu0 0.0
        %2605 = vmatpush2.msra.mxu0 0.0
        %2606 = vmatprep.subr.mxu0 0.0
        %2607 = vmatpush2.msra.mxu0 0.0
        %2608 = vmatprep.subr.mxu0 0.0
        %2609 = vmatpush2.msra.mxu0 0.0
        %2610 = vmatprep.subr.mxu0 0.0
        %2611 = vmatpush2.msra.mxu0 0.0
        %2612 = vmatprep.subr.mxu0 0.0
        %2613 = vmatpush2.msra.mxu0 0.0
        %2614 = vmatprep.subr.mxu0 0.0
        %2615 = vmatpush2.msra.mxu0 0.0
        %2616 = vmatprep.subr.mxu0 0.0
        %2617 = vmatpush2.msra.mxu0 0.0
        %2618 = vmatprep.subr.mxu0 0.0
        %2619 = vmatpush2.msra.mxu0 0.0
        %2620 = vmatprep.mubr.f32.mxu0 0.0
        %2621 = vmatmul.mubr.f32.gmra.mxu0 %v2489
        %v2622 = vpop.f32.mrf.mxu0
        %v2623 = vadd.f32 0.0, %v2622
        %v2624 = vpop.f32.mrf.mxu0
        %v2625 = vadd.f32 0.0, %v2624
        %2626 = vdwg.mxu0
        %2627 = vmatprep.subr.mxu0 %v2555
        %2628 = vmatpush1.msra.mxu0 %v2554
        %2629 = vmatprep.subr.mxu0 %v2551
        %2630 = vmatpush1.msra.mxu0 %v2550
        %2631 = vmatprep.subr.mxu0 %v2547
        %2632 = vmatpush1.msra.mxu0 %v2546
        %2633 = vmatprep.subr.mxu0 %v2543
        %2634 = vmatpush1.msra.mxu0 %v2542
        %2635 = vmatprep.subr.mxu0 %v2539
        %2636 = vmatpush1.msra.mxu0 %v2538
        %2637 = vmatprep.subr.mxu0 %v2535
        %2638 = vmatpush1.msra.mxu0 %v2534
        %2639 = vmatprep.subr.mxu0 %v2531
        %2640 = vmatpush1.msra.mxu0 %v2530
        %2641 = vmatprep.subr.mxu0 %v2527
        %2642 = vmatpush1.msra.mxu0 %v2526
        %2643 = vmatprep.subr.mxu0 %v2523
        %2644 = vmatpush1.msra.mxu0 %v2522
        %2645 = vmatprep.subr.mxu0 %v2519
        %2646 = vmatpush1.msra.mxu0 %v2518
        %2647 = vmatprep.subr.mxu0 %v2515
        %2648 = vmatpush1.msra.mxu0 %v2514
        %2649 = vmatprep.subr.mxu0 %v2511
        %2650 = vmatpush1.msra.mxu0 %v2510
        %2651 = vmatprep.subr.mxu0 %v2507
        %2652 = vmatpush1.msra.mxu0 %v2506
        %2653 = vmatprep.subr.mxu0 %v2503
        %2654 = vmatpush1.msra.mxu0 %v2502
        %2655 = vmatprep.subr.mxu0 %v2499
        %2656 = vmatpush1.msra.mxu0 %v2498
        %2657 = vmatprep.subr.mxu0 %v2495
        %2658 = vmatpush1.msra.mxu0 %v2494
        %2659 = vmatprep.subr.mxu0 0.0
        %2660 = vmatpush2.msra.mxu0 0.0
        %2661 = vmatprep.subr.mxu0 0.0
        %2662 = vmatpush2.msra.mxu0 0.0
        %2663 = vmatprep.subr.mxu0 0.0
        %2664 = vmatpush2.msra.mxu0 0.0
        %2665 = vmatprep.subr.mxu0 0.0
        %2666 = vmatpush2.msra.mxu0 0.0
        %2667 = vmatprep.subr.mxu0 0.0
        %2668 = vmatpush2.msra.mxu0 0.0
        %2669 = vmatprep.subr.mxu0 0.0
        %2670 = vmatpush2.msra.mxu0 0.0
        %2671 = vmatprep.subr.mxu0 0.0
        %2672 = vmatpush2.msra.mxu0 0.0
        %2673 = vmatprep.subr.mxu0 0.0
        %2674 = vmatpush2.msra.mxu0 0.0
        %2675 = vmatprep.subr.mxu0 0.0
        %2676 = vmatpush2.msra.mxu0 0.0
        %2677 = vmatprep.subr.mxu0 0.0
        %2678 = vmatpush2.msra.mxu0 0.0
        %2679 = vmatprep.subr.mxu0 0.0
        %2680 = vmatpush2.msra.mxu0 0.0
        %2681 = vmatprep.subr.mxu0 0.0
        %2682 = vmatpush2.msra.mxu0 0.0
        %2683 = vmatprep.subr.mxu0 0.0
        %2684 = vmatpush2.msra.mxu0 0.0
        %2685 = vmatprep.subr.mxu0 0.0
        %2686 = vmatpush2.msra.mxu0 0.0
        %2687 = vmatprep.subr.mxu0 0.0
        %2688 = vmatpush2.msra.mxu0 0.0
        %2689 = vmatprep.subr.mxu0 0.0
        %2690 = vmatpush2.msra.mxu0 0.0
        %2691 = vmatprep.mubr.f32.mxu0 0.0
        %2692 = vmatmul.mubr.f32.gmra.mxu0 %v2489
        %v2693 = vpop.f32.mrf.mxu0
        %v2694 = vadd.f32 0.0, %v2693
        %v2695 = vpop.f32.mrf.mxu0
        %v2696 = vadd.f32 0.0, %v2695
        %2697 = vdwg.mxu0
        %v2702 = vcombine.low %v2623, %v2625
        %v2703 = vcombine.low %v2694, %v2696
        %v2705 = vunpack.c.l.s4 1983009808
        %v2706 = vunpack.c.0.s8 %v2705
        %v2707 = vlaneseq
        %v2708 = vshrl.u32 %v2707, 7
        %v2709 = vsub.s32 %v2706, %v2708
        %v2710 = vrot.slane %v2702, %v2709
        %v2712 = vunpack.c.l.s4 1983009808
        %v2713 = vunpack.c.0.s8 %v2712
        %v2714 = vlaneseq
        %v2715 = vshrl.u32 %v2714, 7
        %v2716 = vsub.s32 %v2713, %v2715
        %v2717 = vrot.slane %v2703, %v2716
        %v2718 = vcombine.low %v2710, %v2717
        %v2720 = vadd.f32 %v2491, %v2718
        %v2721 = vxor.u32 %v2720, 2147483648
        %v2722 = vmul.f32 %v2721, 1.442695
        %v2723 = vpow.pop %v2722
        %v2724 = vadd.f32 %v2723, 1.0
        %v2725 = vrcp.pop %v2724
        %v2726 = vmul.f32 1.0, %v2725
        %v2728 = vrot.slane %v2720, 2
        %v2730 = vxor.u32 %v2728, 2147483648
        %v2731 = vmul.f32 %v2730, 1.442695
        %v2732 = vpow.pop %v2731
        %v2733 = vadd.f32 %v2732, 1.0
        %v2734 = vrcp.pop %v2733
        %v2735 = vmul.f32 1.0, %v2734
        %v2736 = vrot.slane %v2720, 4
        %v2738 = vtanh.pop %v2736
        %v2739 = vrot.slane %v2720, 6
        %v2741 = vxor.u32 %v2739, 2147483648
        %v2742 = vmul.f32 %v2741, 1.442695
        %v2743 = vpow.pop %v2742
        %v2744 = vadd.f32 %v2743, 1.0
        %v2745 = vrcp.pop %v2744
        %v2746 = vmul.f32 1.0, %v2745
        %v2747 = vmul.f32 %v2735, %v2490
        %v2748 = vmul.f32 %v2726, %v2738
        %v2749 = vadd.f32 %v2747, %v2748
        %v2750 = vtanh.pop %v2749
        %v2751 = vmul.f32 %v2746, %v2750
        %v2752 = vld [vmem:[%s458] sm:$0x3]
        %2754 = vset.pattern.permute.xlu0 0
        %2755 = vperm.xlu0 %2754, %v2752
        %v2756 = vpop.permute.xlu0 %2755
        %v2758 = vmul.f32 %v2756, %v2751
        %v2759 = vsub.f32 1.0, %v2752
        %2761 = vset.pattern.permute.xlu0 0
        %2762 = vperm.xlu0 %2761, %v2759
        %v2763 = vpop.permute.xlu0 %2762
        %v2765 = vmul.f32 %v2763, %v2489
        %v2766 = vadd.f32 %v2758, %v2765
        %2767 = vst [vmem:[#allocation4] sm:$0x3] %v2766
        %v2768 = vmul.f32 %v2756, %v2749
        %v2769 = vmul.f32 %v2763, %v2490
        %v2770 = vadd.f32 %v2768, %v2769
        %2771 = vst [vmem:[#allocation5] sm:$0x3] %v2770
        %2772 = vst [vmem:[%s472] sm:$0x3] %v2758
        %s2773 = smul.u32 4, %s19
        %p2774 = scmp.lt.s32.totalorder %s2773, 7
        %s2775 = scalar_select %p2774, %s2773, 7
        %s2776 = smul.addr %s2775, 2
        %s2777 = scalar_lea.vmem %s6, %s2776
        %s2778 = ssub.s32 1, %s19
        %s2779 = smul.u32 4, %s2778
        %p2780 = scmp.lt.s32.totalorder %s2779, 7
        %s2781 = scalar_select %p2780, %s2779, 7
        %s2782 = smul.addr %s2781, 2
        %s2783 = scalar_lea.vmem %s7, %s2782
        // Predicated region
        $region125: #{bilstm_forward.3} parent=111 // pred_check
          %p2784 = pneg %p187
        $region126: #{bilstm_forward.3} parent=111 // pred_check_branch
          %2786 = sbr.rel (%p2784) target = $region128
        $region127: #{bilstm_forward.3} parent=111 // pred_region
          %s2787 = smul.u32 4, %s19
        $region128: #{bilstm_forward.3} parent=111 // pred_fallthru
          _
        // Predicated region
        $region129: #{bilstm_forward.3} parent=111 // pred_check
          %p2788 = pneg %p215
        $region130: #{bilstm_forward.3} parent=111 // pred_check_branch
          %2790 = sbr.rel (%p2788) target = $region132
        $region131: #{bilstm_forward.3} parent=111 // pred_region
          %s2791 = ssub.s32 1, %s19
          %s2792 = smul.u32 4, %s2791
        $region132: #{bilstm_forward.3} parent=111 // pred_fallthru
          _
      $region112: #{bilstm_forward.3} parent=5 // pred_fallthru
        _
      %p2793 = scmp.le.s32.totalorder 2, %s14
      // Predicated region
      $region133: #{bilstm_forward.3} parent=5 // pred_check
        %p2794 = pneg %p2793
      $region134: #{bilstm_forward.3} parent=5 // pred_check_branch
        %2796 = sbr.rel (%p2794) target = $region136
      $region135: #{bilstm_forward.3} parent=5 // pred_region
        %s2797 = ssub.s32 %s14, 2
        // Predicated region
        $region137: #{bilstm_forward.3} parent=135 // pred_check
          %p2798 = pneg %p193
        $region138: #{bilstm_forward.3} parent=135 // pred_check_branch
          %2800 = sbr.rel (%p2798) target = $region140
        $region139: #{bilstm_forward.3} parent=135 // pred_region
          %s2801 = smul.u32 4, %s20
          %p2802 = scmp.lt.s32.totalorder %s2801, 7
          %s2803 = scalar_select %p2802, %s2801, 7
          %s2804 = smul.addr %s2803, 2
          %s2805 = scalar_lea.vmem %s6, %s2804
        $region140: #{bilstm_forward.3} parent=135 // pred_fallthru
          _
        // Predicated region
        $region141: #{bilstm_forward.3} parent=135 // pred_check
          %p2806 = pneg %p221
        $region142: #{bilstm_forward.3} parent=135 // pred_check_branch
          %2808 = sbr.rel (%p2806) target = $region144
        $region143: #{bilstm_forward.3} parent=135 // pred_region
          %s2809 = ssub.s32 1, %s20
          %s2810 = smul.u32 4, %s2809
          %p2811 = scmp.lt.s32.totalorder %s2810, 7
          %s2812 = scalar_select %p2811, %s2810, 7
          %s2813 = smul.addr %s2812, 2
          %s2814 = scalar_lea.vmem %s7, %s2813
        $region144: #{bilstm_forward.3} parent=135 // pred_fallthru
          _
      $region136: #{bilstm_forward.3} parent=5 // pred_fallthru
        _
    $region6: #{bilstm_forward.3} parent=1 // loop_footer
      %s18 = sadd.s32 1, %s14
    $region7: #{bilstm_forward.3} parent=1 // loop_footer_branch
      %13 = sbr.rel target = $region3
    $region8: #{bilstm_forward.3} parent=1 // loop_exit
      _

</llo_original>
